<compile_context>
chip_gen: v5e
topology: v5e:2x2
jax: 0.10.0
libtpu: 0.0.40
codegen_flags: <defaults>
</compile_context>

<pallas_src>
import functools
import math

import jax
import jax.numpy as jnp
from jax.experimental import pallas as pl
from jax.experimental.pallas import tpu as pltpu

# matmul operands are cast to this dtype (MXU-friendly); accumulation stays f32.
MATMUL_DTYPE = jnp.bfloat16
# conservative per-kernel VMEM budget (fits v5e/v6e 128 MiB and v7x 64 MiB).
VMEM_LIMIT = 48 * 1024 * 1024
# query/row tile: 128 is safe across v5e/v6e/v7x (v6e could use 256).
MAX_TILE_L = 128
NEG_INF = -1e30  # finite "minus infinity": avoids NaN on fully-padded rows


def _shift_rows(x, s):
    """y[l, :] = x[l + s, :] if 0 <= l + s < L else 0 (static shift, in-kernel pad)."""
    L, D = x.shape
    if s == 0:
        return x
    if abs(s) >= L:
        return jnp.zeros_like(x)
    zeros = jnp.zeros((abs(s), D), dtype=x.dtype)
    if s > 0:
        return jnp.concatenate([x[s:, :], zeros], axis=0)
    return jnp.concatenate([zeros, x[:L + s, :]], axis=0)


# ----------------------------------------------------------------------------
# Kernel 1: fused depthwise-separable conv stack (all n_convs layers, one call).
# ----------------------------------------------------------------------------
def conv_stack_kernel(x_ref, dw_w_ref, dw_b_ref, pw_w_ref, pw_b_ref, out_ref, *, cd):
    n_convs, K, _ = dw_w_ref.shape
    pad = K // 2
    x = x_ref[0]                                    # (L, D) f32, stays in VMEM
    for c in range(n_convs):                        # n_convs small & static
        dw_w = dw_w_ref[c]                          # (K, D)
        acc = jnp.zeros_like(x)
        for k in range(K):                          # K small & static -> unrolled
            acc = acc + _shift_rows(x, k - pad) * dw_w[k:k + 1, :]
        acc = acc + dw_b_ref[c]                     # (1, D) broadcast
        # pointwise conv == matmul over channels (MXU, bf16 operands, f32 acc)
        y = jnp.dot(acc.astype(cd), pw_w_ref[c].astype(cd),
                    preferred_element_type=jnp.float32) + pw_b_ref[c]
        x = jnp.maximum(y, 0.0) + x                 # ReLU + residual (dropout = id)
    out_ref[0] = x.astype(out_ref.dtype)


def conv_stack(x, dw_w, dw_b, pw_w, pw_b, cd):
    # TODO(synk): for very long sequences tile the conv over L with a K//2 halo.
    B, L, D = x.shape
    n_convs, K, _ = dw_w.shape
    flops = int(B * n_convs * (2 * L * K * D + 2 * L * D * D))
    bytes_acc = int(4 * (2 * B * L * D + dw_w.size + dw_b.size + pw_w.size + pw_b.size))
    w_spec = pl.BlockSpec(memory_space=pltpu.MemorySpace.VMEM)   # single-buffered
    return pl.pallas_call(
        functools.partial(conv_stack_kernel, cd=cd),
        out_shape=jax.ShapeDtypeStruct((B, L, D), x.dtype),
        grid=(B,),
        in_specs=[pl.BlockSpec((1, L, D), lambda b: (b, 0, 0)),
                  w_spec, w_spec, w_spec, w_spec],
        out_specs=pl.BlockSpec((1, L, D), lambda b: (b, 0, 0)),
        compiler_params=pltpu.CompilerParams(
            dimension_semantics=("parallel",), vmem_limit_bytes=VMEM_LIMIT),
        cost_estimate=pl.CostEstimate(flops=flops, transcendentals=0,
                                      bytes_accessed=bytes_acc),
    )(x, dw_w, dw_b, pw_w, pw_b)


# ----------------------------------------------------------------------------
# Kernel 2: multi-head self-attention with relative position embeddings.
#   Grid = (batch, query-tiles).  K/V are projected once per batch element
#   (query-tile 0) into VMEM scratch and reused across query tiles.
# ----------------------------------------------------------------------------
def attn_kernel(x_q_ref, x_kv_ref, mask_ref, wq_ref, bq_ref, wkv_ref, bkv_ref,
                wout_ref, bout_ref, emb_kT_ref, emb_v_ref, out_ref,
                kh_scr, vh_scr, *, n_heads, max_pos_distance, cd):
    L = x_kv_ref.shape[1]
    TL = x_q_ref.shape[1]
    D = x_q_ref.shape[2]
    dh = D // n_heads
    R = max_pos_distance
    n_rel = 2 * R + 1
    qi = pl.program_id(1)

    # --- K/V projection: once per batch element, kept resident across q-tiles ---
    @pl.when(qi == 0)
    def _():
        xf = x_kv_ref[0]                                            # (L, D)
        kv = jnp.dot(xf.astype(cd), wkv_ref[...].astype(cd),
                     preferred_element_type=jnp.float32) + bkv_ref[...]   # (L, 2D)
        kh_scr[...] = jnp.stack(
            [kv[:, h * dh:(h + 1) * dh] for h in range(n_heads)], axis=0)
        vh_scr[...] = jnp.stack(
            [kv[:, D + h * dh:D + (h + 1) * dh] for h in range(n_heads)], axis=0)

    xq = x_q_ref[0]                                                 # (TL, D)
    q = jnp.dot(xq.astype(cd), wq_ref[...].astype(cd),
                preferred_element_type=jnp.float32) + bq_ref[...]   # (TL, D)
    qh = jnp.stack([q[:, h * dh:(h + 1) * dh] for h in range(n_heads)], axis=0)

    qc = qh.astype(cd)                                              # (H, TL, dh)
    kc = kh_scr[...].astype(cd)                                     # (H, L, dh)
    vc = vh_scr[...].astype(cd)                                     # (H, L, dh)

    # content scores: all heads in one batched MXU contraction
    s1 = jnp.einsum('hld,hmd->hlm', qc, kc,
                    preferred_element_type=jnp.float32)             # (H, TL, L)

    # relative-position scores: q @ emb_K^T on the MXU -> (H, TL, 2R+1),
    # then scatter onto the clamped diagonal bands with 2R+1 cheap selects.
    qk_rel = jnp.dot(qc.reshape(n_heads * TL, dh), emb_kT_ref[...].astype(cd),
                     preferred_element_type=jnp.float32).reshape(n_heads, TL, n_rel)
    row = jax.lax.broadcasted_iota(jnp.int32, (TL, L), 0) + qi * TL
    col = jax.lax.broadcasted_iota(jnp.int32, (TL, L), 1)
    rel = jnp.clip(col - row, -R, R) + R                            # (TL, L) in [0, 2R]

    s2 = jnp.zeros((n_heads, TL, L), jnp.float32)
    for r in range(n_rel):                                          # small & static
        band = (rel == r).astype(jnp.float32)[None]                 # (1, TL, L)
        s2 = s2 + band * qk_rel[:, :, r][:, :, None]

    s = (s1 + s2) * (1.0 / math.sqrt(dh))
    key_valid = mask_ref[...] != 0.0                                # (1, 1, L)
    s = jnp.where(key_valid, s, NEG_INF)                            # finite mask value

    m = jnp.max(s, axis=-1, keepdims=True)
    p = jnp.exp(s - m)
    a = p / jnp.sum(p, axis=-1, keepdims=True)                      # (H, TL, L) f32

    # attention-weighted values: batched MXU contraction
    o1 = jnp.einsum('hlm,hmd->hld', a.astype(cd), vc,
                    preferred_element_type=jnp.float32)             # (H, TL, dh)

    # relative-position values: band-reduce A -> (H, TL, 2R+1), then one MXU matmul
    ar = jnp.stack([jnp.sum(a * (rel == r).astype(jnp.float32)[None], axis=-1)
                    for r in range(n_rel)], axis=-1)                # (H, TL, n_rel)
    o2 = jnp.dot(ar.reshape(n_heads * TL, n_rel).astype(cd),
                 emb_v_ref[...].astype(cd),
                 preferred_element_type=jnp.float32).reshape(n_heads, TL, dh)

    o = o1 + o2                                                     # (H, TL, dh)
    o_cat = jnp.concatenate([o[h] for h in range(n_heads)], axis=-1)  # (TL, D)
    y = jnp.dot(o_cat.astype(cd), wout_ref[...].astype(cd),
                preferred_element_type=jnp.float32) + bout_ref[...]
    out_ref[0] = (y + xq).astype(out_ref.dtype)                     # residual, lane-dense


def attention_block(x, mask, wqkv, bqkv, wout, bout, emb_K, emb_V, n_heads,
                    max_pos_distance, cd, max_tile_l=MAX_TILE_L):
    B, L, D = x.shape
    dh = D // n_heads
    n_rel = 2 * max_pos_distance + 1
    tl = min(max_tile_l, L)
    assert L % tl == 0, "sequence length must be divisible by the query tile"
    nq = L // tl

    # parameter prep (glue): split q vs kv projections, pre-transpose emb_K
    wq, wkv = wqkv[:, :D], wqkv[:, D:]
    bq, bkv = bqkv[:, :D], bqkv[:, D:]
    emb_kT = emb_K.T                              # (dh, 2R+1)
    mask3 = mask.reshape(B, 1, L).astype(jnp.float32)

    flops = int(B * (2 * L * D * 3 * D + 4 * L * L * D + 2 * L * D * D
                     + 4 * L * n_rel * D))
    trans = int(B * n_heads * L * L)
    bytes_acc = int(4 * (2 * B * L * D + B * L + wqkv.size + wout.size
                         + emb_K.size + emb_V.size))

    w_spec = pl.BlockSpec(memory_space=pltpu.MemorySpace.VMEM)   # single-buffered
    kernel = functools.partial(attn_kernel, n_heads=n_heads,
                               max_pos_distance=max_pos_distance, cd=cd)
    return pl.pallas_call(
        kernel,
        out_shape=jax.ShapeDtypeStruct((B, L, D), x.dtype),
        grid=(B, nq),
        in_specs=[
            pl.BlockSpec((1, tl, D), lambda b, i: (b, i, 0)),    # x: query tile + residual
            pl.BlockSpec((1, L, D), lambda b, i: (b, 0, 0)),     # x: keys/values (resident)
            pl.BlockSpec((1, 1, L), lambda b, i: (b, 0, 0)),     # key-pad mask
            w_spec, w_spec,                                      # wq, bq
            w_spec, w_spec,                                      # wkv, bkv
            w_spec, w_spec,                                      # wout, bout
            w_spec, w_spec,                                      # emb_K^T, emb_V
        ],
        out_specs=pl.BlockSpec((1, tl, D), lambda b, i: (b, i, 0)),
        scratch_shapes=[pltpu.VMEM((n_heads, L, dh), jnp.float32),
                        pltpu.VMEM((n_heads, L, dh), jnp.float32)],
        compiler_params=pltpu.CompilerParams(
            dimension_semantics=("parallel", "arbitrary"),
            vmem_limit_bytes=VMEM_LIMIT),
        cost_estimate=pl.CostEstimate(flops=flops, transcendentals=trans,
                                      bytes_accessed=bytes_acc),
    )(x, x, mask3, wq, bq, wkv, bkv, wout, bout, emb_kT, emb_V)


# ----------------------------------------------------------------------------
# Kernel 3: pointwise feed-forward block (row-tiled), plus residual.
# ----------------------------------------------------------------------------
def ffn_kernel(x_ref, w1_ref, b1_ref, w2_ref, b2_ref, out_ref, *, cd):
    xb = x_ref[0]                                   # (TL, D)
    h = jnp.dot(xb.astype(cd), w1_ref[...].astype(cd),
                preferred_element_type=jnp.float32) + b1_ref[...]
    h = jnp.maximum(h, 0.0)                         # inner ReLU
    y = jnp.dot(h.astype(cd), w2_ref[...].astype(cd),
                preferred_element_type=jnp.float32) + b2_ref[...]
    out_ref[0] = (jnp.maximum(y, 0.0) + xb).astype(out_ref.dtype)   # outer ReLU + residual


def ffn_block(x, w1, b1, w2, b2, cd, max_tile_l=MAX_TILE_L):
    B, L, D = x.shape
    H = w1.shape[1]
    tl = min(max_tile_l, L)
    assert L % tl == 0
    nl = L // tl
    flops = int(B * 4 * L * D * H)
    bytes_acc = int(4 * (2 * B * L * D + w1.size + w2.size + b1.size + b2.size))
    w_spec = pl.BlockSpec(memory_space=pltpu.MemorySpace.VMEM)   # single-buffered
    return pl.pallas_call(
        functools.partial(ffn_kernel, cd=cd),
        out_shape=jax.ShapeDtypeStruct((B, L, D), x.dtype),
        grid=(B, nl),
        in_specs=[pl.BlockSpec((1, tl, D), lambda b, i: (b, i, 0)),
                  w_spec, w_spec, w_spec, w_spec],
        out_specs=pl.BlockSpec((1, tl, D), lambda b, i: (b, i, 0)),
        compiler_params=pltpu.CompilerParams(
            dimension_semantics=("parallel", "parallel"),
            vmem_limit_bytes=VMEM_LIMIT),
        cost_estimate=pl.CostEstimate(flops=flops, transcendentals=0,
                                      bytes_accessed=bytes_acc),
    )(x, w1, b1, w2, b2)


# ----------------------------------------------------------------------------
# Full EncoderBlock forward (wrapper glue).
# ----------------------------------------------------------------------------
def encoder_block_forward(x, x_pad_mask, params, *, kernel_size, n_heads,
                          max_pos_distance, matmul_dtype=MATMUL_DTYPE):
    # fused conv stack: one pallas_call, padding handled in-kernel
    conv_p = params["convs"]
    dw_w = jnp.stack([p["dw_w"] for p in conv_p])   # (n_convs, K, D)
    dw_b = jnp.stack([p["dw_b"] for p in conv_p])   # (n_convs, 1, D)
    pw_w = jnp.stack([p["pw_w"] for p in conv_p])   # (n_convs, D, D)
    pw_b = jnp.stack([p["pw_b"] for p in conv_p])   # (n_convs, 1, D)
    assert dw_w.shape[1] == kernel_size
    x = conv_stack(x, dw_w, dw_b, pw_w, pw_b, matmul_dtype)

    a = params["attn"]
    x = attention_block(x, x_pad_mask, a["wqkv"], a["bqkv"], a["wout"], a["bout"],
                        a["emb_K"], a["emb_V"], n_heads, max_pos_distance,
                        matmul_dtype)

    f = params["ffn"]
    x = ffn_block(x, f["w1"], f["b1"], f["w2"], f["b2"], matmul_dtype)
    return x


# ----------------------------------------------------------------------------
# Deterministic parameter construction (synthetic, no checkpoint).
# ----------------------------------------------------------------------------
def make_params(key, d_model, n_convs, kernel_size, n_heads, max_pos_distance):
    dh = d_model // n_heads

    def nrm(k, shape, scale=0.1):
        return (scale * jax.random.normal(k, shape)).astype(jnp.float32)

    keys = iter(jax.random.split(key, 64))
    convs = []
    for _ in range(n_convs):
        convs.append(dict(
            dw_w=nrm(next(keys), (kernel_size, d_model)),    # Conv1d(d,d,K,groups=d) (d,1,K) -> (K,d)
            dw_b=nrm(next(keys), (1, d_model)),
            pw_w=nrm(next(keys), (d_model, d_model)),        # Conv1d(d,d,1) (out,in,1) -> (in,out)
            pw_b=nrm(next(keys), (1, d_model)),
        ))
    attn = dict(
        wqkv=nrm(next(keys), (d_model, 3 * d_model)),        # Linear(d, 3d).weight.T
        bqkv=nrm(next(keys), (1, 3 * d_model)),
        wout=nrm(next(keys), (d_model, d_model)),            # Linear(d, d).weight.T
        bout=nrm(next(keys), (1, d_model)),
        emb_K=nrm(next(keys), (2 * max_pos_distance + 1, dh)),
        emb_V=nrm(next(keys), (2 * max_pos_distance + 1, dh)),
    )
    ffn = dict(
        w1=nrm(next(keys), (d_model, 4 * d_model)),
        b1=nrm(next(keys), (1, 4 * d_model)),
        w2=nrm(next(keys), (4 * d_model, d_model)),
        b2=nrm(next(keys), (1, d_model)),
    )
    return dict(convs=convs, attn=attn, ffn=ffn)


if __name__ == "__main__":
    B, L, D = 2, 16, 32
    n_convs, kernel_size = 2, 5
    n_heads, max_pos_distance = 4, 4

    root = jax.random.PRNGKey(0)
    kx, kp = jax.random.split(root)
    x = jax.random.normal(kx, (B, L, D), dtype=jnp.float32)
    x_pad_mask = jnp.ones((B, L), dtype=jnp.float32).at[1, 12:].set(0.0)

    params = make_params(kp, D, n_convs, kernel_size, n_heads, max_pos_distance)

    fwd = jax.jit(functools.partial(
        encoder_block_forward, kernel_size=kernel_size, n_heads=n_heads,
        max_pos_distance=max_pos_distance))
    out = jax.block_until_ready(fwd(x, x_pad_mask, params))

    assert out.shape == (B, L, D) and bool(jnp.all(jnp.isfinite(out)))
    print("KERNEL_OK")
</pallas_src>

<mosaic_0001>
module attributes {stable_mosaic.version = 11 : i64} {
  func.func @conv_stack_kernel(%arg0: i32, %arg1: memref<1x16x32xf32, #tpu.memory_space<vmem>>, %arg2: memref<2x5x32xf32, #tpu.memory_space<vmem>>, %arg3: memref<2x1x32xf32, #tpu.memory_space<vmem>>, %arg4: memref<2x32x32xf32, #tpu.memory_space<vmem>>, %arg5: memref<2x1x32xf32, #tpu.memory_space<vmem>>, %arg6: memref<1x16x32xf32, #tpu.memory_space<vmem>>) attributes {dimension_semantics = [#tpu.dimension_semantics<parallel>], iteration_bounds = array<i64: 2>, scalar_prefetch = 0 : i64, scratch_operands = 0 : i64, tpu.core_type = #tpu.core_type<tc>, window_params = [{transform_indices = @transform_0, window_bounds = array<i64: 1, 16, 32>}, {pipeline_mode = #tpu.pipeline_mode<synchronous>, transform_indices = @transform_1, window_bounds = array<i64: 2, 5, 32>}, {pipeline_mode = #tpu.pipeline_mode<synchronous>, transform_indices = @transform_2, window_bounds = array<i64: 2, 1, 32>}, {pipeline_mode = #tpu.pipeline_mode<synchronous>, transform_indices = @transform_3, window_bounds = array<i64: 2, 32, 32>}, {pipeline_mode = #tpu.pipeline_mode<synchronous>, transform_indices = @transform_4, window_bounds = array<i64: 2, 1, 32>}, {transform_indices = @transform_5, window_bounds = array<i64: 1, 16, 32>}]} {
    %c0 = arith.constant 0 : index
    %c0_0 = arith.constant 0 : index
    %c0_1 = arith.constant 0 : index
    %0 = vector.load %arg1[%c0, %c0_0, %c0_1] : memref<1x16x32xf32, #tpu.memory_space<vmem>>, vector<1x16x32xf32>
    %1 = vector.shape_cast %0 : vector<1x16x32xf32> to vector<16x32xf32>
    %c0_2 = arith.constant 0 : index
    %c0_3 = arith.constant 0 : index
    %c0_4 = arith.constant 0 : index
    %2 = vector.load %arg2[%c0_2, %c0_3, %c0_4] : memref<2x5x32xf32, #tpu.memory_space<vmem>>, vector<1x5x32xf32>
    %3 = vector.shape_cast %2 : vector<1x5x32xf32> to vector<5x32xf32>
    %cst = arith.constant 0.000000e+00 : f32
    %4 = vector.broadcast %cst : f32 to vector<16x32xf32>
    %cst_5 = arith.constant 0.000000e+00 : f32
    %5 = vector.broadcast %cst_5 : f32 to vector<2x32xf32>
    %6 = vector.extract_strided_slice %1 {offsets = [0, 0], sizes = [14, 32], strides = [1, 1]} : vector<16x32xf32> to vector<14x32xf32>
    %7 = tpu.concatenate %5, %6 in 0 : vector<2x32xf32>, vector<14x32xf32> -> vector<16x32xf32>
    %8 = vector.extract_strided_slice %3 {offsets = [0, 0], sizes = [1, 32], strides = [1, 1]} : vector<5x32xf32> to vector<1x32xf32>
    %9 = vector.broadcast %8 : vector<1x32xf32> to vector<16x32xf32>
    %10 = arith.mulf %7, %9 : vector<16x32xf32>
    %11 = arith.addf %4, %10 : vector<16x32xf32>
    %cst_6 = arith.constant 0.000000e+00 : f32
    %12 = vector.broadcast %cst_6 : f32 to vector<1x32xf32>
    %13 = vector.extract_strided_slice %1 {offsets = [0, 0], sizes = [15, 32], strides = [1, 1]} : vector<16x32xf32> to vector<15x32xf32>
    %14 = tpu.concatenate %12, %13 in 0 : vector<1x32xf32>, vector<15x32xf32> -> vector<16x32xf32>
    %15 = vector.extract_strided_slice %3 {offsets = [1, 0], sizes = [1, 32], strides = [1, 1]} : vector<5x32xf32> to vector<1x32xf32>
    %16 = vector.broadcast %15 : vector<1x32xf32> to vector<16x32xf32>
    %17 = arith.mulf %14, %16 : vector<16x32xf32>
    %18 = arith.addf %11, %17 : vector<16x32xf32>
    %19 = vector.extract_strided_slice %3 {offsets = [2, 0], sizes = [1, 32], strides = [1, 1]} : vector<5x32xf32> to vector<1x32xf32>
    %20 = vector.broadcast %19 : vector<1x32xf32> to vector<16x32xf32>
    %21 = arith.mulf %1, %20 : vector<16x32xf32>
    %22 = arith.addf %18, %21 : vector<16x32xf32>
    %cst_7 = arith.constant 0.000000e+00 : f32
    %23 = vector.broadcast %cst_7 : f32 to vector<1x32xf32>
    %24 = vector.extract_strided_slice %1 {offsets = [1, 0], sizes = [15, 32], strides = [1, 1]} : vector<16x32xf32> to vector<15x32xf32>
    %25 = tpu.concatenate %24, %23 in 0 : vector<15x32xf32>, vector<1x32xf32> -> vector<16x32xf32>
    %26 = vector.extract_strided_slice %3 {offsets = [3, 0], sizes = [1, 32], strides = [1, 1]} : vector<5x32xf32> to vector<1x32xf32>
    %27 = vector.broadcast %26 : vector<1x32xf32> to vector<16x32xf32>
    %28 = arith.mulf %25, %27 : vector<16x32xf32>
    %29 = arith.addf %22, %28 : vector<16x32xf32>
    %cst_8 = arith.constant 0.000000e+00 : f32
    %30 = vector.broadcast %cst_8 : f32 to vector<2x32xf32>
    %31 = vector.extract_strided_slice %1 {offsets = [2, 0], sizes = [14, 32], strides = [1, 1]} : vector<16x32xf32> to vector<14x32xf32>
    %32 = tpu.concatenate %31, %30 in 0 : vector<14x32xf32>, vector<2x32xf32> -> vector<16x32xf32>
    %33 = vector.extract_strided_slice %3 {offsets = [4, 0], sizes = [1, 32], strides = [1, 1]} : vector<5x32xf32> to vector<1x32xf32>
    %34 = vector.broadcast %33 : vector<1x32xf32> to vector<16x32xf32>
    %35 = arith.mulf %32, %34 : vector<16x32xf32>
    %36 = arith.addf %29, %35 : vector<16x32xf32>
    %c0_9 = arith.constant 0 : index
    %c0_10 = arith.constant 0 : index
    %c0_11 = arith.constant 0 : index
    %37 = vector.load %arg3[%c0_9, %c0_10, %c0_11] : memref<2x1x32xf32, #tpu.memory_space<vmem>>, vector<1x1x32xf32>
    %38 = vector.shape_cast %37 : vector<1x1x32xf32> to vector<1x32xf32>
    %39 = vector.broadcast %38 : vector<1x32xf32> to vector<16x32xf32>
    %40 = arith.addf %36, %39 : vector<16x32xf32>
    %41 = arith.truncf %40 : vector<16x32xf32> to vector<16x32xbf16>
    %c0_12 = arith.constant 0 : index
    %c0_13 = arith.constant 0 : index
    %c0_14 = arith.constant 0 : index
    %42 = vector.load %arg4[%c0_12, %c0_13, %c0_14] : memref<2x32x32xf32, #tpu.memory_space<vmem>>, vector<1x32x32xf32>
    %43 = vector.shape_cast %42 : vector<1x32x32xf32> to vector<32x32xf32>
    %44 = arith.truncf %43 : vector<32x32xf32> to vector<32x32xbf16>
    %cst_15 = arith.constant dense<0.000000e+00> : vector<16x32xf32>
    %45 = tpu.matmul %41, %44, %cst_15 {dimension_numbers = #tpu.dot_dimension_numbers<[1], [0], [0], [1], [0, 0, 1, 1], [], []>} : vector<16x32xbf16>, vector<32x32xbf16>, vector<16x32xf32> -> vector<16x32xf32>
    %c0_16 = arith.constant 0 : index
    %c0_17 = arith.constant 0 : index
    %c0_18 = arith.constant 0 : index
    %46 = vector.load %arg5[%c0_16, %c0_17, %c0_18] : memref<2x1x32xf32, #tpu.memory_space<vmem>>, vector<1x1x32xf32>
    %47 = vector.shape_cast %46 : vector<1x1x32xf32> to vector<1x32xf32>
    %48 = vector.broadcast %47 : vector<1x32xf32> to vector<16x32xf32>
    %49 = arith.addf %45, %48 : vector<16x32xf32>
    %cst_19 = arith.constant 0.000000e+00 : f32
    %50 = vector.broadcast %cst_19 : f32 to vector<16x32xf32>
    %51 = arith.maximumf %49, %50 : vector<16x32xf32>
    %52 = arith.addf %51, %1 : vector<16x32xf32>
    %c1 = arith.constant 1 : index
    %c0_20 = arith.constant 0 : index
    %c0_21 = arith.constant 0 : index
    %53 = vector.load %arg2[%c1, %c0_20, %c0_21] : memref<2x5x32xf32, #tpu.memory_space<vmem>>, vector<1x5x32xf32>
    %54 = vector.shape_cast %53 : vector<1x5x32xf32> to vector<5x32xf32>
    %cst_22 = arith.constant 0.000000e+00 : f32
    %55 = vector.broadcast %cst_22 : f32 to vector<16x32xf32>
    %cst_23 = arith.constant 0.000000e+00 : f32
    %56 = vector.broadcast %cst_23 : f32 to vector<2x32xf32>
    %57 = vector.extract_strided_slice %52 {offsets = [0, 0], sizes = [14, 32], strides = [1, 1]} : vector<16x32xf32> to vector<14x32xf32>
    %58 = tpu.concatenate %56, %57 in 0 : vector<2x32xf32>, vector<14x32xf32> -> vector<16x32xf32>
    %59 = vector.extract_strided_slice %54 {offsets = [0, 0], sizes = [1, 32], strides = [1, 1]} : vector<5x32xf32> to vector<1x32xf32>
    %60 = vector.broadcast %59 : vector<1x32xf32> to vector<16x32xf32>
    %61 = arith.mulf %58, %60 : vector<16x32xf32>
    %62 = arith.addf %55, %61 : vector<16x32xf32>
    %cst_24 = arith.constant 0.000000e+00 : f32
    %63 = vector.broadcast %cst_24 : f32 to vector<1x32xf32>
    %64 = vector.extract_strided_slice %52 {offsets = [0, 0], sizes = [15, 32], strides = [1, 1]} : vector<16x32xf32> to vector<15x32xf32>
    %65 = tpu.concatenate %63, %64 in 0 : vector<1x32xf32>, vector<15x32xf32> -> vector<16x32xf32>
    %66 = vector.extract_strided_slice %54 {offsets = [1, 0], sizes = [1, 32], strides = [1, 1]} : vector<5x32xf32> to vector<1x32xf32>
    %67 = vector.broadcast %66 : vector<1x32xf32> to vector<16x32xf32>
    %68 = arith.mulf %65, %67 : vector<16x32xf32>
    %69 = arith.addf %62, %68 : vector<16x32xf32>
    %70 = vector.extract_strided_slice %54 {offsets = [2, 0], sizes = [1, 32], strides = [1, 1]} : vector<5x32xf32> to vector<1x32xf32>
    %71 = vector.broadcast %70 : vector<1x32xf32> to vector<16x32xf32>
    %72 = arith.mulf %52, %71 : vector<16x32xf32>
    %73 = arith.addf %69, %72 : vector<16x32xf32>
    %cst_25 = arith.constant 0.000000e+00 : f32
    %74 = vector.broadcast %cst_25 : f32 to vector<1x32xf32>
    %75 = vector.extract_strided_slice %52 {offsets = [1, 0], sizes = [15, 32], strides = [1, 1]} : vector<16x32xf32> to vector<15x32xf32>
    %76 = tpu.concatenate %75, %74 in 0 : vector<15x32xf32>, vector<1x32xf32> -> vector<16x32xf32>
    %77 = vector.extract_strided_slice %54 {offsets = [3, 0], sizes = [1, 32], strides = [1, 1]} : vector<5x32xf32> to vector<1x32xf32>
    %78 = vector.broadcast %77 : vector<1x32xf32> to vector<16x32xf32>
    %79 = arith.mulf %76, %78 : vector<16x32xf32>
    %80 = arith.addf %73, %79 : vector<16x32xf32>
    %cst_26 = arith.constant 0.000000e+00 : f32
    %81 = vector.broadcast %cst_26 : f32 to vector<2x32xf32>
    %82 = vector.extract_strided_slice %52 {offsets = [2, 0], sizes = [14, 32], strides = [1, 1]} : vector<16x32xf32> to vector<14x32xf32>
    %83 = tpu.concatenate %82, %81 in 0 : vector<14x32xf32>, vector<2x32xf32> -> vector<16x32xf32>
    %84 = vector.extract_strided_slice %54 {offsets = [4, 0], sizes = [1, 32], strides = [1, 1]} : vector<5x32xf32> to vector<1x32xf32>
    %85 = vector.broadcast %84 : vector<1x32xf32> to vector<16x32xf32>
    %86 = arith.mulf %83, %85 : vector<16x32xf32>
    %87 = arith.addf %80, %86 : vector<16x32xf32>
    %c1_27 = arith.constant 1 : index
    %c0_28 = arith.constant 0 : index
    %c0_29 = arith.constant 0 : index
    %88 = vector.load %arg3[%c1_27, %c0_28, %c0_29] : memref<2x1x32xf32, #tpu.memory_space<vmem>>, vector<1x1x32xf32>
    %89 = vector.shape_cast %88 : vector<1x1x32xf32> to vector<1x32xf32>
    %90 = vector.broadcast %89 : vector<1x32xf32> to vector<16x32xf32>
    %91 = arith.addf %87, %90 : vector<16x32xf32>
    %92 = arith.truncf %91 : vector<16x32xf32> to vector<16x32xbf16>
    %c1_30 = arith.constant 1 : index
    %c0_31 = arith.constant 0 : index
    %c0_32 = arith.constant 0 : index
    %93 = vector.load %arg4[%c1_30, %c0_31, %c0_32] : memref<2x32x32xf32, #tpu.memory_space<vmem>>, vector<1x32x32xf32>
    %94 = vector.shape_cast %93 : vector<1x32x32xf32> to vector<32x32xf32>
    %95 = arith.truncf %94 : vector<32x32xf32> to vector<32x32xbf16>
    %cst_33 = arith.constant dense<0.000000e+00> : vector<16x32xf32>
    %96 = tpu.matmul %92, %95, %cst_33 {dimension_numbers = #tpu.dot_dimension_numbers<[1], [0], [0], [1], [0, 0, 1, 1], [], []>} : vector<16x32xbf16>, vector<32x32xbf16>, vector<16x32xf32> -> vector<16x32xf32>
    %c1_34 = arith.constant 1 : index
    %c0_35 = arith.constant 0 : index
    %c0_36 = arith.constant 0 : index
    %97 = vector.load %arg5[%c1_34, %c0_35, %c0_36] : memref<2x1x32xf32, #tpu.memory_space<vmem>>, vector<1x1x32xf32>
    %98 = vector.shape_cast %97 : vector<1x1x32xf32> to vector<1x32xf32>
    %99 = vector.broadcast %98 : vector<1x32xf32> to vector<16x32xf32>
    %100 = arith.addf %96, %99 : vector<16x32xf32>
    %cst_37 = arith.constant 0.000000e+00 : f32
    %101 = vector.broadcast %cst_37 : f32 to vector<16x32xf32>
    %102 = arith.maximumf %100, %101 : vector<16x32xf32>
    %103 = arith.addf %102, %52 : vector<16x32xf32>
    %c0_38 = arith.constant 0 : index
    %c0_39 = arith.constant 0 : index
    %c0_40 = arith.constant 0 : index
    %104 = vector.load %arg6[%c0_38, %c0_39, %c0_40] : memref<1x16x32xf32, #tpu.memory_space<vmem>>, vector<1x16x32xf32>
    %105 = vector.shape_cast %104 : vector<1x16x32xf32> to vector<16x32xf32>
    %106 = vector.shape_cast %103 : vector<16x32xf32> to vector<1x16x32xf32>
    tpu.vector_store %arg6[%c0_38, %c0_39, %c0_40], %106 {strides = array<i32>} : memref<1x16x32xf32, #tpu.memory_space<vmem>>, vector<1x16x32xf32>,
    return
  }
  func.func @transform_0(%arg0: i32) -> (i32, i32, i32) {
    %c0_i32 = arith.constant 0 : i32
    %c0_i32_0 = arith.constant 0 : i32
    %c0_i32_1 = arith.constant 0 : i32
    return %arg0, %c0_i32, %c0_i32_0 : i32, i32, i32
  }
  func.func @transform_1(%arg0: i32) -> (i32, i32, i32) {
    %c0_i32 = arith.constant 0 : i32
    %c0_i32_0 = arith.constant 0 : i32
    %c0_i32_1 = arith.constant 0 : i32
    %c0_i32_2 = arith.constant 0 : i32
    return %c0_i32, %c0_i32_0, %c0_i32_1 : i32, i32, i32
  }
  func.func @transform_2(%arg0: i32) -> (i32, i32, i32) {
    %c0_i32 = arith.constant 0 : i32
    %c0_i32_0 = arith.constant 0 : i32
    %c0_i32_1 = arith.constant 0 : i32
    %c0_i32_2 = arith.constant 0 : i32
    return %c0_i32, %c0_i32_0, %c0_i32_1 : i32, i32, i32
  }
  func.func @transform_3(%arg0: i32) -> (i32, i32, i32) {
    %c0_i32 = arith.constant 0 : i32
    %c0_i32_0 = arith.constant 0 : i32
    %c0_i32_1 = arith.constant 0 : i32
    %c0_i32_2 = arith.constant 0 : i32
    return %c0_i32, %c0_i32_0, %c0_i32_1 : i32, i32, i32
  }
  func.func @transform_4(%arg0: i32) -> (i32, i32, i32) {
    %c0_i32 = arith.constant 0 : i32
    %c0_i32_0 = arith.constant 0 : i32
    %c0_i32_1 = arith.constant 0 : i32
    %c0_i32_2 = arith.constant 0 : i32
    return %c0_i32, %c0_i32_0, %c0_i32_1 : i32, i32, i32
  }
  func.func @transform_5(%arg0: i32) -> (i32, i32, i32) {
    %c0_i32 = arith.constant 0 : i32
    %c0_i32_0 = arith.constant 0 : i32
    %c0_i32_1 = arith.constant 0 : i32
    return %arg0, %c0_i32, %c0_i32_0 : i32, i32, i32
  }
}

module attributes {stable_mosaic.version = 11 : i64} {
  func.func @ffn_kernel(%arg0: i32, %arg1: i32, %arg2: memref<1x16x32xf32, #tpu.memory_space<vmem>>, %arg3: memref<32x128xf32, #tpu.memory_space<vmem>>, %arg4: memref<1x128xf32, #tpu.memory_space<vmem>>, %arg5: memref<128x32xf32, #tpu.memory_space<vmem>>, %arg6: memref<1x32xf32, #tpu.memory_space<vmem>>, %arg7: memref<1x16x32xf32, #tpu.memory_space<vmem>>) attributes {dimension_semantics = [#tpu.dimension_semantics<parallel>, #tpu.dimension_semantics<parallel>], iteration_bounds = array<i64: 2, 1>, scalar_prefetch = 0 : i64, scratch_operands = 0 : i64, tpu.core_type = #tpu.core_type<tc>, window_params = [{transform_indices = @transform_0, window_bounds = array<i64: 1, 16, 32>}, {pipeline_mode = #tpu.pipeline_mode<synchronous>, transform_indices = @transform_1, window_bounds = array<i64: 32, 128>}, {pipeline_mode = #tpu.pipeline_mode<synchronous>, transform_indices = @transform_2, window_bounds = array<i64: 1, 128>}, {pipeline_mode = #tpu.pipeline_mode<synchronous>, transform_indices = @transform_3, window_bounds = array<i64: 128, 32>}, {pipeline_mode = #tpu.pipeline_mode<synchronous>, transform_indices = @transform_4, window_bounds = array<i64: 1, 32>}, {transform_indices = @transform_5, window_bounds = array<i64: 1, 16, 32>}]} {
    %c0 = arith.constant 0 : index
    %c0_0 = arith.constant 0 : index
    %c0_1 = arith.constant 0 : index
    %0 = vector.load %arg2[%c0, %c0_0, %c0_1] : memref<1x16x32xf32, #tpu.memory_space<vmem>>, vector<1x16x32xf32>
    %1 = vector.shape_cast %0 : vector<1x16x32xf32> to vector<16x32xf32>
    %2 = arith.truncf %1 : vector<16x32xf32> to vector<16x32xbf16>
    %c0_2 = arith.constant 0 : index
    %c0_3 = arith.constant 0 : index
    %3 = vector.load %arg3[%c0_2, %c0_3] : memref<32x128xf32, #tpu.memory_space<vmem>>, vector<32x128xf32>
    %4 = arith.truncf %3 : vector<32x128xf32> to vector<32x128xbf16>
    %cst = arith.constant dense<0.000000e+00> : vector<16x128xf32>
    %5 = tpu.matmul %2, %4, %cst {dimension_numbers = #tpu.dot_dimension_numbers<[1], [0], [0], [1], [0, 0, 1, 1], [], []>} : vector<16x32xbf16>, vector<32x128xbf16>, vector<16x128xf32> -> vector<16x128xf32>
    %c0_4 = arith.constant 0 : index
    %c0_5 = arith.constant 0 : index
    %6 = vector.load %arg4[%c0_4, %c0_5] : memref<1x128xf32, #tpu.memory_space<vmem>>, vector<1x128xf32>
    %7 = vector.broadcast %6 : vector<1x128xf32> to vector<16x128xf32>
    %8 = arith.addf %5, %7 : vector<16x128xf32>
    %cst_6 = arith.constant 0.000000e+00 : f32
    %9 = vector.broadcast %cst_6 : f32 to vector<16x128xf32>
    %10 = arith.maximumf %8, %9 : vector<16x128xf32>
    %11 = arith.truncf %10 : vector<16x128xf32> to vector<16x128xbf16>
    %c0_7 = arith.constant 0 : index
    %c0_8 = arith.constant 0 : index
    %12 = vector.load %arg5[%c0_7, %c0_8] : memref<128x32xf32, #tpu.memory_space<vmem>>, vector<128x32xf32>
    %13 = arith.truncf %12 : vector<128x32xf32> to vector<128x32xbf16>
    %cst_9 = arith.constant dense<0.000000e+00> : vector<16x32xf32>
    %14 = tpu.matmul %11, %13, %cst_9 {dimension_numbers = #tpu.dot_dimension_numbers<[1], [0], [0], [1], [0, 0, 1, 1], [], []>} : vector<16x128xbf16>, vector<128x32xbf16>, vector<16x32xf32> -> vector<16x32xf32>
    %c0_10 = arith.constant 0 : index
    %c0_11 = arith.constant 0 : index
    %15 = vector.load %arg6[%c0_10, %c0_11] : memref<1x32xf32, #tpu.memory_space<vmem>>, vector<1x32xf32>
    %16 = vector.broadcast %15 : vector<1x32xf32> to vector<16x32xf32>
    %17 = arith.addf %14, %16 : vector<16x32xf32>
    %cst_12 = arith.constant 0.000000e+00 : f32
    %18 = vector.broadcast %cst_12 : f32 to vector<16x32xf32>
    %19 = arith.maximumf %17, %18 : vector<16x32xf32>
    %20 = arith.addf %19, %1 : vector<16x32xf32>
    %c0_13 = arith.constant 0 : index
    %c0_14 = arith.constant 0 : index
    %c0_15 = arith.constant 0 : index
    %21 = vector.load %arg7[%c0_13, %c0_14, %c0_15] : memref<1x16x32xf32, #tpu.memory_space<vmem>>, vector<1x16x32xf32>
    %22 = vector.shape_cast %21 : vector<1x16x32xf32> to vector<16x32xf32>
    %23 = vector.shape_cast %20 : vector<16x32xf32> to vector<1x16x32xf32>
    tpu.vector_store %arg7[%c0_13, %c0_14, %c0_15], %23 {strides = array<i32>} : memref<1x16x32xf32, #tpu.memory_space<vmem>>, vector<1x16x32xf32>,
    return
  }
  func.func @transform_0(%arg0: i32, %arg1: i32) -> (i32, i32, i32) {
    %c0_i32 = arith.constant 0 : i32
    %c0_i32_0 = arith.constant 0 : i32
    return %arg0, %arg1, %c0_i32 : i32, i32, i32
  }
  func.func @transform_1(%arg0: i32, %arg1: i32) -> (i32, i32) {
    %c0_i32 = arith.constant 0 : i32
    %c0_i32_0 = arith.constant 0 : i32
    %c0_i32_1 = arith.constant 0 : i32
    return %c0_i32, %c0_i32_0 : i32, i32
  }
  func.func @transform_2(%arg0: i32, %arg1: i32) -> (i32, i32) {
    %c0_i32 = arith.constant 0 : i32
    %c0_i32_0 = arith.constant 0 : i32
    %c0_i32_1 = arith.constant 0 : i32
    return %c0_i32, %c0_i32_0 : i32, i32
  }
  func.func @transform_3(%arg0: i32, %arg1: i32) -> (i32, i32) {
    %c0_i32 = arith.constant 0 : i32
    %c0_i32_0 = arith.constant 0 : i32
    %c0_i32_1 = arith.constant 0 : i32
    return %c0_i32, %c0_i32_0 : i32, i32
  }
  func.func @transform_4(%arg0: i32, %arg1: i32) -> (i32, i32) {
    %c0_i32 = arith.constant 0 : i32
    %c0_i32_0 = arith.constant 0 : i32
    %c0_i32_1 = arith.constant 0 : i32
    return %c0_i32, %c0_i32_0 : i32, i32
  }
  func.func @transform_5(%arg0: i32, %arg1: i32) -> (i32, i32, i32) {
    %c0_i32 = arith.constant 0 : i32
    %c0_i32_0 = arith.constant 0 : i32
    return %arg0, %arg1, %c0_i32 : i32, i32, i32
  }
}

module attributes {stable_mosaic.version = 11 : i64} {
  func.func @attn_kernel(%arg0: i32, %arg1: i32, %arg2: memref<1x16x32xf32, #tpu.memory_space<vmem>>, %arg3: memref<1x16x32xf32, #tpu.memory_space<vmem>>, %arg4: memref<1x1x16xf32, #tpu.memory_space<vmem>>, %arg5: memref<32x32xf32, #tpu.memory_space<vmem>>, %arg6: memref<1x32xf32, #tpu.memory_space<vmem>>, %arg7: memref<32x64xf32, #tpu.memory_space<vmem>>, %arg8: memref<1x64xf32, #tpu.memory_space<vmem>>, %arg9: memref<32x32xf32, #tpu.memory_space<vmem>>, %arg10: memref<1x32xf32, #tpu.memory_space<vmem>>, %arg11: memref<8x9xf32, #tpu.memory_space<vmem>>, %arg12: memref<9x8xf32, #tpu.memory_space<vmem>>, %arg13: memref<1x16x32xf32, #tpu.memory_space<vmem>>, %arg14: memref<4x16x8xf32, #tpu.memory_space<vmem>>, %arg15: memref<4x16x8xf32, #tpu.memory_space<vmem>>) attributes {dimension_semantics = [#tpu.dimension_semantics<parallel>, #tpu.dimension_semantics<arbitrary>], iteration_bounds = array<i64: 2, 1>, scalar_prefetch = 0 : i64, scratch_operands = 2 : i64, tpu.core_type = #tpu.core_type<tc>, window_params = [{transform_indices = @transform_0, window_bounds = array<i64: 1, 16, 32>}, {transform_indices = @transform_1, window_bounds = array<i64: 1, 16, 32>}, {transform_indices = @transform_2, window_bounds = array<i64: 1, 1, 16>}, {pipeline_mode = #tpu.pipeline_mode<synchronous>, transform_indices = @transform_3, window_bounds = array<i64: 32, 32>}, {pipeline_mode = #tpu.pipeline_mode<synchronous>, transform_indices = @transform_4, window_bounds = array<i64: 1, 32>}, {pipeline_mode = #tpu.pipeline_mode<synchronous>, transform_indices = @transform_5, window_bounds = array<i64: 32, 64>}, {pipeline_mode = #tpu.pipeline_mode<synchronous>, transform_indices = @transform_6, window_bounds = array<i64: 1, 64>}, {pipeline_mode = #tpu.pipeline_mode<synchronous>, transform_indices = @transform_7, window_bounds = array<i64: 32, 32>}, {pipeline_mode = #tpu.pipeline_mode<synchronous>, transform_indices = @transform_8, window_bounds = array<i64: 1, 32>}, {pipeline_mode = #tpu.pipeline_mode<synchronous>, transform_indices = @transform_9, window_bounds = array<i64: 8, 9>}, {pipeline_mode = #tpu.pipeline_mode<synchronous>, transform_indices = @transform_10, window_bounds = array<i64: 9, 8>}, {transform_indices = @transform_11, window_bounds = array<i64: 1, 16, 32>}]} {
    %c0_i32 = arith.constant 0 : i32
    %0 = arith.cmpi eq, %arg1, %c0_i32 : i32
    %1 = arith.extui %0 : i1 to i32
    %c0_i32_0 = arith.constant 0 : i32
    %2 = arith.cmpi ne, %1, %c0_i32_0 : i32
    scf.if %2 {
      %c0_59 = arith.constant 0 : index
      %c0_60 = arith.constant 0 : index
      %c0_61 = arith.constant 0 : index
      %283 = vector.load %arg3[%c0_59, %c0_60, %c0_61] : memref<1x16x32xf32, #tpu.memory_space<vmem>>, vector<1x16x32xf32>
      %284 = vector.shape_cast %283 : vector<1x16x32xf32> to vector<16x32xf32>
      %285 = arith.truncf %284 : vector<16x32xf32> to vector<16x32xbf16>
      %c0_62 = arith.constant 0 : index
      %c0_63 = arith.constant 0 : index
      %286 = vector.load %arg7[%c0_62, %c0_63] : memref<32x64xf32, #tpu.memory_space<vmem>>, vector<32x64xf32>
      %287 = arith.truncf %286 : vector<32x64xf32> to vector<32x64xbf16>
      %cst_64 = arith.constant dense<0.000000e+00> : vector<16x64xf32>
      %288 = tpu.matmul %285, %287, %cst_64 {dimension_numbers = #tpu.dot_dimension_numbers<[1], [0], [0], [1], [0, 0, 1, 1], [], []>} : vector<16x32xbf16>, vector<32x64xbf16>, vector<16x64xf32> -> vector<16x64xf32>
      %c0_65 = arith.constant 0 : index
      %c0_66 = arith.constant 0 : index
      %289 = vector.load %arg8[%c0_65, %c0_66] : memref<1x64xf32, #tpu.memory_space<vmem>>, vector<1x64xf32>
      %290 = vector.broadcast %289 : vector<1x64xf32> to vector<16x64xf32>
      %291 = arith.addf %288, %290 : vector<16x64xf32>
      %292 = vector.extract_strided_slice %291 {offsets = [0, 0], sizes = [16, 8], strides = [1, 1]} : vector<16x64xf32> to vector<16x8xf32>
      %293 = vector.extract_strided_slice %291 {offsets = [0, 8], sizes = [16, 8], strides = [1, 1]} : vector<16x64xf32> to vector<16x8xf32>
      %294 = vector.extract_strided_slice %291 {offsets = [0, 16], sizes = [16, 8], strides = [1, 1]} : vector<16x64xf32> to vector<16x8xf32>
      %295 = vector.extract_strided_slice %291 {offsets = [0, 24], sizes = [16, 8], strides = [1, 1]} : vector<16x64xf32> to vector<16x8xf32>
      %296 = vector.shape_cast %292 : vector<16x8xf32> to vector<1x16x8xf32>
      %297 = vector.shape_cast %293 : vector<16x8xf32> to vector<1x16x8xf32>
      %298 = vector.shape_cast %294 : vector<16x8xf32> to vector<1x16x8xf32>
      %299 = vector.shape_cast %295 : vector<16x8xf32> to vector<1x16x8xf32>
      %300 = tpu.concatenate %296, %297, %298, %299 in 0 : vector<1x16x8xf32>, vector<1x16x8xf32>, vector<1x16x8xf32>, vector<1x16x8xf32> -> vector<4x16x8xf32>
      %c0_67 = arith.constant 0 : index
      %c0_68 = arith.constant 0 : index
      %c0_69 = arith.constant 0 : index
      %301 = vector.load %arg14[%c0_67, %c0_68, %c0_69] : memref<4x16x8xf32, #tpu.memory_space<vmem>>, vector<4x16x8xf32>
      tpu.vector_store %arg14[%c0_67, %c0_68, %c0_69], %300 {strides = array<i32>} : memref<4x16x8xf32, #tpu.memory_space<vmem>>, vector<4x16x8xf32>,
      %302 = vector.extract_strided_slice %291 {offsets = [0, 32], sizes = [16, 8], strides = [1, 1]} : vector<16x64xf32> to vector<16x8xf32>
      %303 = vector.extract_strided_slice %291 {offsets = [0, 40], sizes = [16, 8], strides = [1, 1]} : vector<16x64xf32> to vector<16x8xf32>
      %304 = vector.extract_strided_slice %291 {offsets = [0, 48], sizes = [16, 8], strides = [1, 1]} : vector<16x64xf32> to vector<16x8xf32>
      %305 = vector.extract_strided_slice %291 {offsets = [0, 56], sizes = [16, 8], strides = [1, 1]} : vector<16x64xf32> to vector<16x8xf32>
      %306 = vector.shape_cast %302 : vector<16x8xf32> to vector<1x16x8xf32>
      %307 = vector.shape_cast %303 : vector<16x8xf32> to vector<1x16x8xf32>
      %308 = vector.shape_cast %304 : vector<16x8xf32> to vector<1x16x8xf32>
      %309 = vector.shape_cast %305 : vector<16x8xf32> to vector<1x16x8xf32>
      %310 = tpu.concatenate %306, %307, %308, %309 in 0 : vector<1x16x8xf32>, vector<1x16x8xf32>, vector<1x16x8xf32>, vector<1x16x8xf32> -> vector<4x16x8xf32>
      %c0_70 = arith.constant 0 : index
      %c0_71 = arith.constant 0 : index
      %c0_72 = arith.constant 0 : index
      %311 = vector.load %arg15[%c0_70, %c0_71, %c0_72] : memref<4x16x8xf32, #tpu.memory_space<vmem>>, vector<4x16x8xf32>
      tpu.vector_store %arg15[%c0_70, %c0_71, %c0_72], %310 {strides = array<i32>} : memref<4x16x8xf32, #tpu.memory_space<vmem>>, vector<4x16x8xf32>,
    } else {
    }
    %c0 = arith.constant 0 : index
    %c0_1 = arith.constant 0 : index
    %c0_2 = arith.constant 0 : index
    %3 = vector.load %arg2[%c0, %c0_1, %c0_2] : memref<1x16x32xf32, #tpu.memory_space<vmem>>, vector<1x16x32xf32>
    %4 = vector.shape_cast %3 : vector<1x16x32xf32> to vector<16x32xf32>
    %5 = arith.truncf %4 : vector<16x32xf32> to vector<16x32xbf16>
    %c0_3 = arith.constant 0 : index
    %c0_4 = arith.constant 0 : index
    %6 = vector.load %arg5[%c0_3, %c0_4] : memref<32x32xf32, #tpu.memory_space<vmem>>, vector<32x32xf32>
    %7 = arith.truncf %6 : vector<32x32xf32> to vector<32x32xbf16>
    %cst = arith.constant dense<0.000000e+00> : vector<16x32xf32>
    %8 = tpu.matmul %5, %7, %cst {dimension_numbers = #tpu.dot_dimension_numbers<[1], [0], [0], [1], [0, 0, 1, 1], [], []>} : vector<16x32xbf16>, vector<32x32xbf16>, vector<16x32xf32> -> vector<16x32xf32>
    %c0_5 = arith.constant 0 : index
    %c0_6 = arith.constant 0 : index
    %9 = vector.load %arg6[%c0_5, %c0_6] : memref<1x32xf32, #tpu.memory_space<vmem>>, vector<1x32xf32>
    %10 = vector.broadcast %9 : vector<1x32xf32> to vector<16x32xf32>
    %11 = arith.addf %8, %10 : vector<16x32xf32>
    %12 = vector.extract_strided_slice %11 {offsets = [0, 0], sizes = [16, 8], strides = [1, 1]} : vector<16x32xf32> to vector<16x8xf32>
    %13 = vector.extract_strided_slice %11 {offsets = [0, 8], sizes = [16, 8], strides = [1, 1]} : vector<16x32xf32> to vector<16x8xf32>
    %14 = vector.extract_strided_slice %11 {offsets = [0, 16], sizes = [16, 8], strides = [1, 1]} : vector<16x32xf32> to vector<16x8xf32>
    %15 = vector.extract_strided_slice %11 {offsets = [0, 24], sizes = [16, 8], strides = [1, 1]} : vector<16x32xf32> to vector<16x8xf32>
    %16 = vector.shape_cast %12 : vector<16x8xf32> to vector<1x16x8xf32>
    %17 = vector.shape_cast %13 : vector<16x8xf32> to vector<1x16x8xf32>
    %18 = vector.shape_cast %14 : vector<16x8xf32> to vector<1x16x8xf32>
    %19 = vector.shape_cast %15 : vector<16x8xf32> to vector<1x16x8xf32>
    %20 = tpu.concatenate %16, %17, %18, %19 in 0 : vector<1x16x8xf32>, vector<1x16x8xf32>, vector<1x16x8xf32>, vector<1x16x8xf32> -> vector<4x16x8xf32>
    %21 = arith.truncf %20 : vector<4x16x8xf32> to vector<4x16x8xbf16>
    %c0_7 = arith.constant 0 : index
    %c0_8 = arith.constant 0 : index
    %c0_9 = arith.constant 0 : index
    %22 = vector.load %arg14[%c0_7, %c0_8, %c0_9] : memref<4x16x8xf32, #tpu.memory_space<vmem>>, vector<4x16x8xf32>
    %23 = arith.truncf %22 : vector<4x16x8xf32> to vector<4x16x8xbf16>
    %c0_10 = arith.constant 0 : index
    %c0_11 = arith.constant 0 : index
    %c0_12 = arith.constant 0 : index
    %24 = vector.load %arg15[%c0_10, %c0_11, %c0_12] : memref<4x16x8xf32, #tpu.memory_space<vmem>>, vector<4x16x8xf32>
    %25 = arith.truncf %24 : vector<4x16x8xf32> to vector<4x16x8xbf16>
    "tpu.trace_start"() <{level = 10 : i32, message = "hld,hmd->hlm"}> : () -> ()
    %cst_13 = arith.constant dense<0.000000e+00> : vector<4x16x16xf32>
    %26 = tpu.matmul %21, %23, %cst_13 {dimension_numbers = #tpu.dot_dimension_numbers<[2], [2], [1], [1], [0, 0, 0, 1, 1, 1], [0], [0]>} : vector<4x16x8xbf16>, vector<4x16x8xbf16>, vector<4x16x16xf32> -> vector<4x16x16xf32>
    "tpu.trace_stop"() : () -> ()
    %27 = vector.shape_cast %21 : vector<4x16x8xbf16> to vector<64x8xbf16>
    %c0_14 = arith.constant 0 : index
    %c0_15 = arith.constant 0 : index
    %28 = vector.load %arg11[%c0_14, %c0_15] : memref<8x9xf32, #tpu.memory_space<vmem>>, vector<8x9xf32>
    %29 = arith.truncf %28 : vector<8x9xf32> to vector<8x9xbf16>
    %cst_16 = arith.constant dense<0.000000e+00> : vector<64x9xf32>
    %30 = tpu.matmul %27, %29, %cst_16 {dimension_numbers = #tpu.dot_dimension_numbers<[1], [0], [0], [1], [0, 0, 1, 1], [], []>} : vector<64x8xbf16>, vector<8x9xbf16>, vector<64x9xf32> -> vector<64x9xf32>
    %31 = vector.shape_cast %30 : vector<64x9xf32> to vector<4x16x9xf32>
    %32 = tpu.iota {dimensions = array<i32: 0>} : vector<16x16xi32>
    %c16_i32 = arith.constant 16 : i32
    %33 = arith.muli %arg1, %c16_i32 : i32
    %34 = vector.broadcast %33 : i32 to vector<16x16xi32>
    %35 = arith.addi %32, %34 : vector<16x16xi32>
    %36 = tpu.iota {dimensions = array<i32: 1>} : vector<16x16xi32>
    %37 = arith.subi %36, %35 : vector<16x16xi32>
    %c-4_i32 = arith.constant -4 : i32
    %c4_i32 = arith.constant 4 : i32
    %38 = vector.broadcast %c-4_i32 : i32 to vector<16x16xi32>
    %39 = arith.maxsi %38, %37 : vector<16x16xi32>
    %40 = vector.broadcast %c4_i32 : i32 to vector<16x16xi32>
    %41 = arith.minsi %40, %39 : vector<16x16xi32>
    %c4_i32_17 = arith.constant 4 : i32
    %42 = vector.broadcast %c4_i32_17 : i32 to vector<16x16xi32>
    %43 = arith.addi %41, %42 : vector<16x16xi32>
    %cst_18 = arith.constant 0.000000e+00 : f32
    %44 = vector.broadcast %cst_18 : f32 to vector<4x16x16xf32>
    %c0_i32_19 = arith.constant 0 : i32
    %45 = vector.broadcast %c0_i32_19 : i32 to vector<16x16xi32>
    %46 = arith.cmpi eq, %43, %45 : vector<16x16xi32>
    %47 = arith.extui %46 : vector<16x16xi1> to vector<16x16xi32>
    %48 = arith.sitofp %47 : vector<16x16xi32> to vector<16x16xf32>
    %49 = vector.shape_cast %48 : vector<16x16xf32> to vector<1x16x16xf32>
    %50 = vector.extract_strided_slice %31 {offsets = [0, 0, 0], sizes = [4, 16, 1], strides = [1, 1, 1]} : vector<4x16x9xf32> to vector<4x16x1xf32>
    %51 = vector.shape_cast %50 : vector<4x16x1xf32> to vector<4x16xf32>
    %52 = vector.shape_cast %51 : vector<4x16xf32> to vector<4x16x1xf32>
    %53 = vector.broadcast %49 : vector<1x16x16xf32> to vector<4x16x16xf32>
    %54 = vector.broadcast %52 : vector<4x16x1xf32> to vector<4x16x16xf32>
    %55 = arith.mulf %53, %54 : vector<4x16x16xf32>
    %56 = arith.addf %44, %55 : vector<4x16x16xf32>
    %c1_i32 = arith.constant 1 : i32
    %57 = vector.broadcast %c1_i32 : i32 to vector<16x16xi32>
    %58 = arith.cmpi eq, %43, %57 : vector<16x16xi32>
    %59 = arith.extui %58 : vector<16x16xi1> to vector<16x16xi32>
    %60 = arith.sitofp %59 : vector<16x16xi32> to vector<16x16xf32>
    %61 = vector.shape_cast %60 : vector<16x16xf32> to vector<1x16x16xf32>
    %62 = vector.extract_strided_slice %31 {offsets = [0, 0, 1], sizes = [4, 16, 1], strides = [1, 1, 1]} : vector<4x16x9xf32> to vector<4x16x1xf32>
    %63 = vector.shape_cast %62 : vector<4x16x1xf32> to vector<4x16xf32>
    %64 = vector.shape_cast %63 : vector<4x16xf32> to vector<4x16x1xf32>
    %65 = vector.broadcast %61 : vector<1x16x16xf32> to vector<4x16x16xf32>
    %66 = vector.broadcast %64 : vector<4x16x1xf32> to vector<4x16x16xf32>
    %67 = arith.mulf %65, %66 : vector<4x16x16xf32>
    %68 = arith.addf %56, %67 : vector<4x16x16xf32>
    %c2_i32 = arith.constant 2 : i32
    %69 = vector.broadcast %c2_i32 : i32 to vector<16x16xi32>
    %70 = arith.cmpi eq, %43, %69 : vector<16x16xi32>
    %71 = arith.extui %70 : vector<16x16xi1> to vector<16x16xi32>
    %72 = arith.sitofp %71 : vector<16x16xi32> to vector<16x16xf32>
    %73 = vector.shape_cast %72 : vector<16x16xf32> to vector<1x16x16xf32>
    %74 = vector.extract_strided_slice %31 {offsets = [0, 0, 2], sizes = [4, 16, 1], strides = [1, 1, 1]} : vector<4x16x9xf32> to vector<4x16x1xf32>
    %75 = vector.shape_cast %74 : vector<4x16x1xf32> to vector<4x16xf32>
    %76 = vector.shape_cast %75 : vector<4x16xf32> to vector<4x16x1xf32>
    %77 = vector.broadcast %73 : vector<1x16x16xf32> to vector<4x16x16xf32>
    %78 = vector.broadcast %76 : vector<4x16x1xf32> to vector<4x16x16xf32>
    %79 = arith.mulf %77, %78 : vector<4x16x16xf32>
    %80 = arith.addf %68, %79 : vector<4x16x16xf32>
    %c3_i32 = arith.constant 3 : i32
    %81 = vector.broadcast %c3_i32 : i32 to vector<16x16xi32>
    %82 = arith.cmpi eq, %43, %81 : vector<16x16xi32>
    %83 = arith.extui %82 : vector<16x16xi1> to vector<16x16xi32>
    %84 = arith.sitofp %83 : vector<16x16xi32> to vector<16x16xf32>
    %85 = vector.shape_cast %84 : vector<16x16xf32> to vector<1x16x16xf32>
    %86 = vector.extract_strided_slice %31 {offsets = [0, 0, 3], sizes = [4, 16, 1], strides = [1, 1, 1]} : vector<4x16x9xf32> to vector<4x16x1xf32>
    %87 = vector.shape_cast %86 : vector<4x16x1xf32> to vector<4x16xf32>
    %88 = vector.shape_cast %87 : vector<4x16xf32> to vector<4x16x1xf32>
    %89 = vector.broadcast %85 : vector<1x16x16xf32> to vector<4x16x16xf32>
    %90 = vector.broadcast %88 : vector<4x16x1xf32> to vector<4x16x16xf32>
    %91 = arith.mulf %89, %90 : vector<4x16x16xf32>
    %92 = arith.addf %80, %91 : vector<4x16x16xf32>
    %c4_i32_20 = arith.constant 4 : i32
    %93 = vector.broadcast %c4_i32_20 : i32 to vector<16x16xi32>
    %94 = arith.cmpi eq, %43, %93 : vector<16x16xi32>
    %95 = arith.extui %94 : vector<16x16xi1> to vector<16x16xi32>
    %96 = arith.sitofp %95 : vector<16x16xi32> to vector<16x16xf32>
    %97 = vector.shape_cast %96 : vector<16x16xf32> to vector<1x16x16xf32>
    %98 = vector.extract_strided_slice %31 {offsets = [0, 0, 4], sizes = [4, 16, 1], strides = [1, 1, 1]} : vector<4x16x9xf32> to vector<4x16x1xf32>
    %99 = vector.shape_cast %98 : vector<4x16x1xf32> to vector<4x16xf32>
    %100 = vector.shape_cast %99 : vector<4x16xf32> to vector<4x16x1xf32>
    %101 = vector.broadcast %97 : vector<1x16x16xf32> to vector<4x16x16xf32>
    %102 = vector.broadcast %100 : vector<4x16x1xf32> to vector<4x16x16xf32>
    %103 = arith.mulf %101, %102 : vector<4x16x16xf32>
    %104 = arith.addf %92, %103 : vector<4x16x16xf32>
    %c5_i32 = arith.constant 5 : i32
    %105 = vector.broadcast %c5_i32 : i32 to vector<16x16xi32>
    %106 = arith.cmpi eq, %43, %105 : vector<16x16xi32>
    %107 = arith.extui %106 : vector<16x16xi1> to vector<16x16xi32>
    %108 = arith.sitofp %107 : vector<16x16xi32> to vector<16x16xf32>
    %109 = vector.shape_cast %108 : vector<16x16xf32> to vector<1x16x16xf32>
    %110 = vector.extract_strided_slice %31 {offsets = [0, 0, 5], sizes = [4, 16, 1], strides = [1, 1, 1]} : vector<4x16x9xf32> to vector<4x16x1xf32>
    %111 = vector.shape_cast %110 : vector<4x16x1xf32> to vector<4x16xf32>
    %112 = vector.shape_cast %111 : vector<4x16xf32> to vector<4x16x1xf32>
    %113 = vector.broadcast %109 : vector<1x16x16xf32> to vector<4x16x16xf32>
    %114 = vector.broadcast %112 : vector<4x16x1xf32> to vector<4x16x16xf32>
    %115 = arith.mulf %113, %114 : vector<4x16x16xf32>
    %116 = arith.addf %104, %115 : vector<4x16x16xf32>
    %c6_i32 = arith.constant 6 : i32
    %117 = vector.broadcast %c6_i32 : i32 to vector<16x16xi32>
    %118 = arith.cmpi eq, %43, %117 : vector<16x16xi32>
    %119 = arith.extui %118 : vector<16x16xi1> to vector<16x16xi32>
    %120 = arith.sitofp %119 : vector<16x16xi32> to vector<16x16xf32>
    %121 = vector.shape_cast %120 : vector<16x16xf32> to vector<1x16x16xf32>
    %122 = vector.extract_strided_slice %31 {offsets = [0, 0, 6], sizes = [4, 16, 1], strides = [1, 1, 1]} : vector<4x16x9xf32> to vector<4x16x1xf32>
    %123 = vector.shape_cast %122 : vector<4x16x1xf32> to vector<4x16xf32>
    %124 = vector.shape_cast %123 : vector<4x16xf32> to vector<4x16x1xf32>
    %125 = vector.broadcast %121 : vector<1x16x16xf32> to vector<4x16x16xf32>
    %126 = vector.broadcast %124 : vector<4x16x1xf32> to vector<4x16x16xf32>
    %127 = arith.mulf %125, %126 : vector<4x16x16xf32>
    %128 = arith.addf %116, %127 : vector<4x16x16xf32>
    %c7_i32 = arith.constant 7 : i32
    %129 = vector.broadcast %c7_i32 : i32 to vector<16x16xi32>
    %130 = arith.cmpi eq, %43, %129 : vector<16x16xi32>
    %131 = arith.extui %130 : vector<16x16xi1> to vector<16x16xi32>
    %132 = arith.sitofp %131 : vector<16x16xi32> to vector<16x16xf32>
    %133 = vector.shape_cast %132 : vector<16x16xf32> to vector<1x16x16xf32>
    %134 = vector.extract_strided_slice %31 {offsets = [0, 0, 7], sizes = [4, 16, 1], strides = [1, 1, 1]} : vector<4x16x9xf32> to vector<4x16x1xf32>
    %135 = vector.shape_cast %134 : vector<4x16x1xf32> to vector<4x16xf32>
    %136 = vector.shape_cast %135 : vector<4x16xf32> to vector<4x16x1xf32>
    %137 = vector.broadcast %133 : vector<1x16x16xf32> to vector<4x16x16xf32>
    %138 = vector.broadcast %136 : vector<4x16x1xf32> to vector<4x16x16xf32>
    %139 = arith.mulf %137, %138 : vector<4x16x16xf32>
    %140 = arith.addf %128, %139 : vector<4x16x16xf32>
    %c8_i32 = arith.constant 8 : i32
    %141 = vector.broadcast %c8_i32 : i32 to vector<16x16xi32>
    %142 = arith.cmpi eq, %43, %141 : vector<16x16xi32>
    %143 = arith.extui %142 : vector<16x16xi1> to vector<16x16xi32>
    %144 = arith.sitofp %143 : vector<16x16xi32> to vector<16x16xf32>
    %145 = vector.shape_cast %144 : vector<16x16xf32> to vector<1x16x16xf32>
    %146 = vector.extract_strided_slice %31 {offsets = [0, 0, 8], sizes = [4, 16, 1], strides = [1, 1, 1]} : vector<4x16x9xf32> to vector<4x16x1xf32>
    %147 = vector.shape_cast %146 : vector<4x16x1xf32> to vector<4x16xf32>
    %148 = vector.shape_cast %147 : vector<4x16xf32> to vector<4x16x1xf32>
    %149 = vector.broadcast %145 : vector<1x16x16xf32> to vector<4x16x16xf32>
    %150 = vector.broadcast %148 : vector<4x16x1xf32> to vector<4x16x16xf32>
    %151 = arith.mulf %149, %150 : vector<4x16x16xf32>
    %152 = arith.addf %140, %151 : vector<4x16x16xf32>
    %153 = arith.addf %26, %152 : vector<4x16x16xf32>
    %cst_21 = arith.constant 0.353553385 : f32
    %154 = vector.broadcast %cst_21 : f32 to vector<4x16x16xf32>
    %155 = arith.mulf %153, %154 : vector<4x16x16xf32>
    %c0_22 = arith.constant 0 : index
    %c0_23 = arith.constant 0 : index
    %c0_24 = arith.constant 0 : index
    %156 = vector.load %arg4[%c0_22, %c0_23, %c0_24] : memref<1x1x16xf32, #tpu.memory_space<vmem>>, vector<1x1x16xf32>
    %cst_25 = arith.constant 0.000000e+00 : f32
    %157 = vector.broadcast %cst_25 : f32 to vector<1x1x16xf32>
    %158 = arith.cmpf one, %156, %157 : vector<1x1x16xf32>
    %cst_26 = arith.constant -1.000000e+30 : f32
    %159 = vector.shape_cast %158 : vector<1x1x16xi1> to vector<1x1x16xi1>
    %160 = vector.broadcast %159 : vector<1x1x16xi1> to vector<4x16x16xi1>
    %161 = vector.broadcast %cst_26 : f32 to vector<4x16x16xf32>
    %162 = arith.select %160, %155, %161 : vector<4x16x16xi1>, vector<4x16x16xf32>
    %cst_27 = arith.constant dense<0xFF800000> : vector<4x16xf32>
    %163 = vector.multi_reduction <maximumf>, %162, %cst_27 [2] : vector<4x16x16xf32> to vector<4x16xf32>
    %164 = vector.shape_cast %163 : vector<4x16xf32> to vector<4x16x1xf32>
    %165 = vector.broadcast %164 : vector<4x16x1xf32> to vector<4x16x16xf32>
    %166 = arith.subf %162, %165 : vector<4x16x16xf32>
    %167 = math.exp %166 : vector<4x16x16xf32>
    %cst_28 = arith.constant dense<0.000000e+00> : vector<4x16xf32>
    %168 = vector.multi_reduction <add>, %167, %cst_28 [2] : vector<4x16x16xf32> to vector<4x16xf32>
    %169 = vector.shape_cast %168 : vector<4x16xf32> to vector<4x16x1xf32>
    %170 = vector.broadcast %169 : vector<4x16x1xf32> to vector<4x16x16xf32>
    %171 = arith.divf %167, %170 : vector<4x16x16xf32>
    %172 = arith.truncf %171 : vector<4x16x16xf32> to vector<4x16x16xbf16>
    "tpu.trace_start"() <{level = 10 : i32, message = "hlm,hmd->hld"}> : () -> ()
    %cst_29 = arith.constant dense<0.000000e+00> : vector<4x16x8xf32>
    %173 = tpu.matmul %172, %25, %cst_29 {dimension_numbers = #tpu.dot_dimension_numbers<[2], [1], [1], [2], [0, 0, 0, 1, 1, 2], [0], [0]>} : vector<4x16x16xbf16>, vector<4x16x8xbf16>, vector<4x16x8xf32> -> vector<4x16x8xf32>
    %c0_i32_30 = arith.constant 0 : i32
    "tpu.trace_stop"() : () -> ()
    %174 = vector.broadcast %c0_i32_30 : i32 to vector<16x16xi32>
    %175 = arith.cmpi eq, %43, %174 : vector<16x16xi32>
    %176 = arith.extui %175 : vector<16x16xi1> to vector<16x16xi32>
    %177 = arith.sitofp %176 : vector<16x16xi32> to vector<16x16xf32>
    %178 = vector.shape_cast %177 : vector<16x16xf32> to vector<1x16x16xf32>
    %179 = vector.broadcast %178 : vector<1x16x16xf32> to vector<4x16x16xf32>
    %180 = arith.mulf %171, %179 : vector<4x16x16xf32>
    %cst_31 = arith.constant dense<0.000000e+00> : vector<4x16xf32>
    %181 = vector.multi_reduction <add>, %180, %cst_31 [2] : vector<4x16x16xf32> to vector<4x16xf32>
    %c1_i32_32 = arith.constant 1 : i32
    %182 = vector.broadcast %c1_i32_32 : i32 to vector<16x16xi32>
    %183 = arith.cmpi eq, %43, %182 : vector<16x16xi32>
    %184 = arith.extui %183 : vector<16x16xi1> to vector<16x16xi32>
    %185 = arith.sitofp %184 : vector<16x16xi32> to vector<16x16xf32>
    %186 = vector.shape_cast %185 : vector<16x16xf32> to vector<1x16x16xf32>
    %187 = vector.broadcast %186 : vector<1x16x16xf32> to vector<4x16x16xf32>
    %188 = arith.mulf %171, %187 : vector<4x16x16xf32>
    %cst_33 = arith.constant dense<0.000000e+00> : vector<4x16xf32>
    %189 = vector.multi_reduction <add>, %188, %cst_33 [2] : vector<4x16x16xf32> to vector<4x16xf32>
    %c2_i32_34 = arith.constant 2 : i32
    %190 = vector.broadcast %c2_i32_34 : i32 to vector<16x16xi32>
    %191 = arith.cmpi eq, %43, %190 : vector<16x16xi32>
    %192 = arith.extui %191 : vector<16x16xi1> to vector<16x16xi32>
    %193 = arith.sitofp %192 : vector<16x16xi32> to vector<16x16xf32>
    %194 = vector.shape_cast %193 : vector<16x16xf32> to vector<1x16x16xf32>
    %195 = vector.broadcast %194 : vector<1x16x16xf32> to vector<4x16x16xf32>
    %196 = arith.mulf %171, %195 : vector<4x16x16xf32>
    %cst_35 = arith.constant dense<0.000000e+00> : vector<4x16xf32>
    %197 = vector.multi_reduction <add>, %196, %cst_35 [2] : vector<4x16x16xf32> to vector<4x16xf32>
    %c3_i32_36 = arith.constant 3 : i32
    %198 = vector.broadcast %c3_i32_36 : i32 to vector<16x16xi32>
    %199 = arith.cmpi eq, %43, %198 : vector<16x16xi32>
    %200 = arith.extui %199 : vector<16x16xi1> to vector<16x16xi32>
    %201 = arith.sitofp %200 : vector<16x16xi32> to vector<16x16xf32>
    %202 = vector.shape_cast %201 : vector<16x16xf32> to vector<1x16x16xf32>
    %203 = vector.broadcast %202 : vector<1x16x16xf32> to vector<4x16x16xf32>
    %204 = arith.mulf %171, %203 : vector<4x16x16xf32>
    %cst_37 = arith.constant dense<0.000000e+00> : vector<4x16xf32>
    %205 = vector.multi_reduction <add>, %204, %cst_37 [2] : vector<4x16x16xf32> to vector<4x16xf32>
    %c4_i32_38 = arith.constant 4 : i32
    %206 = vector.broadcast %c4_i32_38 : i32 to vector<16x16xi32>
    %207 = arith.cmpi eq, %43, %206 : vector<16x16xi32>
    %208 = arith.extui %207 : vector<16x16xi1> to vector<16x16xi32>
    %209 = arith.sitofp %208 : vector<16x16xi32> to vector<16x16xf32>
    %210 = vector.shape_cast %209 : vector<16x16xf32> to vector<1x16x16xf32>
    %211 = vector.broadcast %210 : vector<1x16x16xf32> to vector<4x16x16xf32>
    %212 = arith.mulf %171, %211 : vector<4x16x16xf32>
    %cst_39 = arith.constant dense<0.000000e+00> : vector<4x16xf32>
    %213 = vector.multi_reduction <add>, %212, %cst_39 [2] : vector<4x16x16xf32> to vector<4x16xf32>
    %c5_i32_40 = arith.constant 5 : i32
    %214 = vector.broadcast %c5_i32_40 : i32 to vector<16x16xi32>
    %215 = arith.cmpi eq, %43, %214 : vector<16x16xi32>
    %216 = arith.extui %215 : vector<16x16xi1> to vector<16x16xi32>
    %217 = arith.sitofp %216 : vector<16x16xi32> to vector<16x16xf32>
    %218 = vector.shape_cast %217 : vector<16x16xf32> to vector<1x16x16xf32>
    %219 = vector.broadcast %218 : vector<1x16x16xf32> to vector<4x16x16xf32>
    %220 = arith.mulf %171, %219 : vector<4x16x16xf32>
    %cst_41 = arith.constant dense<0.000000e+00> : vector<4x16xf32>
    %221 = vector.multi_reduction <add>, %220, %cst_41 [2] : vector<4x16x16xf32> to vector<4x16xf32>
    %c6_i32_42 = arith.constant 6 : i32
    %222 = vector.broadcast %c6_i32_42 : i32 to vector<16x16xi32>
    %223 = arith.cmpi eq, %43, %222 : vector<16x16xi32>
    %224 = arith.extui %223 : vector<16x16xi1> to vector<16x16xi32>
    %225 = arith.sitofp %224 : vector<16x16xi32> to vector<16x16xf32>
    %226 = vector.shape_cast %225 : vector<16x16xf32> to vector<1x16x16xf32>
    %227 = vector.broadcast %226 : vector<1x16x16xf32> to vector<4x16x16xf32>
    %228 = arith.mulf %171, %227 : vector<4x16x16xf32>
    %cst_43 = arith.constant dense<0.000000e+00> : vector<4x16xf32>
    %229 = vector.multi_reduction <add>, %228, %cst_43 [2] : vector<4x16x16xf32> to vector<4x16xf32>
    %c7_i32_44 = arith.constant 7 : i32
    %230 = vector.broadcast %c7_i32_44 : i32 to vector<16x16xi32>
    %231 = arith.cmpi eq, %43, %230 : vector<16x16xi32>
    %232 = arith.extui %231 : vector<16x16xi1> to vector<16x16xi32>
    %233 = arith.sitofp %232 : vector<16x16xi32> to vector<16x16xf32>
    %234 = vector.shape_cast %233 : vector<16x16xf32> to vector<1x16x16xf32>
    %235 = vector.broadcast %234 : vector<1x16x16xf32> to vector<4x16x16xf32>
    %236 = arith.mulf %171, %235 : vector<4x16x16xf32>
    %cst_45 = arith.constant dense<0.000000e+00> : vector<4x16xf32>
    %237 = vector.multi_reduction <add>, %236, %cst_45 [2] : vector<4x16x16xf32> to vector<4x16xf32>
    %c8_i32_46 = arith.constant 8 : i32
    %238 = vector.broadcast %c8_i32_46 : i32 to vector<16x16xi32>
    %239 = arith.cmpi eq, %43, %238 : vector<16x16xi32>
    %240 = arith.extui %239 : vector<16x16xi1> to vector<16x16xi32>
    %241 = arith.sitofp %240 : vector<16x16xi32> to vector<16x16xf32>
    %242 = vector.shape_cast %241 : vector<16x16xf32> to vector<1x16x16xf32>
    %243 = vector.broadcast %242 : vector<1x16x16xf32> to vector<4x16x16xf32>
    %244 = arith.mulf %171, %243 : vector<4x16x16xf32>
    %cst_47 = arith.constant dense<0.000000e+00> : vector<4x16xf32>
    %245 = vector.multi_reduction <add>, %244, %cst_47 [2] : vector<4x16x16xf32> to vector<4x16xf32>
    %246 = vector.shape_cast %181 : vector<4x16xf32> to vector<4x16x1xf32>
    %247 = vector.shape_cast %189 : vector<4x16xf32> to vector<4x16x1xf32>
    %248 = vector.shape_cast %197 : vector<4x16xf32> to vector<4x16x1xf32>
    %249 = vector.shape_cast %205 : vector<4x16xf32> to vector<4x16x1xf32>
    %250 = vector.shape_cast %213 : vector<4x16xf32> to vector<4x16x1xf32>
    %251 = vector.shape_cast %221 : vector<4x16xf32> to vector<4x16x1xf32>
    %252 = vector.shape_cast %229 : vector<4x16xf32> to vector<4x16x1xf32>
    %253 = vector.shape_cast %237 : vector<4x16xf32> to vector<4x16x1xf32>
    %254 = vector.shape_cast %245 : vector<4x16xf32> to vector<4x16x1xf32>
    %255 = tpu.concatenate %246, %247, %248, %249, %250, %251, %252, %253, %254 in 2 : vector<4x16x1xf32>, vector<4x16x1xf32>, vector<4x16x1xf32>, vector<4x16x1xf32>, vector<4x16x1xf32>, vector<4x16x1xf32>, vector<4x16x1xf32>, vector<4x16x1xf32>, vector<4x16x1xf32> -> vector<4x16x9xf32>
    %256 = vector.shape_cast %255 : vector<4x16x9xf32> to vector<64x9xf32>
    %257 = arith.truncf %256 : vector<64x9xf32> to vector<64x9xbf16>
    %c0_48 = arith.constant 0 : index
    %c0_49 = arith.constant 0 : index
    %258 = vector.load %arg12[%c0_48, %c0_49] : memref<9x8xf32, #tpu.memory_space<vmem>>, vector<9x8xf32>
    %259 = arith.truncf %258 : vector<9x8xf32> to vector<9x8xbf16>
    %cst_50 = arith.constant dense<0.000000e+00> : vector<64x8xf32>
    %260 = tpu.matmul %257, %259, %cst_50 {dimension_numbers = #tpu.dot_dimension_numbers<[1], [0], [0], [1], [0, 0, 1, 1], [], []>} : vector<64x9xbf16>, vector<9x8xbf16>, vector<64x8xf32> -> vector<64x8xf32>
    %261 = vector.shape_cast %260 : vector<64x8xf32> to vector<4x16x8xf32>
    %262 = arith.addf %173, %261 : vector<4x16x8xf32>
    %263 = vector.extract_strided_slice %262 {offsets = [0, 0, 0], sizes = [1, 16, 8], strides = [1, 1, 1]} : vector<4x16x8xf32> to vector<1x16x8xf32>
    %264 = vector.shape_cast %263 : vector<1x16x8xf32> to vector<16x8xf32>
    %265 = vector.extract_strided_slice %262 {offsets = [1, 0, 0], sizes = [1, 16, 8], strides = [1, 1, 1]} : vector<4x16x8xf32> to vector<1x16x8xf32>
    %266 = vector.shape_cast %265 : vector<1x16x8xf32> to vector<16x8xf32>
    %267 = vector.extract_strided_slice %262 {offsets = [2, 0, 0], sizes = [1, 16, 8], strides = [1, 1, 1]} : vector<4x16x8xf32> to vector<1x16x8xf32>
    %268 = vector.shape_cast %267 : vector<1x16x8xf32> to vector<16x8xf32>
    %269 = vector.extract_strided_slice %262 {offsets = [3, 0, 0], sizes = [1, 16, 8], strides = [1, 1, 1]} : vector<4x16x8xf32> to vector<1x16x8xf32>
    %270 = vector.shape_cast %269 : vector<1x16x8xf32> to vector<16x8xf32>
    %271 = tpu.concatenate %264, %266, %268, %270 in 1 : vector<16x8xf32>, vector<16x8xf32>, vector<16x8xf32>, vector<16x8xf32> -> vector<16x32xf32>
    %272 = arith.truncf %271 : vector<16x32xf32> to vector<16x32xbf16>
    %c0_51 = arith.constant 0 : index
    %c0_52 = arith.constant 0 : index
    %273 = vector.load %arg9[%c0_51, %c0_52] : memref<32x32xf32, #tpu.memory_space<vmem>>, vector<32x32xf32>
    %274 = arith.truncf %273 : vector<32x32xf32> to vector<32x32xbf16>
    %cst_53 = arith.constant dense<0.000000e+00> : vector<16x32xf32>
    %275 = tpu.matmul %272, %274, %cst_53 {dimension_numbers = #tpu.dot_dimension_numbers<[1], [0], [0], [1], [0, 0, 1, 1], [], []>} : vector<16x32xbf16>, vector<32x32xbf16>, vector<16x32xf32> -> vector<16x32xf32>
    %c0_54 = arith.constant 0 : index
    %c0_55 = arith.constant 0 : index
    %276 = vector.load %arg10[%c0_54, %c0_55] : memref<1x32xf32, #tpu.memory_space<vmem>>, vector<1x32xf32>
    %277 = vector.broadcast %276 : vector<1x32xf32> to vector<16x32xf32>
    %278 = arith.addf %275, %277 : vector<16x32xf32>
    %279 = arith.addf %278, %4 : vector<16x32xf32>
    %c0_56 = arith.constant 0 : index
    %c0_57 = arith.constant 0 : index
    %c0_58 = arith.constant 0 : index
    %280 = vector.load %arg13[%c0_56, %c0_57, %c0_58] : memref<1x16x32xf32, #tpu.memory_space<vmem>>, vector<1x16x32xf32>
    %281 = vector.shape_cast %280 : vector<1x16x32xf32> to vector<16x32xf32>
    %282 = vector.shape_cast %279 : vector<16x32xf32> to vector<1x16x32xf32>
    tpu.vector_store %arg13[%c0_56, %c0_57, %c0_58], %282 {strides = array<i32>} : memref<1x16x32xf32, #tpu.memory_space<vmem>>, vector<1x16x32xf32>,
    return
  }
  func.func @transform_0(%arg0: i32, %arg1: i32) -> (i32, i32, i32) {
    %c0_i32 = arith.constant 0 : i32
    %c0_i32_0 = arith.constant 0 : i32
    return %arg0, %arg1, %c0_i32 : i32, i32, i32
  }
  func.func @transform_1(%arg0: i32, %arg1: i32) -> (i32, i32, i32) {
    %c0_i32 = arith.constant 0 : i32
    %c0_i32_0 = arith.constant 0 : i32
    %c0_i32_1 = arith.constant 0 : i32
    return %arg0, %c0_i32, %c0_i32_0 : i32, i32, i32
  }
  func.func @transform_2(%arg0: i32, %arg1: i32) -> (i32, i32, i32) {
    %c0_i32 = arith.constant 0 : i32
    %c0_i32_0 = arith.constant 0 : i32
    %c0_i32_1 = arith.constant 0 : i32
    return %arg0, %c0_i32, %c0_i32_0 : i32, i32, i32
  }
  func.func @transform_3(%arg0: i32, %arg1: i32) -> (i32, i32) {
    %c0_i32 = arith.constant 0 : i32
    %c0_i32_0 = arith.constant 0 : i32
    %c0_i32_1 = arith.constant 0 : i32
    return %c0_i32, %c0_i32_0 : i32, i32
  }
  func.func @transform_4(%arg0: i32, %arg1: i32) -> (i32, i32) {
    %c0_i32 = arith.constant 0 : i32
    %c0_i32_0 = arith.constant 0 : i32
    %c0_i32_1 = arith.constant 0 : i32
    return %c0_i32, %c0_i32_0 : i32, i32
  }
  func.func @transform_5(%arg0: i32, %arg1: i32) -> (i32, i32) {
    %c0_i32 = arith.constant 0 : i32
    %c0_i32_0 = arith.constant 0 : i32
    %c0_i32_1 = arith.constant 0 : i32
    return %c0_i32, %c0_i32_0 : i32, i32
  }
  func.func @transform_6(%arg0: i32, %arg1: i32) -> (i32, i32) {
    %c0_i32 = arith.constant 0 : i32
    %c0_i32_0 = arith.constant 0 : i32
    %c0_i32_1 = arith.constant 0 : i32
    return %c0_i32, %c0_i32_0 : i32, i32
  }
  func.func @transform_7(%arg0: i32, %arg1: i32) -> (i32, i32) {
    %c0_i32 = arith.constant 0 : i32
    %c0_i32_0 = arith.constant 0 : i32
    %c0_i32_1 = arith.constant 0 : i32
    return %c0_i32, %c0_i32_0 : i32, i32
  }
  func.func @transform_8(%arg0: i32, %arg1: i32) -> (i32, i32) {
    %c0_i32 = arith.constant 0 : i32
    %c0_i32_0 = arith.constant 0 : i32
    %c0_i32_1 = arith.constant 0 : i32
    return %c0_i32, %c0_i32_0 : i32, i32
  }
  func.func @transform_9(%arg0: i32, %arg1: i32) -> (i32, i32) {
    %c0_i32 = arith.constant 0 : i32
    %c0_i32_0 = arith.constant 0 : i32
    %c0_i32_1 = arith.constant 0 : i32
    return %c0_i32, %c0_i32_0 : i32, i32
  }
  func.func @transform_10(%arg0: i32, %arg1: i32) -> (i32, i32) {
    %c0_i32 = arith.constant 0 : i32
    %c0_i32_0 = arith.constant 0 : i32
    %c0_i32_1 = arith.constant 0 : i32
    return %c0_i32, %c0_i32_0 : i32, i32
  }
  func.func @transform_11(%arg0: i32, %arg1: i32) -> (i32, i32, i32) {
    %c0_i32 = arith.constant 0 : i32
    %c0_i32_0 = arith.constant 0 : i32
    return %arg0, %arg1, %c0_i32 : i32, i32, i32
  }
}

</mosaic_0001>

<llo_original>
// kernel: encoder_block_forward.5
$region0: #{encoder_block_forward.5}
  #allocation0 [shape = 'u32[]', space=smem, size = 0x4, offset = 0x4, fixed_abs, tag = 'smem constant byte address 0x4 - core index']
  #allocation1 [shape = 'u32[72,128]{1,0:T(1,128)}', space=vmem, size = 0x9000, scoped, tag = 'internal scratch']
  %s0 = inlined_call_operand.vmem [shape: f32[2,16,32], index: 0, kind: input, shape index: {}]
  %s1 = inlined_call_operand.vmem [shape: f32[32,128], index: 1, kind: input, shape index: {}]
  %s2 = inlined_call_operand.vmem [shape: f32[1,128], index: 2, kind: input, shape index: {}]
  %s3 = inlined_call_operand.vmem [shape: f32[128,32], index: 3, kind: input, shape index: {}]
  %s4 = inlined_call_operand.vmem [shape: f32[1,32], index: 4, kind: input, shape index: {}]
  %s5 = inlined_call_operand.hbm [shape: f32[2,16,32], index: 5, kind: output, shape index: {}]
  %s6 = sld [smem:[#allocation0]]
  $region53: #{encoder_block_forward.5} parent=0
    _
  %s8 = ssub.s32 1, %s6
  %s9 = scalar_select 0, %s8, %s6
  $region1: #{encoder_block_forward.5} parent=0
    #allocation2 [shape = 'u8[16384]{0}', space=vmem, size = 0x4000, scoped, tag = 'output window, operand 0']
    #allocation3 [shape = 's32[2]{0}', space=sflag, size = 0x8, scoped, tag = 'scoped memory for encoder_block_forward.5']
    %10 = vsyncpa [#allocation3], 0
    %s11 = scalar_lea.sflag [#allocation3], 1
    %12 = vsyncpa %s11, 0
    loop: start=0, step=1, limit=4
    $region2: #{encoder_block_forward.5} parent=1 // loop_pre_header
      _
    $region3: #{encoder_block_forward.5} parent=1 // loop_header
      %s14 = sphi 0, %s18
      %p15 = scmp.ge.s32.totalorder %s14, 4
      %s21 = sphi 0, %s33
      %s22 = sphi 0, %s29
      %s23 = sphi 0, %s21
      %s24 = sphi 0, %s22
      %s25 = sphi 0, %s23
      %s26 = sphi 0, %s24
      %s38 = sphi 0, %s40
      %s41 = sphi 0, %s38
      %s42 = sphi 0, %s41
      %s58 = sphi 0, %s42
      %s62 = sphi 0, %s62
      %s64 = sphi 0, %s62
      %s65 = sphi 0, %s64
      %s79 = sphi 0, %s65
      %s83 = sphi 0, %s83
      %s85 = sphi 0, %s83
      %s86 = sphi 0, %s85
      %s100 = sphi 0, %s86
      %s104 = sphi 0, %s104
      %s106 = sphi 0, %s104
      %s107 = sphi 0, %s106
      %s121 = sphi 0, %s107
      %s125 = sphi 0, %s125
      %s127 = sphi 0, %s125
      %s128 = sphi 0, %s127
      %s142 = sphi 0, %s128
      %s150 = sphi 0, %s152
      %s153 = sphi 0, %s150
      %s154 = sphi 0, %s153
      %s170 = sphi 0, %s154
    $region4: #{encoder_block_forward.5} parent=1 // loop_header_branch
      %17 = sbr.rel (%p15) target = $region8
    $region5: #{encoder_block_forward.5} parent=1 // loop_body
      %s19 = ssub.s32 %s14, 1
      %s20 = ssub.s32 %s14, 2
      %s27 = sadd.s32 1, %s22
      %p28 = scmp.ge.s32.totalorder %s27, 1
      %s29 = scalar_select %p28, 0, %s27
      %s30 = sadd.s32 1, %s21
      %s31 = scalar_select %p28, %s30, %s21
      %p32 = scmp.ge.s32.totalorder %s31, 2
      %s33 = scalar_select %p32, 0, %s31
      %s34 = ssub.s32 %s21, %s33
      %s35 = ssub.s32 %s22, %s29
      %s36 = sor.u32 %s34, %s35
      %p37 = scmp.eq.s32.totalorder %s36, 0
      %s39 = sadd.s32 %s38, 1
      %s40 = scalar_select %p37, %s38, %s39
      %p43 = pneg %p37
      %p44 = scmp.eq.s32.totalorder %s14, 1
      %p45 = por %p43, %p44
      %p46 = scmp.ne.s32.totalorder %s38, %s41
      %p47 = scmp.eq.s32.totalorder %s14, 0
      %p48 = por %p46, %p47
      %p49 = scmp.ne.s32.totalorder %s38, %s41
      %p50 = scmp.eq.s32.totalorder %s19, 1
      %p51 = por %p49, %p50
      %p52 = scmp.ne.s32.totalorder %s41, %s42
      %p53 = scmp.eq.s32.totalorder %s19, 0
      %p54 = por %p52, %p53
      %p55 = scmp.ne.s32.totalorder %s41, %s42
      %p56 = scmp.eq.s32.totalorder %s20, 1
      %p57 = por %p55, %p56
      %p59 = scmp.ne.s32.totalorder %s42, %s58
      %p60 = scmp.eq.s32.totalorder %s20, 0
      %p61 = por %p59, %p60
      %s63 = sadd.s32 %s62, 1
      %p66 = scmp.eq.s32.totalorder %s14, 1
      %p67 = scmp.ne.s32.totalorder %s62, %s64
      %p68 = scmp.eq.s32.totalorder %s14, 0
      %p69 = por %p67, %p68
      %p70 = scmp.ne.s32.totalorder %s62, %s64
      %p71 = scmp.eq.s32.totalorder %s19, 1
      %p72 = por %p70, %p71
      %p73 = scmp.ne.s32.totalorder %s64, %s65
      %p74 = scmp.eq.s32.totalorder %s19, 0
      %p75 = por %p73, %p74
      %p76 = scmp.ne.s32.totalorder %s64, %s65
      %p77 = scmp.eq.s32.totalorder %s20, 1
      %p78 = por %p76, %p77
      %p80 = scmp.ne.s32.totalorder %s65, %s79
      %p81 = scmp.eq.s32.totalorder %s20, 0
      %p82 = por %p80, %p81
      %s84 = sadd.s32 %s83, 1
      %p87 = scmp.eq.s32.totalorder %s14, 1
      %p88 = scmp.ne.s32.totalorder %s83, %s85
      %p89 = scmp.eq.s32.totalorder %s14, 0
      %p90 = por %p88, %p89
      %p91 = scmp.ne.s32.totalorder %s83, %s85
      %p92 = scmp.eq.s32.totalorder %s19, 1
      %p93 = por %p91, %p92
      %p94 = scmp.ne.s32.totalorder %s85, %s86
      %p95 = scmp.eq.s32.totalorder %s19, 0
      %p96 = por %p94, %p95
      %p97 = scmp.ne.s32.totalorder %s85, %s86
      %p98 = scmp.eq.s32.totalorder %s20, 1
      %p99 = por %p97, %p98
      %p101 = scmp.ne.s32.totalorder %s86, %s100
      %p102 = scmp.eq.s32.totalorder %s20, 0
      %p103 = por %p101, %p102
      %s105 = sadd.s32 %s104, 1
      %p108 = scmp.eq.s32.totalorder %s14, 1
      %p109 = scmp.ne.s32.totalorder %s104, %s106
      %p110 = scmp.eq.s32.totalorder %s14, 0
      %p111 = por %p109, %p110
      %p112 = scmp.ne.s32.totalorder %s104, %s106
      %p113 = scmp.eq.s32.totalorder %s19, 1
      %p114 = por %p112, %p113
      %p115 = scmp.ne.s32.totalorder %s106, %s107
      %p116 = scmp.eq.s32.totalorder %s19, 0
      %p117 = por %p115, %p116
      %p118 = scmp.ne.s32.totalorder %s106, %s107
      %p119 = scmp.eq.s32.totalorder %s20, 1
      %p120 = por %p118, %p119
      %p122 = scmp.ne.s32.totalorder %s107, %s121
      %p123 = scmp.eq.s32.totalorder %s20, 0
      %p124 = por %p122, %p123
      %s126 = sadd.s32 %s125, 1
      %p129 = scmp.eq.s32.totalorder %s14, 1
      %p130 = scmp.ne.s32.totalorder %s125, %s127
      %p131 = scmp.eq.s32.totalorder %s14, 0
      %p132 = por %p130, %p131
      %p133 = scmp.ne.s32.totalorder %s125, %s127
      %p134 = scmp.eq.s32.totalorder %s19, 1
      %p135 = por %p133, %p134
      %p136 = scmp.ne.s32.totalorder %s127, %s128
      %p137 = scmp.eq.s32.totalorder %s19, 0
      %p138 = por %p136, %p137
      %p139 = scmp.ne.s32.totalorder %s127, %s128
      %p140 = scmp.eq.s32.totalorder %s20, 1
      %p141 = por %p139, %p140
      %p143 = scmp.ne.s32.totalorder %s128, %s142
      %p144 = scmp.eq.s32.totalorder %s20, 0
      %p145 = por %p143, %p144
      %s146 = ssub.s32 %s21, %s33
      %s147 = ssub.s32 %s22, %s29
      %s148 = sor.u32 %s146, %s147
      %p149 = scmp.eq.s32.totalorder %s148, 0
      %s151 = sadd.s32 %s150, 1
      %s152 = scalar_select %p149, %s150, %s151
      %p155 = pneg %p149
      %p156 = scmp.eq.s32.totalorder %s14, 1
      %p157 = por %p155, %p156
      %p158 = scmp.ne.s32.totalorder %s150, %s153
      %p159 = scmp.eq.s32.totalorder %s14, 0
      %p160 = por %p158, %p159
      %p161 = scmp.ne.s32.totalorder %s150, %s153
      %p162 = scmp.eq.s32.totalorder %s19, 1
      %p163 = por %p161, %p162
      %p164 = scmp.ne.s32.totalorder %s153, %s154
      %p165 = scmp.eq.s32.totalorder %s19, 0
      %p166 = por %p164, %p165
      %p167 = scmp.ne.s32.totalorder %s153, %s154
      %p168 = scmp.eq.s32.totalorder %s20, 1
      %p169 = por %p167, %p168
      %p171 = scmp.ne.s32.totalorder %s154, %s170
      %p172 = scmp.eq.s32.totalorder %s20, 0
      %p173 = por %p171, %p172
      %p174 = scmp.le.s32.totalorder 1, %s14
      %p175 = scmp.lt.s32.totalorder %s14, 3
      %p176 = pnand %p174, %p175
      %p177 = pneg %p176
      // Predicated region
      $region9: #{encoder_block_forward.5} parent=5 // pred_check
        _
      $region10: #{encoder_block_forward.5} parent=5 // pred_check_branch
        %179 = sbr.rel (%p176) target = $region12
      $region11: #{encoder_block_forward.5} parent=5 // pred_region
        %s180 = ssub.s32 %s14, 1
        // Predicated region
        $region13: #{encoder_block_forward.5} parent=11 // pred_check
          %p181 = pneg %p75
        $region14: #{encoder_block_forward.5} parent=11 // pred_check_branch
          %183 = sbr.rel (%p181) target = $region16
        $region15: #{encoder_block_forward.5} parent=11 // pred_region
          _
        $region16: #{encoder_block_forward.5} parent=11 // pred_fallthru
          _
        // Predicated region
        $region17: #{encoder_block_forward.5} parent=11 // pred_check
          %p184 = pneg %p96
        $region18: #{encoder_block_forward.5} parent=11 // pred_check_branch
          %186 = sbr.rel (%p184) target = $region20
        $region19: #{encoder_block_forward.5} parent=11 // pred_region
          _
        $region20: #{encoder_block_forward.5} parent=11 // pred_fallthru
          _
        // Predicated region
        $region21: #{encoder_block_forward.5} parent=11 // pred_check
          %p187 = pneg %p117
        $region22: #{encoder_block_forward.5} parent=11 // pred_check_branch
          %189 = sbr.rel (%p187) target = $region24
        $region23: #{encoder_block_forward.5} parent=11 // pred_region
          _
        $region24: #{encoder_block_forward.5} parent=11 // pred_fallthru
          _
        // Predicated region
        $region25: #{encoder_block_forward.5} parent=11 // pred_check
          %p190 = pneg %p138
        $region26: #{encoder_block_forward.5} parent=11 // pred_check_branch
          %192 = sbr.rel (%p190) target = $region28
        $region27: #{encoder_block_forward.5} parent=11 // pred_region
          _
        $region28: #{encoder_block_forward.5} parent=11 // pred_fallthru
          _
      $region12: #{encoder_block_forward.5} parent=5 // pred_fallthru
        _
      %p193 = scmp.lt.s32.totalorder %s14, 2
      // Predicated region
      $region29: #{encoder_block_forward.5} parent=5 // pred_check
        %p194 = pneg %p193
      $region30: #{encoder_block_forward.5} parent=5 // pred_check_branch
        %196 = sbr.rel (%p194) target = $region32
      $region31: #{encoder_block_forward.5} parent=5 // pred_region
        // Predicated region
        $region33: #{encoder_block_forward.5} parent=31 // pred_check
          %p197 = pneg %p48
        $region34: #{encoder_block_forward.5} parent=31 // pred_check_branch
          %199 = sbr.rel (%p197) target = $region36
        $region35: #{encoder_block_forward.5} parent=31 // pred_region
          %s200 = smul.u32 2, %s22
          %p201 = scmp.lt.s32.totalorder %s21, 1
          %s202 = scalar_select %p201, %s21, 1
          %p203 = scmp.lt.s32.totalorder %s200, 1
          %s204 = scalar_select %p203, %s200, 1
          %s205 = smul.addr %s202, 2
          %s206 = sadd.s32 %s204, %s205
          %s207 = smul.addr %s206, 8
          %s208 = scalar_lea.vmem %s0, %s207
          %s209 = smul.u32 2, %s22
        $region36: #{encoder_block_forward.5} parent=31 // pred_fallthru
          _
      $region32: #{encoder_block_forward.5} parent=5 // pred_fallthru
        _
      %p210 = scmp.le.s32.totalorder 1, %s14
      %p211 = scmp.lt.s32.totalorder %s14, 3
      %p212 = pnand %p210, %p211
      %p213 = pneg %p212
      // Predicated region
      $region37: #{encoder_block_forward.5} parent=5 // pred_check
        _
      $region38: #{encoder_block_forward.5} parent=5 // pred_check_branch
        %215 = sbr.rel (%p212) target = $region40
      $region39: #{encoder_block_forward.5} parent=5 // pred_region
        %s216 = ssub.s32 %s14, 1
        %s217 = smul.u32 2, %s24
        %p218 = scmp.lt.s32.totalorder %s23, 1
        %s219 = scalar_select %p218, %s23, 1
        %p220 = scmp.lt.s32.totalorder %s217, 1
        %s221 = scalar_select %p220, %s217, 1
        %s222 = smul.addr %s219, 2
        %s223 = sadd.s32 %s221, %s222
        %s224 = smul.addr %s223, 8
        %s225 = scalar_lea.vmem %s0, %s224
        %p226 = pneg %p54
        %p227 = pneg %p51
        %p228 = pneg %p75
        %p229 = pneg %p72
        %p230 = pneg %p96
        %p231 = pneg %p93
        %p232 = pneg %p117
        %p233 = pneg %p114
        %p234 = pneg %p138
        %p235 = pneg %p135
        %p236 = pneg %p166
        %p237 = pneg %p163
        %s238 = sand.u32 %s153, 1
        %s239 = scalar_lea.sflag [#allocation3], %s238
        %s240 = sand.u32 %s153, 1
        %s241 = smul.addr %s240, 16
        %s242 = scalar_lea.vmem [#allocation2], %s241
        %s243 = smul.u32 2, %s24
        %p244 = scmp.lt.s32.totalorder %s23, 1
        %s245 = scalar_select %p244, %s23, 1
        %p246 = scmp.lt.s32.totalorder %s243, 1
        %s247 = scalar_select %p246, %s243, 1
        %s248 = smul.addr %s245, 2
        %s249 = sadd.s32 %s247, %s248
        %s250 = smul.addr %s249, 8
        %s251 = scalar_lea.vmem %s0, %s250
        %s252 = smul.u32 2, %s24
        %s253 = smul.u32 2, %s24
        %v255 = vld [vmem:[%s251] sm:$0xff]
        %v256 = vld [vmem:[%s251 + $0x8] sm:$0xff]
        %v257 = vpack.c.bf16 %v256, %v255
        %v258 = vld [vmem:[%s1] sm:$0xff]
        %v259 = vld [vmem:[%s1 + $0x8] sm:$0xff]
        %v260 = vld [vmem:[%s1 + $0x10] sm:$0xff]
        %v261 = vld [vmem:[%s1 + $0x18] sm:$0xff]
        %v262 = vpack.c.bf16 %v259, %v258
        %v263 = vpack.c.bf16 %v261, %v260
        %v264 = vld [vmem:[%s2] sm:$0x1]
        %v266 = vperm.slane %v264, 0
        %vm268 = vcmask 261120
        %v270 = vsel %vm268, %v257, 0
        %272 = vmatpush.bf16.msra.mxu0 0
        %273 = vmatpush.bf16.msra.mxu0 0
        %274 = vmatpush.bf16.msra.mxu0 0
        %275 = vmatpush.bf16.msra.mxu0 0
        %276 = vmatpush.bf16.msra.mxu0 0
        %277 = vmatpush.bf16.msra.mxu0 0
        %278 = vmatpush.bf16.msra.mxu0 %v263
        %279 = vmatpush.bf16.msra.mxu0 %v262
        %280 = vmatmul.bf16.gmra.mxu0 %v270
        %v281 = vpop.f32.mrf.mxu0
        %v282 = vadd.f32 %v266, %v281
        %v283 = vpop.f32.mrf.mxu0
        %v284 = vadd.f32 %v266, %v283
        %285 = vdwg.mxu0
        %v286 = vmax.f32 %v282, 0.0
        %v287 = vmax.f32 %v284, 0.0
        %v288 = vpack.c.bf16 %v287, %v286
        %v289 = vld [vmem:[%s3] sm:$0xff]
        %v290 = vld [vmem:[%s3 + $0x8] sm:$0xff]
        %v291 = vld [vmem:[%s3 + $0x10] sm:$0xff]
        %v292 = vld [vmem:[%s3 + $0x18] sm:$0xff]
        %v293 = vld [vmem:[%s3 + $0x20] sm:$0xff]
        %v294 = vld [vmem:[%s3 + $0x28] sm:$0xff]
        %v295 = vld [vmem:[%s3 + $0x30] sm:$0xff]
        %v296 = vld [vmem:[%s3 + $0x38] sm:$0xff]
        %v297 = vld [vmem:[%s3 + $0x40] sm:$0xff]
        %v298 = vld [vmem:[%s3 + $0x48] sm:$0xff]
        %v299 = vld [vmem:[%s3 + $0x50] sm:$0xff]
        %v300 = vld [vmem:[%s3 + $0x58] sm:$0xff]
        %v301 = vld [vmem:[%s3 + $0x60] sm:$0xff]
        %v302 = vld [vmem:[%s3 + $0x68] sm:$0xff]
        %v303 = vld [vmem:[%s3 + $0x70] sm:$0xff]
        %v304 = vld [vmem:[%s3 + $0x78] sm:$0xff]
        %v305 = vpack.c.bf16 %v290, %v289
        %v306 = vpack.c.bf16 %v292, %v291
        %v307 = vpack.c.bf16 %v294, %v293
        %v308 = vpack.c.bf16 %v296, %v295
        %v309 = vpack.c.bf16 %v298, %v297
        %v310 = vpack.c.bf16 %v300, %v299
        %v311 = vpack.c.bf16 %v302, %v301
        %v312 = vpack.c.bf16 %v304, %v303
        %v313 = vld [vmem:[%s4] sm:$0x1]
        %v315 = vperm.slane %v313, 0
        %317 = vmatpush.bf16.msra.mxu0 %v312
        %318 = vmatpush.bf16.msra.mxu0 %v311
        %319 = vmatpush.bf16.msra.mxu0 %v310
        %320 = vmatpush.bf16.msra.mxu0 %v309
        %321 = vmatpush.bf16.msra.mxu0 %v308
        %322 = vmatpush.bf16.msra.mxu0 %v307
        %323 = vmatpush.bf16.msra.mxu0 %v306
        %324 = vmatpush.bf16.msra.mxu0 %v305
        %325 = vmatmul.bf16.gmra.mxu0 %v288
        %v326 = vpop.f32.mrf.mxu0
        %v327 = vadd.f32 %v315, %v326
        %v328 = vpop.f32.mrf.mxu0
        %v329 = vadd.f32 %v315, %v328
        %330 = vdwg.mxu0
        %v331 = vmax.f32 %v327, 0.0
        %v332 = vmax.f32 %v329, 0.0
        %v333 = vadd.f32 %v331, %v255
        %v334 = vadd.f32 %v332, %v256
        %335 = vst.msk [vmem:[%s242] sm:$0xff] %vm268, %v333
        %336 = vst.msk [vmem:[%s242 + $0x8] sm:$0xff] %vm268, %v334
        %s337 = sand.u32 %s153, 1
        %s338 = scalar_lea.sflag [#allocation3], %s337
        %s339 = sand.u32 %s153, 1
        %s340 = smul.addr %s339, 16
        %s341 = scalar_lea.vmem [#allocation2], %s340
        // Predicated region
        $region41: #{encoder_block_forward.5} parent=39 // pred_check
          %p342 = pneg %p163
        $region42: #{encoder_block_forward.5} parent=39 // pred_check_branch
          %344 = sbr.rel (%p342) target = $region44
        $region43: #{encoder_block_forward.5} parent=39 // pred_region
          %s345 = smul.u32 2, %s24
          %347 = vsyncadd %s338, 0
          %s348 = smul.addr %s23, 2
          %s349 = sadd.s32 %s345, %s348
          %s350 = smul.addr %s349, 8
          %s351 = scalar_lea.hbm %s5, %s350
          %s352 = sshll.u32 %s341, 4
          %s353 = int_to_ptr.vmem [resolvable:$true] %s352
          %s354 = sshll.u32 %s351, 4
          %s355 = int_to_ptr.hbm [resolvable:$true] %s354
          %360 = dma.vmem_to_hbm [thread:$0]  %s353, 256, %s355, %s338, 128, 128, 8
        $region44: #{encoder_block_forward.5} parent=39 // pred_fallthru
          _
      $region40: #{encoder_block_forward.5} parent=5 // pred_fallthru
        _
      %p361 = scmp.le.s32.totalorder 2, %s14
      // Predicated region
      $region45: #{encoder_block_forward.5} parent=5 // pred_check
        %p362 = pneg %p361
      $region46: #{encoder_block_forward.5} parent=5 // pred_check_branch
        %364 = sbr.rel (%p362) target = $region48
      $region47: #{encoder_block_forward.5} parent=5 // pred_region
        %s365 = ssub.s32 %s14, 2
        // Predicated region
        $region49: #{encoder_block_forward.5} parent=47 // pred_check
          %p366 = pneg %p169
        $region50: #{encoder_block_forward.5} parent=47 // pred_check_branch
          %368 = sbr.rel (%p366) target = $region52
        $region51: #{encoder_block_forward.5} parent=47 // pred_region
          %s369 = sand.u32 %s154, 1
          %s370 = scalar_lea.sflag [#allocation3], %s369
          %s371 = sand.u32 %s154, 1
          %s372 = smul.addr %s371, 16
          %s373 = scalar_lea.vmem [#allocation2], %s372
          %375 = dma.done %s370, 256
        $region52: #{encoder_block_forward.5} parent=47 // pred_fallthru
          _
      $region48: #{encoder_block_forward.5} parent=5 // pred_fallthru
        _
    $region6: #{encoder_block_forward.5} parent=1 // loop_footer
      %s18 = sadd.s32 1, %s14
    $region7: #{encoder_block_forward.5} parent=1 // loop_footer_branch
      %13 = sbr.rel target = $region3
    $region8: #{encoder_block_forward.5} parent=1 // loop_exit
      _
    %376 = vsyncpa [#allocation3], 1
    %s377 = scalar_lea.sflag [#allocation3], 1
    %378 = vsyncpa %s377, 1

// kernel: encoder_block_forward.3
$region0: #{encoder_block_forward.3}
  #allocation0 [shape = 'u32[]', space=smem, size = 0x4, offset = 0x4, fixed_abs, tag = 'smem constant byte address 0x4 - core index']
  #allocation1 [shape = 'u32[72,128]{1,0:T(1,128)}', space=vmem, size = 0x9000, scoped, tag = 'internal scratch']
  %s0 = inlined_call_operand.vmem [shape: f32[2,16,32], index: 0, kind: input, shape index: {}]
  %s1 = inlined_call_operand.vmem [shape: f32[2,5,32], index: 1, kind: input, shape index: {}]
  %s2 = inlined_call_operand.vmem [shape: f32[2,1,32], index: 2, kind: input, shape index: {}]
  %s3 = inlined_call_operand.vmem [shape: f32[2,32,32], index: 3, kind: input, shape index: {}]
  %s4 = inlined_call_operand.vmem [shape: f32[2,1,32], index: 4, kind: input, shape index: {}]
  %s5 = inlined_call_operand.vmem [shape: f32[2,16,32], index: 5, kind: output, shape index: {}]
  %s6 = sld [smem:[#allocation0]]
  $region53: #{encoder_block_forward.3} parent=0
    _
  %s8 = ssub.s32 1, %s6
  %s9 = scalar_select 0, %s8, %s6
  loop: start=0, step=1, limit=4
  $region2: #{encoder_block_forward.3} parent=0 // loop_pre_header
    _
  $region3: #{encoder_block_forward.3} parent=0 // loop_header
    %s11 = sphi 0, %s15
    %p12 = scmp.ge.s32.totalorder %s11, 4
    %s21 = sphi 0, %s23
    %s24 = sphi 0, %s21
    %s25 = sphi 0, %s24
    %s41 = sphi 0, %s25
    %s45 = sphi 0, %s45
    %s47 = sphi 0, %s45
    %s48 = sphi 0, %s47
    %s62 = sphi 0, %s48
    %s66 = sphi 0, %s66
    %s68 = sphi 0, %s66
    %s69 = sphi 0, %s68
    %s83 = sphi 0, %s69
    %s87 = sphi 0, %s87
    %s89 = sphi 0, %s87
    %s90 = sphi 0, %s89
    %s104 = sphi 0, %s90
    %s108 = sphi 0, %s108
    %s110 = sphi 0, %s108
    %s111 = sphi 0, %s110
    %s125 = sphi 0, %s111
    %s131 = sphi 0, %s133
    %s134 = sphi 0, %s131
    %s135 = sphi 0, %s134
    %s151 = sphi 0, %s135
  $region4: #{encoder_block_forward.3} parent=0 // loop_header_branch
    %14 = sbr.rel (%p12) target = $region8
  $region5: #{encoder_block_forward.3} parent=0 // loop_body
    %s16 = ssub.s32 %s11, 1
    %s17 = ssub.s32 %s11, 2
    %s18 = sadd.s32 %s11, 1
    %s19 = ssub.s32 %s11, %s18
    %p20 = scmp.eq.s32.totalorder %s19, 0
    %s22 = sadd.s32 %s21, 1
    %s23 = scalar_select %p20, %s21, %s22
    %p26 = pneg %p20
    %p27 = scmp.eq.s32.totalorder %s11, 1
    %p28 = por %p26, %p27
    %p29 = scmp.ne.s32.totalorder %s21, %s24
    %p30 = scmp.eq.s32.totalorder %s11, 0
    %p31 = por %p29, %p30
    %p32 = scmp.ne.s32.totalorder %s21, %s24
    %p33 = scmp.eq.s32.totalorder %s16, 1
    %p34 = por %p32, %p33
    %p35 = scmp.ne.s32.totalorder %s24, %s25
    %p36 = scmp.eq.s32.totalorder %s16, 0
    %p37 = por %p35, %p36
    %p38 = scmp.ne.s32.totalorder %s24, %s25
    %p39 = scmp.eq.s32.totalorder %s17, 1
    %p40 = por %p38, %p39
    %p42 = scmp.ne.s32.totalorder %s25, %s41
    %p43 = scmp.eq.s32.totalorder %s17, 0
    %p44 = por %p42, %p43
    %s46 = sadd.s32 %s45, 1
    %p49 = scmp.eq.s32.totalorder %s11, 1
    %p50 = scmp.ne.s32.totalorder %s45, %s47
    %p51 = scmp.eq.s32.totalorder %s11, 0
    %p52 = por %p50, %p51
    %p53 = scmp.ne.s32.totalorder %s45, %s47
    %p54 = scmp.eq.s32.totalorder %s16, 1
    %p55 = por %p53, %p54
    %p56 = scmp.ne.s32.totalorder %s47, %s48
    %p57 = scmp.eq.s32.totalorder %s16, 0
    %p58 = por %p56, %p57
    %p59 = scmp.ne.s32.totalorder %s47, %s48
    %p60 = scmp.eq.s32.totalorder %s17, 1
    %p61 = por %p59, %p60
    %p63 = scmp.ne.s32.totalorder %s48, %s62
    %p64 = scmp.eq.s32.totalorder %s17, 0
    %p65 = por %p63, %p64
    %s67 = sadd.s32 %s66, 1
    %p70 = scmp.eq.s32.totalorder %s11, 1
    %p71 = scmp.ne.s32.totalorder %s66, %s68
    %p72 = scmp.eq.s32.totalorder %s11, 0
    %p73 = por %p71, %p72
    %p74 = scmp.ne.s32.totalorder %s66, %s68
    %p75 = scmp.eq.s32.totalorder %s16, 1
    %p76 = por %p74, %p75
    %p77 = scmp.ne.s32.totalorder %s68, %s69
    %p78 = scmp.eq.s32.totalorder %s16, 0
    %p79 = por %p77, %p78
    %p80 = scmp.ne.s32.totalorder %s68, %s69
    %p81 = scmp.eq.s32.totalorder %s17, 1
    %p82 = por %p80, %p81
    %p84 = scmp.ne.s32.totalorder %s69, %s83
    %p85 = scmp.eq.s32.totalorder %s17, 0
    %p86 = por %p84, %p85
    %s88 = sadd.s32 %s87, 1
    %p91 = scmp.eq.s32.totalorder %s11, 1
    %p92 = scmp.ne.s32.totalorder %s87, %s89
    %p93 = scmp.eq.s32.totalorder %s11, 0
    %p94 = por %p92, %p93
    %p95 = scmp.ne.s32.totalorder %s87, %s89
    %p96 = scmp.eq.s32.totalorder %s16, 1
    %p97 = por %p95, %p96
    %p98 = scmp.ne.s32.totalorder %s89, %s90
    %p99 = scmp.eq.s32.totalorder %s16, 0
    %p100 = por %p98, %p99
    %p101 = scmp.ne.s32.totalorder %s89, %s90
    %p102 = scmp.eq.s32.totalorder %s17, 1
    %p103 = por %p101, %p102
    %p105 = scmp.ne.s32.totalorder %s90, %s104
    %p106 = scmp.eq.s32.totalorder %s17, 0
    %p107 = por %p105, %p106
    %s109 = sadd.s32 %s108, 1
    %p112 = scmp.eq.s32.totalorder %s11, 1
    %p113 = scmp.ne.s32.totalorder %s108, %s110
    %p114 = scmp.eq.s32.totalorder %s11, 0
    %p115 = por %p113, %p114
    %p116 = scmp.ne.s32.totalorder %s108, %s110
    %p117 = scmp.eq.s32.totalorder %s16, 1
    %p118 = por %p116, %p117
    %p119 = scmp.ne.s32.totalorder %s110, %s111
    %p120 = scmp.eq.s32.totalorder %s16, 0
    %p121 = por %p119, %p120
    %p122 = scmp.ne.s32.totalorder %s110, %s111
    %p123 = scmp.eq.s32.totalorder %s17, 1
    %p124 = por %p122, %p123
    %p126 = scmp.ne.s32.totalorder %s111, %s125
    %p127 = scmp.eq.s32.totalorder %s17, 0
    %p128 = por %p126, %p127
    %s129 = ssub.s32 %s11, %s18
    %p130 = scmp.eq.s32.totalorder %s129, 0
    %s132 = sadd.s32 %s131, 1
    %s133 = scalar_select %p130, %s131, %s132
    %p136 = pneg %p130
    %p137 = scmp.eq.s32.totalorder %s11, 1
    %p138 = por %p136, %p137
    %p139 = scmp.ne.s32.totalorder %s131, %s134
    %p140 = scmp.eq.s32.totalorder %s11, 0
    %p141 = por %p139, %p140
    %p142 = scmp.ne.s32.totalorder %s131, %s134
    %p143 = scmp.eq.s32.totalorder %s16, 1
    %p144 = por %p142, %p143
    %p145 = scmp.ne.s32.totalorder %s134, %s135
    %p146 = scmp.eq.s32.totalorder %s16, 0
    %p147 = por %p145, %p146
    %p148 = scmp.ne.s32.totalorder %s134, %s135
    %p149 = scmp.eq.s32.totalorder %s17, 1
    %p150 = por %p148, %p149
    %p152 = scmp.ne.s32.totalorder %s135, %s151
    %p153 = scmp.eq.s32.totalorder %s17, 0
    %p154 = por %p152, %p153
    %p155 = scmp.le.s32.totalorder 1, %s11
    %p156 = scmp.lt.s32.totalorder %s11, 3
    %p157 = pnand %p155, %p156
    %p158 = pneg %p157
    // Predicated region
    $region9: #{encoder_block_forward.3} parent=5 // pred_check
      _
    $region10: #{encoder_block_forward.3} parent=5 // pred_check_branch
      %160 = sbr.rel (%p157) target = $region12
    $region11: #{encoder_block_forward.3} parent=5 // pred_region
      %s161 = ssub.s32 %s11, 1
      // Predicated region
      $region13: #{encoder_block_forward.3} parent=11 // pred_check
        %p162 = pneg %p58
      $region14: #{encoder_block_forward.3} parent=11 // pred_check_branch
        %164 = sbr.rel (%p162) target = $region16
      $region15: #{encoder_block_forward.3} parent=11 // pred_region
        _
      $region16: #{encoder_block_forward.3} parent=11 // pred_fallthru
        _
      // Predicated region
      $region17: #{encoder_block_forward.3} parent=11 // pred_check
        %p165 = pneg %p79
      $region18: #{encoder_block_forward.3} parent=11 // pred_check_branch
        %167 = sbr.rel (%p165) target = $region20
      $region19: #{encoder_block_forward.3} parent=11 // pred_region
        _
      $region20: #{encoder_block_forward.3} parent=11 // pred_fallthru
        _
      // Predicated region
      $region21: #{encoder_block_forward.3} parent=11 // pred_check
        %p168 = pneg %p100
      $region22: #{encoder_block_forward.3} parent=11 // pred_check_branch
        %170 = sbr.rel (%p168) target = $region24
      $region23: #{encoder_block_forward.3} parent=11 // pred_region
        _
      $region24: #{encoder_block_forward.3} parent=11 // pred_fallthru
        _
      // Predicated region
      $region25: #{encoder_block_forward.3} parent=11 // pred_check
        %p171 = pneg %p121
      $region26: #{encoder_block_forward.3} parent=11 // pred_check_branch
        %173 = sbr.rel (%p171) target = $region28
      $region27: #{encoder_block_forward.3} parent=11 // pred_region
        _
      $region28: #{encoder_block_forward.3} parent=11 // pred_fallthru
        _
    $region12: #{encoder_block_forward.3} parent=5 // pred_fallthru
      _
    %p174 = scmp.lt.s32.totalorder %s11, 2
    // Predicated region
    $region29: #{encoder_block_forward.3} parent=5 // pred_check
      %p175 = pneg %p174
    $region30: #{encoder_block_forward.3} parent=5 // pred_check_branch
      %177 = sbr.rel (%p175) target = $region32
    $region31: #{encoder_block_forward.3} parent=5 // pred_region
      // Predicated region
      $region33: #{encoder_block_forward.3} parent=31 // pred_check
        %p178 = pneg %p31
      $region34: #{encoder_block_forward.3} parent=31 // pred_check_branch
        %180 = sbr.rel (%p178) target = $region36
      $region35: #{encoder_block_forward.3} parent=31 // pred_region
        %p181 = scmp.lt.s32.totalorder %s11, 1
        %s182 = scalar_select %p181, %s11, 1
        %s183 = smul.addr %s182, 2
        %s184 = smul.addr %s183, 8
        %s185 = scalar_lea.vmem %s0, %s184
      $region36: #{encoder_block_forward.3} parent=31 // pred_fallthru
        _
    $region32: #{encoder_block_forward.3} parent=5 // pred_fallthru
      _
    %p186 = scmp.le.s32.totalorder 1, %s11
    %p187 = scmp.lt.s32.totalorder %s11, 3
    %p188 = pnand %p186, %p187
    %p189 = pneg %p188
    // Predicated region
    $region37: #{encoder_block_forward.3} parent=5 // pred_check
      _
    $region38: #{encoder_block_forward.3} parent=5 // pred_check_branch
      %191 = sbr.rel (%p188) target = $region40
    $region39: #{encoder_block_forward.3} parent=5 // pred_region
      %s192 = ssub.s32 %s11, 1
      %p193 = scmp.lt.s32.totalorder %s16, 1
      %s194 = scalar_select %p193, %s16, 1
      %s195 = smul.addr %s194, 2
      %s196 = smul.addr %s195, 8
      %s197 = scalar_lea.vmem %s0, %s196
      %p198 = pneg %p37
      %p199 = pneg %p34
      %p200 = pneg %p58
      %p201 = pneg %p55
      %p202 = pneg %p79
      %p203 = pneg %p76
      %p204 = pneg %p100
      %p205 = pneg %p97
      %p206 = pneg %p121
      %p207 = pneg %p118
      %p208 = pneg %p147
      %p209 = pneg %p144
      %p210 = scmp.lt.s32.totalorder %s16, 1
      %s211 = scalar_select %p210, %s16, 1
      %s212 = smul.addr %s211, 2
      %s213 = smul.addr %s212, 8
      %s214 = scalar_lea.vmem %s5, %s213
      %p215 = scmp.lt.s32.totalorder %s16, 1
      %s216 = scalar_select %p215, %s16, 1
      %s217 = smul.addr %s216, 2
      %s218 = smul.addr %s217, 8
      %s219 = scalar_lea.vmem %s0, %s218
      %p220 = scmp.lt.s32.totalorder %s16, 1
      %s221 = scalar_select %p220, %s16, 1
      %s222 = smul.addr %s221, 2
      %s223 = smul.addr %s222, 8
      %s224 = scalar_lea.vmem %s5, %s223
      %v226 = vld [vmem:[%s219] sm:$0xff]
      %v227 = vld [vmem:[%s219 + $0x8] sm:$0xff]
      %v228 = vld [vmem:[%s1] sm:$0x1f]
      %vm231 = vcmask 1041408
      %v232 = vrot.slane %v226, 6
      %v233 = vrot.slane %v227, 6
      %v234 = vsel %vm231, %v232, %v233
      %v237 = vsel %vm231, 0.0, %v232
      %v238 = vperm.slane %v228, 0
      %v239 = vmul.f32 %v237, %v238
      %v240 = vmul.f32 %v234, %v238
      %v241 = vadd.f32 %v239, 0.0
      %v242 = vadd.f32 %v240, 0.0
      %vm243 = vcmask 1040384
      %v244 = vrot.slane %v226, 7
      %v245 = vrot.slane %v227, 7
      %v246 = vsel %vm243, %v244, %v245
      %v249 = vsel %vm243, 0.0, %v244
      %v250 = vperm.slane %v228, 1
      %v251 = vmul.f32 %v249, %v250
      %v252 = vmul.f32 %v246, %v250
      %v253 = vadd.f32 %v241, %v251
      %v254 = vadd.f32 %v242, %v252
      %v255 = vperm.slane %v228, 2
      %v256 = vmul.f32 %v226, %v255
      %v257 = vmul.f32 %v227, %v255
      %v258 = vadd.f32 %v253, %v256
      %v259 = vadd.f32 %v254, %v257
      %vm260 = vcmask 1046528
      %v261 = vrot.slane %v226, 1
      %v262 = vrot.slane %v227, 1
      %v263 = vsel %vm260, %v261, %v262
      %v266 = vsel %vm260, %v262, 0.0
      %v267 = vperm.slane %v228, 3
      %v268 = vmul.f32 %v263, %v267
      %v269 = vmul.f32 %v266, %v267
      %v270 = vadd.f32 %v258, %v268
      %v271 = vadd.f32 %v259, %v269
      %vm272 = vcmask 1045504
      %v273 = vrot.slane %v226, 2
      %v274 = vrot.slane %v227, 2
      %v275 = vsel %vm272, %v273, %v274
      %v278 = vsel %vm272, %v274, 0.0
      %v279 = vperm.slane %v228, 4
      %v280 = vmul.f32 %v275, %v279
      %v281 = vmul.f32 %v278, %v279
      %v282 = vadd.f32 %v270, %v280
      %v283 = vadd.f32 %v271, %v281
      %v284 = vld [vmem:[%s2] sm:$0x1]
      %v286 = vperm.slane %v284, 0
      %v288 = vadd.f32 %v282, %v286
      %v289 = vadd.f32 %v283, %v286
      %v290 = vpack.c.bf16 %v289, %v288
      %v291 = vld [vmem:[%s3] sm:$0xff]
      %v292 = vld [vmem:[%s3 + $0x8] sm:$0xff]
      %v293 = vld [vmem:[%s3 + $0x10] sm:$0xff]
      %v294 = vld [vmem:[%s3 + $0x18] sm:$0xff]
      %v295 = vpack.c.bf16 %v292, %v291
      %v296 = vpack.c.bf16 %v294, %v293
      %v297 = vld [vmem:[%s4] sm:$0x1]
      %v299 = vperm.slane %v297, 0
      %vm301 = vcmask 261120
      %v303 = vsel %vm301, %v290, 0
      %305 = vmatpush.bf16.msra.mxu0 0
      %306 = vmatpush.bf16.msra.mxu0 0
      %307 = vmatpush.bf16.msra.mxu0 0
      %308 = vmatpush.bf16.msra.mxu0 0
      %309 = vmatpush.bf16.msra.mxu0 0
      %310 = vmatpush.bf16.msra.mxu0 0
      %311 = vmatpush.bf16.msra.mxu0 %v296
      %312 = vmatpush.bf16.msra.mxu0 %v295
      %313 = vmatmul.bf16.gmra.mxu0 %v303
      %v314 = vpop.f32.mrf.mxu0
      %v315 = vadd.f32 %v299, %v314
      %v316 = vpop.f32.mrf.mxu0
      %v317 = vadd.f32 %v299, %v316
      %318 = vdwg.mxu0
      %v319 = vmax.f32 %v315, 0.0
      %v320 = vmax.f32 %v317, 0.0
      %v321 = vadd.f32 %v319, %v226
      %v322 = vadd.f32 %v320, %v227
      %s323 = scalar_lea.vmem %s1, 8
      %v324 = vld [vmem:[%s323] sm:$0x1f]
      %v327 = vrot.slane %v321, 6
      %v328 = vrot.slane %v322, 6
      %v329 = vsel %vm231, %v327, %v328
      %v332 = vsel %vm231, 0.0, %v327
      %v333 = vperm.slane %v324, 0
      %v334 = vmul.f32 %v332, %v333
      %v335 = vmul.f32 %v329, %v333
      %v336 = vadd.f32 %v334, 0.0
      %v337 = vadd.f32 %v335, 0.0
      %v338 = vrot.slane %v321, 7
      %v339 = vrot.slane %v322, 7
      %v340 = vsel %vm243, %v338, %v339
      %v343 = vsel %vm243, 0.0, %v338
      %v344 = vperm.slane %v324, 1
      %v345 = vmul.f32 %v343, %v344
      %v346 = vmul.f32 %v340, %v344
      %v347 = vadd.f32 %v336, %v345
      %v348 = vadd.f32 %v337, %v346
      %v349 = vperm.slane %v324, 2
      %v350 = vmul.f32 %v321, %v349
      %v351 = vmul.f32 %v322, %v349
      %v352 = vadd.f32 %v347, %v350
      %v353 = vadd.f32 %v348, %v351
      %v354 = vrot.slane %v321, 1
      %v355 = vrot.slane %v322, 1
      %v356 = vsel %vm260, %v354, %v355
      %v359 = vsel %vm260, %v355, 0.0
      %v360 = vperm.slane %v324, 3
      %v361 = vmul.f32 %v356, %v360
      %v362 = vmul.f32 %v359, %v360
      %v363 = vadd.f32 %v352, %v361
      %v364 = vadd.f32 %v353, %v362
      %v365 = vrot.slane %v321, 2
      %v366 = vrot.slane %v322, 2
      %v367 = vsel %vm272, %v365, %v366
      %v370 = vsel %vm272, %v366, 0.0
      %v371 = vperm.slane %v324, 4
      %v372 = vmul.f32 %v367, %v371
      %v373 = vmul.f32 %v370, %v371
      %v374 = vadd.f32 %v363, %v372
      %v375 = vadd.f32 %v364, %v373
      %s376 = scalar_lea.vmem %s2, 1
      %v377 = vld [vmem:[%s376] sm:$0x1]
      %v379 = vperm.slane %v377, 0
      %v381 = vadd.f32 %v374, %v379
      %v382 = vadd.f32 %v375, %v379
      %v383 = vpack.c.bf16 %v382, %v381
      %s384 = scalar_lea.vmem %s3, 32
      %v385 = vld [vmem:[%s384] sm:$0xff]
      %v386 = vld [vmem:[%s384 + $0x8] sm:$0xff]
      %v387 = vld [vmem:[%s384 + $0x10] sm:$0xff]
      %v388 = vld [vmem:[%s384 + $0x18] sm:$0xff]
      %v389 = vpack.c.bf16 %v386, %v385
      %v390 = vpack.c.bf16 %v388, %v387
      %s391 = scalar_lea.vmem %s4, 1
      %v392 = vld [vmem:[%s391] sm:$0x1]
      %v394 = vperm.slane %v392, 0
      %v397 = vsel %vm301, %v383, 0
      %399 = vmatpush.bf16.msra.mxu0 0
      %400 = vmatpush.bf16.msra.mxu0 0
      %401 = vmatpush.bf16.msra.mxu0 0
      %402 = vmatpush.bf16.msra.mxu0 0
      %403 = vmatpush.bf16.msra.mxu0 0
      %404 = vmatpush.bf16.msra.mxu0 0
      %405 = vmatpush.bf16.msra.mxu0 %v390
      %406 = vmatpush.bf16.msra.mxu0 %v389
      %407 = vmatmul.bf16.gmra.mxu0 %v397
      %v408 = vpop.f32.mrf.mxu0
      %v409 = vadd.f32 %v394, %v408
      %v410 = vpop.f32.mrf.mxu0
      %v411 = vadd.f32 %v394, %v410
      %412 = vdwg.mxu0
      %v413 = vmax.f32 %v409, 0.0
      %v414 = vmax.f32 %v411, 0.0
      %v415 = vadd.f32 %v413, %v321
      %v416 = vadd.f32 %v414, %v322
      %417 = vst.msk [vmem:[%s224] sm:$0xff] %vm301, %v415
      %418 = vst.msk [vmem:[%s224 + $0x8] sm:$0xff] %vm301, %v416
      %p419 = scmp.lt.s32.totalorder %s16, 1
      %s420 = scalar_select %p419, %s16, 1
      %s421 = smul.addr %s420, 2
      %s422 = smul.addr %s421, 8
      %s423 = scalar_lea.vmem %s5, %s422
      // Predicated region
      $region41: #{encoder_block_forward.3} parent=39 // pred_check
        %p424 = pneg %p144
      $region42: #{encoder_block_forward.3} parent=39 // pred_check_branch
        %426 = sbr.rel (%p424) target = $region44
      $region43: #{encoder_block_forward.3} parent=39 // pred_region
        _
      $region44: #{encoder_block_forward.3} parent=39 // pred_fallthru
        _
    $region40: #{encoder_block_forward.3} parent=5 // pred_fallthru
      _
    %p427 = scmp.le.s32.totalorder 2, %s11
    // Predicated region
    $region45: #{encoder_block_forward.3} parent=5 // pred_check
      %p428 = pneg %p427
    $region46: #{encoder_block_forward.3} parent=5 // pred_check_branch
      %430 = sbr.rel (%p428) target = $region48
    $region47: #{encoder_block_forward.3} parent=5 // pred_region
      %s431 = ssub.s32 %s11, 2
      // Predicated region
      $region49: #{encoder_block_forward.3} parent=47 // pred_check
        %p432 = pneg %p150
      $region50: #{encoder_block_forward.3} parent=47 // pred_check_branch
        %434 = sbr.rel (%p432) target = $region52
      $region51: #{encoder_block_forward.3} parent=47 // pred_region
        %p435 = scmp.lt.s32.totalorder %s17, 1
        %s436 = scalar_select %p435, %s17, 1
        %s437 = smul.addr %s436, 2
        %s438 = smul.addr %s437, 8
        %s439 = scalar_lea.vmem %s5, %s438
      $region52: #{encoder_block_forward.3} parent=47 // pred_fallthru
        _
    $region48: #{encoder_block_forward.3} parent=5 // pred_fallthru
      _
  $region6: #{encoder_block_forward.3} parent=0 // loop_footer
    %s15 = sadd.s32 1, %s11
  $region7: #{encoder_block_forward.3} parent=0 // loop_footer_branch
    %10 = sbr.rel target = $region3
  $region8: #{encoder_block_forward.3} parent=0 // loop_exit
    _

// kernel: encoder_block_forward.4
$region0: #{encoder_block_forward.4}
  #allocation0 [shape = 'u32[]', space=smem, size = 0x4, offset = 0x4, fixed_abs, tag = 'smem constant byte address 0x4 - core index']
  #allocation1 [shape = 'u32[72,128]{1,0:T(1,128)}', space=vmem, size = 0x9000, scoped, tag = 'internal scratch']
  #allocation2 [shape = 'f32[4,16,8]{2,1,0:T(8,128)}', space=vmem, size = 0x8000, scoped, tag = 'scratch operand']
  #allocation3 [shape = 'f32[4,16,8]{2,1,0:T(8,128)}', space=vmem, size = 0x8000, scoped, tag = 'scratch operand']
  %s0 = inlined_call_operand.vmem [shape: f32[2,16,32], index: 0, kind: input, shape index: {}, may-alias: {0,1}]
  %s1 = inlined_call_operand.vmem [shape: f32[2,16,32], index: 1, kind: input, shape index: {}, may-alias: {0,1}]
  %s2 = inlined_call_operand.vmem [shape: f32[2,1,16], index: 2, kind: input, shape index: {}]
  %s3 = inlined_call_operand.vmem [shape: f32[32,32], index: 3, kind: input, shape index: {}]
  %s4 = inlined_call_operand.vmem [shape: f32[1,32], index: 4, kind: input, shape index: {}]
  %s5 = inlined_call_operand.vmem [shape: f32[32,64], index: 5, kind: input, shape index: {}]
  %s6 = inlined_call_operand.vmem [shape: f32[1,64], index: 6, kind: input, shape index: {}]
  %s7 = inlined_call_operand.vmem [shape: f32[32,32], index: 7, kind: input, shape index: {}]
  %s8 = inlined_call_operand.vmem [shape: f32[1,32], index: 8, kind: input, shape index: {}]
  %s9 = inlined_call_operand.vmem [shape: f32[8,9], index: 9, kind: input, shape index: {}]
  %s10 = inlined_call_operand.vmem [shape: f32[9,8], index: 10, kind: input, shape index: {}]
  %s11 = inlined_call_operand.vmem [shape: f32[2,16,32], index: 11, kind: output, shape index: {}]
  %s12 = sld [smem:[#allocation0]]
  $region81: #{encoder_block_forward.4} parent=0
    _
  %s14 = ssub.s32 1, %s12
  %s15 = scalar_select 0, %s14, %s12
  loop: start=0, step=1, limit=4
  $region2: #{encoder_block_forward.4} parent=0 // loop_pre_header
    _
  $region3: #{encoder_block_forward.4} parent=0 // loop_header
    %s17 = sphi 0, %s21
    %p18 = scmp.ge.s32.totalorder %s17, 4
    %s24 = sphi 0, %s36
    %s25 = sphi 0, %s32
    %s26 = sphi 0, %s24
    %s27 = sphi 0, %s25
    %s28 = sphi 0, %s26
    %s29 = sphi 0, %s27
    %s41 = sphi 0, %s43
    %s44 = sphi 0, %s41
    %s45 = sphi 0, %s44
    %s61 = sphi 0, %s45
    %s67 = sphi 0, %s69
    %s70 = sphi 0, %s67
    %s71 = sphi 0, %s70
    %s87 = sphi 0, %s71
    %s93 = sphi 0, %s95
    %s96 = sphi 0, %s93
    %s97 = sphi 0, %s96
    %s113 = sphi 0, %s97
    %s117 = sphi 0, %s117
    %s119 = sphi 0, %s117
    %s120 = sphi 0, %s119
    %s134 = sphi 0, %s120
    %s138 = sphi 0, %s138
    %s140 = sphi 0, %s138
    %s141 = sphi 0, %s140
    %s155 = sphi 0, %s141
    %s159 = sphi 0, %s159
    %s161 = sphi 0, %s159
    %s162 = sphi 0, %s161
    %s176 = sphi 0, %s162
    %s180 = sphi 0, %s180
    %s182 = sphi 0, %s180
    %s183 = sphi 0, %s182
    %s197 = sphi 0, %s183
    %s201 = sphi 0, %s201
    %s203 = sphi 0, %s201
    %s204 = sphi 0, %s203
    %s218 = sphi 0, %s204
    %s222 = sphi 0, %s222
    %s224 = sphi 0, %s222
    %s225 = sphi 0, %s224
    %s239 = sphi 0, %s225
    %s243 = sphi 0, %s243
    %s245 = sphi 0, %s243
    %s246 = sphi 0, %s245
    %s260 = sphi 0, %s246
    %s264 = sphi 0, %s264
    %s266 = sphi 0, %s264
    %s267 = sphi 0, %s266
    %s281 = sphi 0, %s267
    %s289 = sphi 0, %s291
    %s292 = sphi 0, %s289
    %s293 = sphi 0, %s292
    %s309 = sphi 0, %s293
  $region4: #{encoder_block_forward.4} parent=0 // loop_header_branch
    %20 = sbr.rel (%p18) target = $region8
  $region5: #{encoder_block_forward.4} parent=0 // loop_body
    %s22 = ssub.s32 %s17, 1
    %s23 = ssub.s32 %s17, 2
    %s30 = sadd.s32 1, %s25
    %p31 = scmp.ge.s32.totalorder %s30, 1
    %s32 = scalar_select %p31, 0, %s30
    %s33 = sadd.s32 1, %s24
    %s34 = scalar_select %p31, %s33, %s24
    %p35 = scmp.ge.s32.totalorder %s34, 2
    %s36 = scalar_select %p35, 0, %s34
    %s37 = ssub.s32 %s24, %s36
    %s38 = ssub.s32 %s25, %s32
    %s39 = sor.u32 %s37, %s38
    %p40 = scmp.eq.s32.totalorder %s39, 0
    %s42 = sadd.s32 %s41, 1
    %s43 = scalar_select %p40, %s41, %s42
    %p46 = pneg %p40
    %p47 = scmp.eq.s32.totalorder %s17, 1
    %p48 = por %p46, %p47
    %p49 = scmp.ne.s32.totalorder %s41, %s44
    %p50 = scmp.eq.s32.totalorder %s17, 0
    %p51 = por %p49, %p50
    %p52 = scmp.ne.s32.totalorder %s41, %s44
    %p53 = scmp.eq.s32.totalorder %s22, 1
    %p54 = por %p52, %p53
    %p55 = scmp.ne.s32.totalorder %s44, %s45
    %p56 = scmp.eq.s32.totalorder %s22, 0
    %p57 = por %p55, %p56
    %p58 = scmp.ne.s32.totalorder %s44, %s45
    %p59 = scmp.eq.s32.totalorder %s23, 1
    %p60 = por %p58, %p59
    %p62 = scmp.ne.s32.totalorder %s45, %s61
    %p63 = scmp.eq.s32.totalorder %s23, 0
    %p64 = por %p62, %p63
    %s65 = ssub.s32 %s24, %s36
    %p66 = scmp.eq.s32.totalorder %s65, 0
    %s68 = sadd.s32 %s67, 1
    %s69 = scalar_select %p66, %s67, %s68
    %p72 = pneg %p66
    %p73 = scmp.eq.s32.totalorder %s17, 1
    %p74 = por %p72, %p73
    %p75 = scmp.ne.s32.totalorder %s67, %s70
    %p76 = scmp.eq.s32.totalorder %s17, 0
    %p77 = por %p75, %p76
    %p78 = scmp.ne.s32.totalorder %s67, %s70
    %p79 = scmp.eq.s32.totalorder %s22, 1
    %p80 = por %p78, %p79
    %p81 = scmp.ne.s32.totalorder %s70, %s71
    %p82 = scmp.eq.s32.totalorder %s22, 0
    %p83 = por %p81, %p82
    %p84 = scmp.ne.s32.totalorder %s70, %s71
    %p85 = scmp.eq.s32.totalorder %s23, 1
    %p86 = por %p84, %p85
    %p88 = scmp.ne.s32.totalorder %s71, %s87
    %p89 = scmp.eq.s32.totalorder %s23, 0
    %p90 = por %p88, %p89
    %s91 = ssub.s32 %s24, %s36
    %p92 = scmp.eq.s32.totalorder %s91, 0
    %s94 = sadd.s32 %s93, 1
    %s95 = scalar_select %p92, %s93, %s94
    %p98 = pneg %p92
    %p99 = scmp.eq.s32.totalorder %s17, 1
    %p100 = por %p98, %p99
    %p101 = scmp.ne.s32.totalorder %s93, %s96
    %p102 = scmp.eq.s32.totalorder %s17, 0
    %p103 = por %p101, %p102
    %p104 = scmp.ne.s32.totalorder %s93, %s96
    %p105 = scmp.eq.s32.totalorder %s22, 1
    %p106 = por %p104, %p105
    %p107 = scmp.ne.s32.totalorder %s96, %s97
    %p108 = scmp.eq.s32.totalorder %s22, 0
    %p109 = por %p107, %p108
    %p110 = scmp.ne.s32.totalorder %s96, %s97
    %p111 = scmp.eq.s32.totalorder %s23, 1
    %p112 = por %p110, %p111
    %p114 = scmp.ne.s32.totalorder %s97, %s113
    %p115 = scmp.eq.s32.totalorder %s23, 0
    %p116 = por %p114, %p115
    %s118 = sadd.s32 %s117, 1
    %p121 = scmp.eq.s32.totalorder %s17, 1
    %p122 = scmp.ne.s32.totalorder %s117, %s119
    %p123 = scmp.eq.s32.totalorder %s17, 0
    %p124 = por %p122, %p123
    %p125 = scmp.ne.s32.totalorder %s117, %s119
    %p126 = scmp.eq.s32.totalorder %s22, 1
    %p127 = por %p125, %p126
    %p128 = scmp.ne.s32.totalorder %s119, %s120
    %p129 = scmp.eq.s32.totalorder %s22, 0
    %p130 = por %p128, %p129
    %p131 = scmp.ne.s32.totalorder %s119, %s120
    %p132 = scmp.eq.s32.totalorder %s23, 1
    %p133 = por %p131, %p132
    %p135 = scmp.ne.s32.totalorder %s120, %s134
    %p136 = scmp.eq.s32.totalorder %s23, 0
    %p137 = por %p135, %p136
    %s139 = sadd.s32 %s138, 1
    %p142 = scmp.eq.s32.totalorder %s17, 1
    %p143 = scmp.ne.s32.totalorder %s138, %s140
    %p144 = scmp.eq.s32.totalorder %s17, 0
    %p145 = por %p143, %p144
    %p146 = scmp.ne.s32.totalorder %s138, %s140
    %p147 = scmp.eq.s32.totalorder %s22, 1
    %p148 = por %p146, %p147
    %p149 = scmp.ne.s32.totalorder %s140, %s141
    %p150 = scmp.eq.s32.totalorder %s22, 0
    %p151 = por %p149, %p150
    %p152 = scmp.ne.s32.totalorder %s140, %s141
    %p153 = scmp.eq.s32.totalorder %s23, 1
    %p154 = por %p152, %p153
    %p156 = scmp.ne.s32.totalorder %s141, %s155
    %p157 = scmp.eq.s32.totalorder %s23, 0
    %p158 = por %p156, %p157
    %s160 = sadd.s32 %s159, 1
    %p163 = scmp.eq.s32.totalorder %s17, 1
    %p164 = scmp.ne.s32.totalorder %s159, %s161
    %p165 = scmp.eq.s32.totalorder %s17, 0
    %p166 = por %p164, %p165
    %p167 = scmp.ne.s32.totalorder %s159, %s161
    %p168 = scmp.eq.s32.totalorder %s22, 1
    %p169 = por %p167, %p168
    %p170 = scmp.ne.s32.totalorder %s161, %s162
    %p171 = scmp.eq.s32.totalorder %s22, 0
    %p172 = por %p170, %p171
    %p173 = scmp.ne.s32.totalorder %s161, %s162
    %p174 = scmp.eq.s32.totalorder %s23, 1
    %p175 = por %p173, %p174
    %p177 = scmp.ne.s32.totalorder %s162, %s176
    %p178 = scmp.eq.s32.totalorder %s23, 0
    %p179 = por %p177, %p178
    %s181 = sadd.s32 %s180, 1
    %p184 = scmp.eq.s32.totalorder %s17, 1
    %p185 = scmp.ne.s32.totalorder %s180, %s182
    %p186 = scmp.eq.s32.totalorder %s17, 0
    %p187 = por %p185, %p186
    %p188 = scmp.ne.s32.totalorder %s180, %s182
    %p189 = scmp.eq.s32.totalorder %s22, 1
    %p190 = por %p188, %p189
    %p191 = scmp.ne.s32.totalorder %s182, %s183
    %p192 = scmp.eq.s32.totalorder %s22, 0
    %p193 = por %p191, %p192
    %p194 = scmp.ne.s32.totalorder %s182, %s183
    %p195 = scmp.eq.s32.totalorder %s23, 1
    %p196 = por %p194, %p195
    %p198 = scmp.ne.s32.totalorder %s183, %s197
    %p199 = scmp.eq.s32.totalorder %s23, 0
    %p200 = por %p198, %p199
    %s202 = sadd.s32 %s201, 1
    %p205 = scmp.eq.s32.totalorder %s17, 1
    %p206 = scmp.ne.s32.totalorder %s201, %s203
    %p207 = scmp.eq.s32.totalorder %s17, 0
    %p208 = por %p206, %p207
    %p209 = scmp.ne.s32.totalorder %s201, %s203
    %p210 = scmp.eq.s32.totalorder %s22, 1
    %p211 = por %p209, %p210
    %p212 = scmp.ne.s32.totalorder %s203, %s204
    %p213 = scmp.eq.s32.totalorder %s22, 0
    %p214 = por %p212, %p213
    %p215 = scmp.ne.s32.totalorder %s203, %s204
    %p216 = scmp.eq.s32.totalorder %s23, 1
    %p217 = por %p215, %p216
    %p219 = scmp.ne.s32.totalorder %s204, %s218
    %p220 = scmp.eq.s32.totalorder %s23, 0
    %p221 = por %p219, %p220
    %s223 = sadd.s32 %s222, 1
    %p226 = scmp.eq.s32.totalorder %s17, 1
    %p227 = scmp.ne.s32.totalorder %s222, %s224
    %p228 = scmp.eq.s32.totalorder %s17, 0
    %p229 = por %p227, %p228
    %p230 = scmp.ne.s32.totalorder %s222, %s224
    %p231 = scmp.eq.s32.totalorder %s22, 1
    %p232 = por %p230, %p231
    %p233 = scmp.ne.s32.totalorder %s224, %s225
    %p234 = scmp.eq.s32.totalorder %s22, 0
    %p235 = por %p233, %p234
    %p236 = scmp.ne.s32.totalorder %s224, %s225
    %p237 = scmp.eq.s32.totalorder %s23, 1
    %p238 = por %p236, %p237
    %p240 = scmp.ne.s32.totalorder %s225, %s239
    %p241 = scmp.eq.s32.totalorder %s23, 0
    %p242 = por %p240, %p241
    %s244 = sadd.s32 %s243, 1
    %p247 = scmp.eq.s32.totalorder %s17, 1
    %p248 = scmp.ne.s32.totalorder %s243, %s245
    %p249 = scmp.eq.s32.totalorder %s17, 0
    %p250 = por %p248, %p249
    %p251 = scmp.ne.s32.totalorder %s243, %s245
    %p252 = scmp.eq.s32.totalorder %s22, 1
    %p253 = por %p251, %p252
    %p254 = scmp.ne.s32.totalorder %s245, %s246
    %p255 = scmp.eq.s32.totalorder %s22, 0
    %p256 = por %p254, %p255
    %p257 = scmp.ne.s32.totalorder %s245, %s246
    %p258 = scmp.eq.s32.totalorder %s23, 1
    %p259 = por %p257, %p258
    %p261 = scmp.ne.s32.totalorder %s246, %s260
    %p262 = scmp.eq.s32.totalorder %s23, 0
    %p263 = por %p261, %p262
    %s265 = sadd.s32 %s264, 1
    %p268 = scmp.eq.s32.totalorder %s17, 1
    %p269 = scmp.ne.s32.totalorder %s264, %s266
    %p270 = scmp.eq.s32.totalorder %s17, 0
    %p271 = por %p269, %p270
    %p272 = scmp.ne.s32.totalorder %s264, %s266
    %p273 = scmp.eq.s32.totalorder %s22, 1
    %p274 = por %p272, %p273
    %p275 = scmp.ne.s32.totalorder %s266, %s267
    %p276 = scmp.eq.s32.totalorder %s22, 0
    %p277 = por %p275, %p276
    %p278 = scmp.ne.s32.totalorder %s266, %s267
    %p279 = scmp.eq.s32.totalorder %s23, 1
    %p280 = por %p278, %p279
    %p282 = scmp.ne.s32.totalorder %s267, %s281
    %p283 = scmp.eq.s32.totalorder %s23, 0
    %p284 = por %p282, %p283
    %s285 = ssub.s32 %s24, %s36
    %s286 = ssub.s32 %s25, %s32
    %s287 = sor.u32 %s285, %s286
    %p288 = scmp.eq.s32.totalorder %s287, 0
    %s290 = sadd.s32 %s289, 1
    %s291 = scalar_select %p288, %s289, %s290
    %p294 = pneg %p288
    %p295 = scmp.eq.s32.totalorder %s17, 1
    %p296 = por %p294, %p295
    %p297 = scmp.ne.s32.totalorder %s289, %s292
    %p298 = scmp.eq.s32.totalorder %s17, 0
    %p299 = por %p297, %p298
    %p300 = scmp.ne.s32.totalorder %s289, %s292
    %p301 = scmp.eq.s32.totalorder %s22, 1
    %p302 = por %p300, %p301
    %p303 = scmp.ne.s32.totalorder %s292, %s293
    %p304 = scmp.eq.s32.totalorder %s22, 0
    %p305 = por %p303, %p304
    %p306 = scmp.ne.s32.totalorder %s292, %s293
    %p307 = scmp.eq.s32.totalorder %s23, 1
    %p308 = por %p306, %p307
    %p310 = scmp.ne.s32.totalorder %s293, %s309
    %p311 = scmp.eq.s32.totalorder %s23, 0
    %p312 = por %p310, %p311
    %p313 = scmp.le.s32.totalorder 1, %s17
    %p314 = scmp.lt.s32.totalorder %s17, 3
    %p315 = pnand %p313, %p314
    %p316 = pneg %p315
    // Predicated region
    $region9: #{encoder_block_forward.4} parent=5 // pred_check
      _
    $region10: #{encoder_block_forward.4} parent=5 // pred_check_branch
      %318 = sbr.rel (%p315) target = $region12
    $region11: #{encoder_block_forward.4} parent=5 // pred_region
      %s319 = ssub.s32 %s17, 1
      // Predicated region
      $region13: #{encoder_block_forward.4} parent=11 // pred_check
        %p320 = pneg %p130
      $region14: #{encoder_block_forward.4} parent=11 // pred_check_branch
        %322 = sbr.rel (%p320) target = $region16
      $region15: #{encoder_block_forward.4} parent=11 // pred_region
        _
      $region16: #{encoder_block_forward.4} parent=11 // pred_fallthru
        _
      // Predicated region
      $region17: #{encoder_block_forward.4} parent=11 // pred_check
        %p323 = pneg %p151
      $region18: #{encoder_block_forward.4} parent=11 // pred_check_branch
        %325 = sbr.rel (%p323) target = $region20
      $region19: #{encoder_block_forward.4} parent=11 // pred_region
        _
      $region20: #{encoder_block_forward.4} parent=11 // pred_fallthru
        _
      // Predicated region
      $region21: #{encoder_block_forward.4} parent=11 // pred_check
        %p326 = pneg %p172
      $region22: #{encoder_block_forward.4} parent=11 // pred_check_branch
        %328 = sbr.rel (%p326) target = $region24
      $region23: #{encoder_block_forward.4} parent=11 // pred_region
        _
      $region24: #{encoder_block_forward.4} parent=11 // pred_fallthru
        _
      // Predicated region
      $region25: #{encoder_block_forward.4} parent=11 // pred_check
        %p329 = pneg %p193
      $region26: #{encoder_block_forward.4} parent=11 // pred_check_branch
        %331 = sbr.rel (%p329) target = $region28
      $region27: #{encoder_block_forward.4} parent=11 // pred_region
        _
      $region28: #{encoder_block_forward.4} parent=11 // pred_fallthru
        _
      // Predicated region
      $region29: #{encoder_block_forward.4} parent=11 // pred_check
        %p332 = pneg %p214
      $region30: #{encoder_block_forward.4} parent=11 // pred_check_branch
        %334 = sbr.rel (%p332) target = $region32
      $region31: #{encoder_block_forward.4} parent=11 // pred_region
        _
      $region32: #{encoder_block_forward.4} parent=11 // pred_fallthru
        _
      // Predicated region
      $region33: #{encoder_block_forward.4} parent=11 // pred_check
        %p335 = pneg %p235
      $region34: #{encoder_block_forward.4} parent=11 // pred_check_branch
        %337 = sbr.rel (%p335) target = $region36
      $region35: #{encoder_block_forward.4} parent=11 // pred_region
        _
      $region36: #{encoder_block_forward.4} parent=11 // pred_fallthru
        _
      // Predicated region
      $region37: #{encoder_block_forward.4} parent=11 // pred_check
        %p338 = pneg %p256
      $region38: #{encoder_block_forward.4} parent=11 // pred_check_branch
        %340 = sbr.rel (%p338) target = $region40
      $region39: #{encoder_block_forward.4} parent=11 // pred_region
        _
      $region40: #{encoder_block_forward.4} parent=11 // pred_fallthru
        _
      // Predicated region
      $region41: #{encoder_block_forward.4} parent=11 // pred_check
        %p341 = pneg %p277
      $region42: #{encoder_block_forward.4} parent=11 // pred_check_branch
        %343 = sbr.rel (%p341) target = $region44
      $region43: #{encoder_block_forward.4} parent=11 // pred_region
        _
      $region44: #{encoder_block_forward.4} parent=11 // pred_fallthru
        _
    $region12: #{encoder_block_forward.4} parent=5 // pred_fallthru
      _
    %p344 = scmp.lt.s32.totalorder %s17, 2
    // Predicated region
    $region45: #{encoder_block_forward.4} parent=5 // pred_check
      %p345 = pneg %p344
    $region46: #{encoder_block_forward.4} parent=5 // pred_check_branch
      %347 = sbr.rel (%p345) target = $region48
    $region47: #{encoder_block_forward.4} parent=5 // pred_region
      // Predicated region
      $region49: #{encoder_block_forward.4} parent=47 // pred_check
        %p348 = pneg %p51
      $region50: #{encoder_block_forward.4} parent=47 // pred_check_branch
        %350 = sbr.rel (%p348) target = $region52
      $region51: #{encoder_block_forward.4} parent=47 // pred_region
        %s351 = smul.u32 2, %s25
        %p352 = scmp.lt.s32.totalorder %s24, 1
        %s353 = scalar_select %p352, %s24, 1
        %p354 = scmp.lt.s32.totalorder %s351, 1
        %s355 = scalar_select %p354, %s351, 1
        %s356 = smul.addr %s353, 2
        %s357 = sadd.s32 %s355, %s356
        %s358 = smul.addr %s357, 8
        %s359 = scalar_lea.vmem %s0, %s358
        %s360 = smul.u32 2, %s25
      $region52: #{encoder_block_forward.4} parent=47 // pred_fallthru
        _
      // Predicated region
      $region53: #{encoder_block_forward.4} parent=47 // pred_check
        %p361 = pneg %p77
      $region54: #{encoder_block_forward.4} parent=47 // pred_check_branch
        %363 = sbr.rel (%p361) target = $region56
      $region55: #{encoder_block_forward.4} parent=47 // pred_region
        %p364 = scmp.lt.s32.totalorder %s24, 1
        %s365 = scalar_select %p364, %s24, 1
        %s366 = smul.addr %s365, 2
        %s367 = smul.addr %s366, 8
        %s368 = scalar_lea.vmem %s1, %s367
      $region56: #{encoder_block_forward.4} parent=47 // pred_fallthru
        _
      // Predicated region
      $region57: #{encoder_block_forward.4} parent=47 // pred_check
        %p369 = pneg %p103
      $region58: #{encoder_block_forward.4} parent=47 // pred_check_branch
        %371 = sbr.rel (%p369) target = $region60
      $region59: #{encoder_block_forward.4} parent=47 // pred_region
        %p372 = scmp.lt.s32.totalorder %s24, 1
        %s373 = scalar_select %p372, %s24, 1
        %s374 = scalar_lea.vmem %s2, %s373
      $region60: #{encoder_block_forward.4} parent=47 // pred_fallthru
        _
    $region48: #{encoder_block_forward.4} parent=5 // pred_fallthru
      _
    %p375 = scmp.le.s32.totalorder 1, %s17
    %p376 = scmp.lt.s32.totalorder %s17, 3
    %p377 = pnand %p375, %p376
    %p378 = pneg %p377
    // Predicated region
    $region61: #{encoder_block_forward.4} parent=5 // pred_check
      _
    $region62: #{encoder_block_forward.4} parent=5 // pred_check_branch
      %380 = sbr.rel (%p377) target = $region64
    $region63: #{encoder_block_forward.4} parent=5 // pred_region
      %s381 = ssub.s32 %s17, 1
      %s382 = smul.u32 2, %s27
      %p383 = scmp.lt.s32.totalorder %s26, 1
      %s384 = scalar_select %p383, %s26, 1
      %p385 = scmp.lt.s32.totalorder %s382, 1
      %s386 = scalar_select %p385, %s382, 1
      %s387 = smul.addr %s384, 2
      %s388 = sadd.s32 %s386, %s387
      %s389 = smul.addr %s388, 8
      %s390 = scalar_lea.vmem %s0, %s389
      %p391 = pneg %p57
      %p392 = pneg %p54
      %p393 = scmp.lt.s32.totalorder %s26, 1
      %s394 = scalar_select %p393, %s26, 1
      %s395 = smul.addr %s394, 2
      %s396 = smul.addr %s395, 8
      %s397 = scalar_lea.vmem %s1, %s396
      %p398 = pneg %p83
      %p399 = pneg %p80
      %p400 = scmp.lt.s32.totalorder %s26, 1
      %s401 = scalar_select %p400, %s26, 1
      %s402 = scalar_lea.vmem %s2, %s401
      %p403 = pneg %p109
      %p404 = pneg %p106
      %p405 = pneg %p130
      %p406 = pneg %p127
      %p407 = pneg %p151
      %p408 = pneg %p148
      %p409 = pneg %p172
      %p410 = pneg %p169
      %p411 = pneg %p193
      %p412 = pneg %p190
      %p413 = pneg %p214
      %p414 = pneg %p211
      %p415 = pneg %p235
      %p416 = pneg %p232
      %p417 = pneg %p256
      %p418 = pneg %p253
      %p419 = pneg %p277
      %p420 = pneg %p274
      %p421 = pneg %p305
      %p422 = pneg %p302
      %s423 = smul.u32 2, %s27
      %p424 = scmp.lt.s32.totalorder %s26, 1
      %s425 = scalar_select %p424, %s26, 1
      %p426 = scmp.lt.s32.totalorder %s423, 1
      %s427 = scalar_select %p426, %s423, 1
      %s428 = smul.addr %s425, 2
      %s429 = sadd.s32 %s427, %s428
      %s430 = smul.addr %s429, 8
      %s431 = scalar_lea.vmem %s11, %s430
      %s432 = smul.u32 2, %s27
      %p433 = scmp.lt.s32.totalorder %s26, 1
      %s434 = scalar_select %p433, %s26, 1
      %p435 = scmp.lt.s32.totalorder %s432, 1
      %s436 = scalar_select %p435, %s432, 1
      %s437 = smul.addr %s434, 2
      %s438 = sadd.s32 %s436, %s437
      %s439 = smul.addr %s438, 8
      %s440 = scalar_lea.vmem %s0, %s439
      %s441 = smul.u32 2, %s27
      %p442 = scmp.lt.s32.totalorder %s26, 1
      %s443 = scalar_select %p442, %s26, 1
      %s444 = smul.addr %s443, 2
      %s445 = smul.addr %s444, 8
      %s446 = scalar_lea.vmem %s1, %s445
      %p447 = scmp.lt.s32.totalorder %s26, 1
      %s448 = scalar_select %p447, %s26, 1
      %s449 = scalar_lea.vmem %s2, %s448
      %s450 = smul.u32 2, %s27
      %p451 = scmp.lt.s32.totalorder %s26, 1
      %s452 = scalar_select %p451, %s26, 1
      %p453 = scmp.lt.s32.totalorder %s450, 1
      %s454 = scalar_select %p453, %s450, 1
      %s455 = smul.addr %s452, 2
      %s456 = sadd.s32 %s454, %s455
      %s457 = smul.addr %s456, 8
      %s458 = scalar_lea.vmem %s11, %s457
      %s459 = smul.u32 2, %s27
      %p461 = scmp.eq.s32.totalorder %s27, 0
      // Predicated region
      $region65: #{encoder_block_forward.4} parent=63 // pred_check
        %p462 = pneg %p461
      $region66: #{encoder_block_forward.4} parent=63 // pred_check_branch
        %464 = sbr.rel (%p462) target = $region68
      $region67: #{encoder_block_forward.4} parent=63 // pred_region
        %v465 = vld [vmem:[%s446] sm:$0xff]
        %v466 = vld [vmem:[%s446 + $0x8] sm:$0xff]
        %v467 = vpack.c.bf16 %v466, %v465
        %v468 = vld [vmem:[%s5] sm:$0xff]
        %v469 = vld [vmem:[%s5 + $0x8] sm:$0xff]
        %v470 = vld [vmem:[%s5 + $0x10] sm:$0xff]
        %v471 = vld [vmem:[%s5 + $0x18] sm:$0xff]
        %v472 = vpack.c.bf16 %v469, %v468
        %v473 = vpack.c.bf16 %v471, %v470
        %v474 = vld [vmem:[%s6] sm:$0x1]
        %v476 = vperm.slane %v474, 0
        %vm478 = vcmask 261120
        %v480 = vsel %vm478, %v467, 0
        %482 = vmatpush.bf16.msra.mxu0 0
        %483 = vmatpush.bf16.msra.mxu0 0
        %484 = vmatpush.bf16.msra.mxu0 0
        %485 = vmatpush.bf16.msra.mxu0 0
        %486 = vmatpush.bf16.msra.mxu0 0
        %487 = vmatpush.bf16.msra.mxu0 0
        %488 = vmatpush.bf16.msra.mxu0 %v473
        %489 = vmatpush.bf16.msra.mxu0 %v472
        %490 = vmatmul.bf16.gmra.mxu0 %v480
        %v491 = vpop.f32.mrf.mxu0
        %v492 = vadd.f32 %v476, %v491
        %v493 = vpop.f32.mrf.mxu0
        %v494 = vadd.f32 %v476, %v493
        %495 = vdwg.mxu0
        %498 = vrot.lane.b32.xlu0 %v492, 120
        %v499 = vpop.permute.xlu0 %498
        %500 = vrot.lane.b32.xlu0 %v494, 120
        %v501 = vpop.permute.xlu0 %500
        %504 = vrot.lane.b32.xlu0 %v492, 112
        %v505 = vpop.permute.xlu0 %504
        %506 = vrot.lane.b32.xlu0 %v494, 112
        %v507 = vpop.permute.xlu0 %506
        %510 = vrot.lane.b32.xlu0 %v492, 104
        %v511 = vpop.permute.xlu0 %510
        %512 = vrot.lane.b32.xlu0 %v494, 104
        %v513 = vpop.permute.xlu0 %512
        %vm516 = vcmask 64512
        %517 = vst.msk [vmem:[#allocation2] sm:$0xff] %vm516, %v492
        %518 = vst.msk [vmem:[#allocation2 + $0x8] sm:$0xff] %vm516, %v494
        %519 = vst.msk [vmem:[#allocation2 + $0x10] sm:$0xff] %vm516, %v499
        %520 = vst.msk [vmem:[#allocation2 + $0x18] sm:$0xff] %vm516, %v501
        %521 = vst.msk [vmem:[#allocation2 + $0x20] sm:$0xff] %vm516, %v505
        %522 = vst.msk [vmem:[#allocation2 + $0x28] sm:$0xff] %vm516, %v507
        %523 = vst.msk [vmem:[#allocation2 + $0x30] sm:$0xff] %vm516, %v511
        %524 = vst.msk [vmem:[#allocation2 + $0x38] sm:$0xff] %vm516, %v513
        %525 = vrot.lane.b32.xlu0 %v492, 96
        %v526 = vpop.permute.xlu0 %525
        %527 = vrot.lane.b32.xlu0 %v494, 96
        %v528 = vpop.permute.xlu0 %527
        %529 = vrot.lane.b32.xlu0 %v499, 96
        %v530 = vpop.permute.xlu0 %529
        %531 = vrot.lane.b32.xlu0 %v501, 96
        %v532 = vpop.permute.xlu0 %531
        %533 = vrot.lane.b32.xlu0 %v505, 96
        %v534 = vpop.permute.xlu0 %533
        %535 = vrot.lane.b32.xlu0 %v507, 96
        %v536 = vpop.permute.xlu0 %535
        %537 = vrot.lane.b32.xlu0 %v511, 96
        %v538 = vpop.permute.xlu0 %537
        %539 = vrot.lane.b32.xlu0 %v513, 96
        %v540 = vpop.permute.xlu0 %539
        %549 = vst.msk [vmem:[#allocation3] sm:$0xff] %vm516, %v526
        %550 = vst.msk [vmem:[#allocation3 + $0x8] sm:$0xff] %vm516, %v528
        %551 = vst.msk [vmem:[#allocation3 + $0x10] sm:$0xff] %vm516, %v530
        %552 = vst.msk [vmem:[#allocation3 + $0x18] sm:$0xff] %vm516, %v532
        %553 = vst.msk [vmem:[#allocation3 + $0x20] sm:$0xff] %vm516, %v534
        %554 = vst.msk [vmem:[#allocation3 + $0x28] sm:$0xff] %vm516, %v536
        %555 = vst.msk [vmem:[#allocation3 + $0x30] sm:$0xff] %vm516, %v538
        %556 = vst.msk [vmem:[#allocation3 + $0x38] sm:$0xff] %vm516, %v540
      $region68: #{encoder_block_forward.4} parent=63 // pred_fallthru
        _
      %v557 = vld [vmem:[%s440] sm:$0xff]
      %v558 = vld [vmem:[%s440 + $0x8] sm:$0xff]
      %v559 = vpack.c.bf16 %v558, %v557
      %v560 = vld [vmem:[%s3] sm:$0xff]
      %v561 = vld [vmem:[%s3 + $0x8] sm:$0xff]
      %v562 = vld [vmem:[%s3 + $0x10] sm:$0xff]
      %v563 = vld [vmem:[%s3 + $0x18] sm:$0xff]
      %v564 = vpack.c.bf16 %v561, %v560
      %v565 = vpack.c.bf16 %v563, %v562
      %v566 = vld [vmem:[%s4] sm:$0x1]
      %v568 = vperm.slane %v566, 0
      %vm570 = vcmask 261120
      %v572 = vsel %vm570, %v559, 0
      %574 = vmatpush.bf16.msra.mxu0 0
      %575 = vmatpush.bf16.msra.mxu0 0
      %576 = vmatpush.bf16.msra.mxu0 0
      %577 = vmatpush.bf16.msra.mxu0 0
      %578 = vmatpush.bf16.msra.mxu0 0
      %579 = vmatpush.bf16.msra.mxu0 0
      %580 = vmatpush.bf16.msra.mxu0 %v565
      %581 = vmatpush.bf16.msra.mxu0 %v564
      %582 = vmatmul.bf16.gmra.mxu0 %v572
      %v583 = vpop.f32.mrf.mxu0
      %v584 = vadd.f32 %v568, %v583
      %v585 = vpop.f32.mrf.mxu0
      %v586 = vadd.f32 %v568, %v585
      %587 = vdwg.mxu0
      %590 = vrot.lane.b32.xlu0 %v584, 120
      %v591 = vpop.permute.xlu0 %590
      %592 = vrot.lane.b32.xlu0 %v586, 120
      %v593 = vpop.permute.xlu0 %592
      %596 = vrot.lane.b32.xlu0 %v584, 112
      %v597 = vpop.permute.xlu0 %596
      %598 = vrot.lane.b32.xlu0 %v586, 112
      %v599 = vpop.permute.xlu0 %598
      %602 = vrot.lane.b32.xlu0 %v584, 104
      %v603 = vpop.permute.xlu0 %602
      %604 = vrot.lane.b32.xlu0 %v586, 104
      %v605 = vpop.permute.xlu0 %604
      %v608 = vpack.c.bf16 %v584, %v584
      %v609 = vpack.c.bf16 %v586, %v586
      %v610 = vpack.c.bf16 %v591, %v591
      %v611 = vpack.c.bf16 %v593, %v593
      %v612 = vpack.c.bf16 %v597, %v597
      %v613 = vpack.c.bf16 %v599, %v599
      %v614 = vpack.c.bf16 %v603, %v603
      %v615 = vpack.c.bf16 %v605, %v605
      %v616 = vld [vmem:[#allocation2] sm:$0xff]
      %v617 = vld [vmem:[#allocation2 + $0x8] sm:$0xff]
      %v618 = vld [vmem:[#allocation2 + $0x10] sm:$0xff]
      %v619 = vld [vmem:[#allocation2 + $0x18] sm:$0xff]
      %v620 = vld [vmem:[#allocation2 + $0x20] sm:$0xff]
      %v621 = vld [vmem:[#allocation2 + $0x28] sm:$0xff]
      %v622 = vld [vmem:[#allocation2 + $0x30] sm:$0xff]
      %v623 = vld [vmem:[#allocation2 + $0x38] sm:$0xff]
      %v624 = vpack.c.bf16 %v616, %v616
      %v625 = vpack.c.bf16 %v617, %v617
      %v626 = vpack.c.bf16 %v618, %v618
      %v627 = vpack.c.bf16 %v619, %v619
      %v628 = vpack.c.bf16 %v620, %v620
      %v629 = vpack.c.bf16 %v621, %v621
      %v630 = vpack.c.bf16 %v622, %v622
      %v631 = vpack.c.bf16 %v623, %v623
      %v632 = vld [vmem:[#allocation3] sm:$0xff]
      %v633 = vld [vmem:[#allocation3 + $0x8] sm:$0xff]
      %v634 = vld [vmem:[#allocation3 + $0x10] sm:$0xff]
      %v635 = vld [vmem:[#allocation3 + $0x18] sm:$0xff]
      %v636 = vld [vmem:[#allocation3 + $0x20] sm:$0xff]
      %v637 = vld [vmem:[#allocation3 + $0x28] sm:$0xff]
      %v638 = vld [vmem:[#allocation3 + $0x30] sm:$0xff]
      %v639 = vld [vmem:[#allocation3 + $0x38] sm:$0xff]
      %v640 = vpack.c.bf16 %v632, %v632
      %v641 = vpack.c.bf16 %v633, %v633
      %v642 = vpack.c.bf16 %v634, %v634
      %v643 = vpack.c.bf16 %v635, %v635
      %v644 = vpack.c.bf16 %v636, %v636
      %v645 = vpack.c.bf16 %v637, %v637
      %v646 = vpack.c.bf16 %v638, %v638
      %v647 = vpack.c.bf16 %v639, %v639
      %v648 = vld [vmem:[%s9] sm:$0xff]
      %v649 = vpack.c.bf16 %v648, %v648
      %v658 = vunpack.c.l.b16 %v608
      %v659 = vunpack.c.l.b16 %v609
      %v660 = vunpack.c.l.b16 %v610
      %v661 = vunpack.c.l.b16 %v611
      %v662 = vunpack.c.l.b16 %v612
      %v663 = vunpack.c.l.b16 %v613
      %v664 = vunpack.c.l.b16 %v614
      %v665 = vunpack.c.l.b16 %v615
      %v666 = vpack.c.b16 %v659, %v658
      %v667 = vpack.c.b16 %v661, %v660
      %v668 = vpack.c.b16 %v663, %v662
      %v669 = vpack.c.b16 %v665, %v664
      %vm670 = vcmask 64512
      %v672 = vsel %vm670, %v666, 0
      %v675 = vsel %vm670, %v667, 0
      %v678 = vsel %vm670, %v668, 0
      %v681 = vsel %vm670, %v669, 0
      %vm683 = vcmask 1043456
      %v685 = vsel %vm683, %v649, 0
      %687 = vmatpush.bf16.msra.mxu0 0
      %688 = vmatpush.bf16.msra.mxu0 0
      %689 = vmatpush.bf16.msra.mxu0 0
      %690 = vmatpush.bf16.msra.mxu0 0
      %691 = vmatpush.bf16.msra.mxu0 0
      %692 = vmatpush.bf16.msra.mxu0 0
      %693 = vmatpush.bf16.msra.mxu0 0
      %694 = vmatpush.bf16.msra.mxu0 %v685
      %695 = vmatmul.bf16.gmra.mxu0 %v672
      %v696 = vpop.f32.mrf.mxu0
      %v697 = vadd.f32 0.0, %v696
      %v698 = vpop.f32.mrf.mxu0
      %v699 = vadd.f32 0.0, %v698
      %700 = vmatmul.bf16.gmra.mxu0 %v675
      %v701 = vpop.f32.mrf.mxu0
      %v702 = vadd.f32 0.0, %v701
      %v703 = vpop.f32.mrf.mxu0
      %v704 = vadd.f32 0.0, %v703
      %705 = vmatmul.bf16.gmra.mxu0 %v678
      %v706 = vpop.f32.mrf.mxu0
      %v707 = vadd.f32 0.0, %v706
      %v708 = vpop.f32.mrf.mxu0
      %v709 = vadd.f32 0.0, %v708
      %710 = vmatmul.bf16.gmra.mxu0 %v681
      %v711 = vpop.f32.mrf.mxu0
      %v712 = vadd.f32 0.0, %v711
      %v713 = vpop.f32.mrf.mxu0
      %v714 = vadd.f32 0.0, %v713
      %715 = vdwg.mxu0
      %v716 = vlaneseq
      %v717 = vshrl.u32 %v716, 7
      %v718 = vadd.s32 %v717, 8
      %s719 = smul.u32 %s27, 16
      %v720 = vstv %s719
      %v721 = vadd.s32 %v717, %v720
      %v722 = vadd.s32 %v718, %v720
      %v723 = vlaneseq
      %v724 = vand.u32 %v723, 127
      %v725 = vsub.s32 %v724, %v721
      %v726 = vsub.s32 %v724, %v722
      %vm727 = vcmp.gt.s32.totalorder %v725, 4294967292
      %v728 = vsel %vm727, %v725, 4294967292
      %vm729 = vcmp.gt.s32.totalorder %v726, 4294967292
      %v730 = vsel %vm729, %v726, 4294967292
      %vm731 = vcmp.lt.s32.totalorder %v728, 4
      %v732 = vsel %vm731, %v728, 4
      %vm733 = vcmp.lt.s32.totalorder %v730, 4
      %v734 = vsel %vm733, %v730, 4
      %v735 = vadd.s32 %v732, 4
      %v736 = vadd.s32 %v734, 4
      %vm737 = vcmp.eq.s32.totalorder %v735, 0
      %vm738 = vcmp.eq.s32.totalorder %v736, 0
      %v739 = vsel %vm737, 1, 0
      %v740 = vsel %vm738, 1, 0
      %v741 = vcvt.s32.f32 %v739
      %v742 = vcvt.s32.f32 %v740
      %744 = vset.pattern.permute.xlu0 0
      %745 = vperm.xlu0 %744, %v697
      %v746 = vpop.permute.xlu0 %745
      %749 = vset.pattern.permute.xlu0 0
      %750 = vperm.xlu0 %749, %v699
      %v751 = vpop.permute.xlu0 %750
      %754 = vset.pattern.permute.xlu0 0
      %755 = vperm.xlu0 %754, %v702
      %v756 = vpop.permute.xlu0 %755
      %759 = vset.pattern.permute.xlu0 0
      %760 = vperm.xlu0 %759, %v704
      %v761 = vpop.permute.xlu0 %760
      %764 = vset.pattern.permute.xlu0 0
      %765 = vperm.xlu0 %764, %v707
      %v766 = vpop.permute.xlu0 %765
      %769 = vset.pattern.permute.xlu0 0
      %770 = vperm.xlu0 %769, %v709
      %v771 = vpop.permute.xlu0 %770
      %774 = vset.pattern.permute.xlu0 0
      %775 = vperm.xlu0 %774, %v712
      %v776 = vpop.permute.xlu0 %775
      %779 = vset.pattern.permute.xlu0 0
      %780 = vperm.xlu0 %779, %v714
      %v781 = vpop.permute.xlu0 %780
      %v783 = vmul.f32 %v741, %v746
      %v784 = vmul.f32 %v742, %v751
      %v785 = vmul.f32 %v741, %v756
      %v786 = vmul.f32 %v742, %v761
      %v787 = vmul.f32 %v741, %v766
      %v788 = vmul.f32 %v742, %v771
      %v789 = vmul.f32 %v741, %v776
      %v790 = vmul.f32 %v742, %v781
      %v791 = vadd.f32 %v783, 0.0
      %v792 = vadd.f32 %v784, 0.0
      %v793 = vadd.f32 %v785, 0.0
      %v794 = vadd.f32 %v786, 0.0
      %v795 = vadd.f32 %v787, 0.0
      %v796 = vadd.f32 %v788, 0.0
      %v797 = vadd.f32 %v789, 0.0
      %v798 = vadd.f32 %v790, 0.0
      %vm799 = vcmp.eq.s32.totalorder %v735, 1
      %vm800 = vcmp.eq.s32.totalorder %v736, 1
      %v801 = vsel %vm799, 1, 0
      %v802 = vsel %vm800, 1, 0
      %v803 = vcvt.s32.f32 %v801
      %v804 = vcvt.s32.f32 %v802
      %805 = vset.pattern.permute.xlu0 1
      %806 = vperm.xlu0 %805, %v697
      %v807 = vpop.permute.xlu0 %806
      %809 = vset.pattern.permute.xlu0 1
      %810 = vperm.xlu0 %809, %v699
      %v811 = vpop.permute.xlu0 %810
      %813 = vset.pattern.permute.xlu0 1
      %814 = vperm.xlu0 %813, %v702
      %v815 = vpop.permute.xlu0 %814
      %817 = vset.pattern.permute.xlu0 1
      %818 = vperm.xlu0 %817, %v704
      %v819 = vpop.permute.xlu0 %818
      %821 = vset.pattern.permute.xlu0 1
      %822 = vperm.xlu0 %821, %v707
      %v823 = vpop.permute.xlu0 %822
      %825 = vset.pattern.permute.xlu0 1
      %826 = vperm.xlu0 %825, %v709
      %v827 = vpop.permute.xlu0 %826
      %829 = vset.pattern.permute.xlu0 1
      %830 = vperm.xlu0 %829, %v712
      %v831 = vpop.permute.xlu0 %830
      %833 = vset.pattern.permute.xlu0 1
      %834 = vperm.xlu0 %833, %v714
      %v835 = vpop.permute.xlu0 %834
      %v837 = vmul.f32 %v803, %v807
      %v838 = vmul.f32 %v804, %v811
      %v839 = vmul.f32 %v803, %v815
      %v840 = vmul.f32 %v804, %v819
      %v841 = vmul.f32 %v803, %v823
      %v842 = vmul.f32 %v804, %v827
      %v843 = vmul.f32 %v803, %v831
      %v844 = vmul.f32 %v804, %v835
      %v845 = vadd.f32 %v791, %v837
      %v846 = vadd.f32 %v792, %v838
      %v847 = vadd.f32 %v793, %v839
      %v848 = vadd.f32 %v794, %v840
      %v849 = vadd.f32 %v795, %v841
      %v850 = vadd.f32 %v796, %v842
      %v851 = vadd.f32 %v797, %v843
      %v852 = vadd.f32 %v798, %v844
      %vm853 = vcmp.eq.s32.totalorder %v735, 2
      %vm854 = vcmp.eq.s32.totalorder %v736, 2
      %v855 = vsel %vm853, 1, 0
      %v856 = vsel %vm854, 1, 0
      %v857 = vcvt.s32.f32 %v855
      %v858 = vcvt.s32.f32 %v856
      %859 = vset.pattern.permute.xlu0 2
      %860 = vperm.xlu0 %859, %v697
      %v861 = vpop.permute.xlu0 %860
      %863 = vset.pattern.permute.xlu0 2
      %864 = vperm.xlu0 %863, %v699
      %v865 = vpop.permute.xlu0 %864
      %867 = vset.pattern.permute.xlu0 2
      %868 = vperm.xlu0 %867, %v702
      %v869 = vpop.permute.xlu0 %868
      %871 = vset.pattern.permute.xlu0 2
      %872 = vperm.xlu0 %871, %v704
      %v873 = vpop.permute.xlu0 %872
      %875 = vset.pattern.permute.xlu0 2
      %876 = vperm.xlu0 %875, %v707
      %v877 = vpop.permute.xlu0 %876
      %879 = vset.pattern.permute.xlu0 2
      %880 = vperm.xlu0 %879, %v709
      %v881 = vpop.permute.xlu0 %880
      %883 = vset.pattern.permute.xlu0 2
      %884 = vperm.xlu0 %883, %v712
      %v885 = vpop.permute.xlu0 %884
      %887 = vset.pattern.permute.xlu0 2
      %888 = vperm.xlu0 %887, %v714
      %v889 = vpop.permute.xlu0 %888
      %v891 = vmul.f32 %v857, %v861
      %v892 = vmul.f32 %v858, %v865
      %v893 = vmul.f32 %v857, %v869
      %v894 = vmul.f32 %v858, %v873
      %v895 = vmul.f32 %v857, %v877
      %v896 = vmul.f32 %v858, %v881
      %v897 = vmul.f32 %v857, %v885
      %v898 = vmul.f32 %v858, %v889
      %v899 = vadd.f32 %v845, %v891
      %v900 = vadd.f32 %v846, %v892
      %v901 = vadd.f32 %v847, %v893
      %v902 = vadd.f32 %v848, %v894
      %v903 = vadd.f32 %v849, %v895
      %v904 = vadd.f32 %v850, %v896
      %v905 = vadd.f32 %v851, %v897
      %v906 = vadd.f32 %v852, %v898
      %vm907 = vcmp.eq.s32.totalorder %v735, 3
      %vm908 = vcmp.eq.s32.totalorder %v736, 3
      %v909 = vsel %vm907, 1, 0
      %v910 = vsel %vm908, 1, 0
      %v911 = vcvt.s32.f32 %v909
      %v912 = vcvt.s32.f32 %v910
      %913 = vset.pattern.permute.xlu0 3
      %914 = vperm.xlu0 %913, %v697
      %v915 = vpop.permute.xlu0 %914
      %917 = vset.pattern.permute.xlu0 3
      %918 = vperm.xlu0 %917, %v699
      %v919 = vpop.permute.xlu0 %918
      %921 = vset.pattern.permute.xlu0 3
      %922 = vperm.xlu0 %921, %v702
      %v923 = vpop.permute.xlu0 %922
      %925 = vset.pattern.permute.xlu0 3
      %926 = vperm.xlu0 %925, %v704
      %v927 = vpop.permute.xlu0 %926
      %929 = vset.pattern.permute.xlu0 3
      %930 = vperm.xlu0 %929, %v707
      %v931 = vpop.permute.xlu0 %930
      %933 = vset.pattern.permute.xlu0 3
      %934 = vperm.xlu0 %933, %v709
      %v935 = vpop.permute.xlu0 %934
      %937 = vset.pattern.permute.xlu0 3
      %938 = vperm.xlu0 %937, %v712
      %v939 = vpop.permute.xlu0 %938
      %941 = vset.pattern.permute.xlu0 3
      %942 = vperm.xlu0 %941, %v714
      %v943 = vpop.permute.xlu0 %942
      %v945 = vmul.f32 %v911, %v915
      %v946 = vmul.f32 %v912, %v919
      %v947 = vmul.f32 %v911, %v923
      %v948 = vmul.f32 %v912, %v927
      %v949 = vmul.f32 %v911, %v931
      %v950 = vmul.f32 %v912, %v935
      %v951 = vmul.f32 %v911, %v939
      %v952 = vmul.f32 %v912, %v943
      %v953 = vadd.f32 %v899, %v945
      %v954 = vadd.f32 %v900, %v946
      %v955 = vadd.f32 %v901, %v947
      %v956 = vadd.f32 %v902, %v948
      %v957 = vadd.f32 %v903, %v949
      %v958 = vadd.f32 %v904, %v950
      %v959 = vadd.f32 %v905, %v951
      %v960 = vadd.f32 %v906, %v952
      %vm961 = vcmp.eq.s32.totalorder %v735, 4
      %vm962 = vcmp.eq.s32.totalorder %v736, 4
      %v963 = vsel %vm961, 1, 0
      %v964 = vsel %vm962, 1, 0
      %v965 = vcvt.s32.f32 %v963
      %v966 = vcvt.s32.f32 %v964
      %967 = vset.pattern.permute.xlu0 4
      %968 = vperm.xlu0 %967, %v697
      %v969 = vpop.permute.xlu0 %968
      %971 = vset.pattern.permute.xlu0 4
      %972 = vperm.xlu0 %971, %v699
      %v973 = vpop.permute.xlu0 %972
      %975 = vset.pattern.permute.xlu0 4
      %976 = vperm.xlu0 %975, %v702
      %v977 = vpop.permute.xlu0 %976
      %979 = vset.pattern.permute.xlu0 4
      %980 = vperm.xlu0 %979, %v704
      %v981 = vpop.permute.xlu0 %980
      %983 = vset.pattern.permute.xlu0 4
      %984 = vperm.xlu0 %983, %v707
      %v985 = vpop.permute.xlu0 %984
      %987 = vset.pattern.permute.xlu0 4
      %988 = vperm.xlu0 %987, %v709
      %v989 = vpop.permute.xlu0 %988
      %991 = vset.pattern.permute.xlu0 4
      %992 = vperm.xlu0 %991, %v712
      %v993 = vpop.permute.xlu0 %992
      %995 = vset.pattern.permute.xlu0 4
      %996 = vperm.xlu0 %995, %v714
      %v997 = vpop.permute.xlu0 %996
      %v999 = vmul.f32 %v965, %v969
      %v1000 = vmul.f32 %v966, %v973
      %v1001 = vmul.f32 %v965, %v977
      %v1002 = vmul.f32 %v966, %v981
      %v1003 = vmul.f32 %v965, %v985
      %v1004 = vmul.f32 %v966, %v989
      %v1005 = vmul.f32 %v965, %v993
      %v1006 = vmul.f32 %v966, %v997
      %v1007 = vadd.f32 %v953, %v999
      %v1008 = vadd.f32 %v954, %v1000
      %v1009 = vadd.f32 %v955, %v1001
      %v1010 = vadd.f32 %v956, %v1002
      %v1011 = vadd.f32 %v957, %v1003
      %v1012 = vadd.f32 %v958, %v1004
      %v1013 = vadd.f32 %v959, %v1005
      %v1014 = vadd.f32 %v960, %v1006
      %vm1015 = vcmp.eq.s32.totalorder %v735, 5
      %vm1016 = vcmp.eq.s32.totalorder %v736, 5
      %v1017 = vsel %vm1015, 1, 0
      %v1018 = vsel %vm1016, 1, 0
      %v1019 = vcvt.s32.f32 %v1017
      %v1020 = vcvt.s32.f32 %v1018
      %1021 = vset.pattern.permute.xlu0 5
      %1022 = vperm.xlu0 %1021, %v697
      %v1023 = vpop.permute.xlu0 %1022
      %1025 = vset.pattern.permute.xlu0 5
      %1026 = vperm.xlu0 %1025, %v699
      %v1027 = vpop.permute.xlu0 %1026
      %1029 = vset.pattern.permute.xlu0 5
      %1030 = vperm.xlu0 %1029, %v702
      %v1031 = vpop.permute.xlu0 %1030
      %1033 = vset.pattern.permute.xlu0 5
      %1034 = vperm.xlu0 %1033, %v704
      %v1035 = vpop.permute.xlu0 %1034
      %1037 = vset.pattern.permute.xlu0 5
      %1038 = vperm.xlu0 %1037, %v707
      %v1039 = vpop.permute.xlu0 %1038
      %1041 = vset.pattern.permute.xlu0 5
      %1042 = vperm.xlu0 %1041, %v709
      %v1043 = vpop.permute.xlu0 %1042
      %1045 = vset.pattern.permute.xlu0 5
      %1046 = vperm.xlu0 %1045, %v712
      %v1047 = vpop.permute.xlu0 %1046
      %1049 = vset.pattern.permute.xlu0 5
      %1050 = vperm.xlu0 %1049, %v714
      %v1051 = vpop.permute.xlu0 %1050
      %v1053 = vmul.f32 %v1019, %v1023
      %v1054 = vmul.f32 %v1020, %v1027
      %v1055 = vmul.f32 %v1019, %v1031
      %v1056 = vmul.f32 %v1020, %v1035
      %v1057 = vmul.f32 %v1019, %v1039
      %v1058 = vmul.f32 %v1020, %v1043
      %v1059 = vmul.f32 %v1019, %v1047
      %v1060 = vmul.f32 %v1020, %v1051
      %v1061 = vadd.f32 %v1007, %v1053
      %v1062 = vadd.f32 %v1008, %v1054
      %v1063 = vadd.f32 %v1009, %v1055
      %v1064 = vadd.f32 %v1010, %v1056
      %v1065 = vadd.f32 %v1011, %v1057
      %v1066 = vadd.f32 %v1012, %v1058
      %v1067 = vadd.f32 %v1013, %v1059
      %v1068 = vadd.f32 %v1014, %v1060
      %vm1069 = vcmp.eq.s32.totalorder %v735, 6
      %vm1070 = vcmp.eq.s32.totalorder %v736, 6
      %v1071 = vsel %vm1069, 1, 0
      %v1072 = vsel %vm1070, 1, 0
      %v1073 = vcvt.s32.f32 %v1071
      %v1074 = vcvt.s32.f32 %v1072
      %1075 = vset.pattern.permute.xlu0 6
      %1076 = vperm.xlu0 %1075, %v697
      %v1077 = vpop.permute.xlu0 %1076
      %1079 = vset.pattern.permute.xlu0 6
      %1080 = vperm.xlu0 %1079, %v699
      %v1081 = vpop.permute.xlu0 %1080
      %1083 = vset.pattern.permute.xlu0 6
      %1084 = vperm.xlu0 %1083, %v702
      %v1085 = vpop.permute.xlu0 %1084
      %1087 = vset.pattern.permute.xlu0 6
      %1088 = vperm.xlu0 %1087, %v704
      %v1089 = vpop.permute.xlu0 %1088
      %1091 = vset.pattern.permute.xlu0 6
      %1092 = vperm.xlu0 %1091, %v707
      %v1093 = vpop.permute.xlu0 %1092
      %1095 = vset.pattern.permute.xlu0 6
      %1096 = vperm.xlu0 %1095, %v709
      %v1097 = vpop.permute.xlu0 %1096
      %1099 = vset.pattern.permute.xlu0 6
      %1100 = vperm.xlu0 %1099, %v712
      %v1101 = vpop.permute.xlu0 %1100
      %1103 = vset.pattern.permute.xlu0 6
      %1104 = vperm.xlu0 %1103, %v714
      %v1105 = vpop.permute.xlu0 %1104
      %v1107 = vmul.f32 %v1073, %v1077
      %v1108 = vmul.f32 %v1074, %v1081
      %v1109 = vmul.f32 %v1073, %v1085
      %v1110 = vmul.f32 %v1074, %v1089
      %v1111 = vmul.f32 %v1073, %v1093
      %v1112 = vmul.f32 %v1074, %v1097
      %v1113 = vmul.f32 %v1073, %v1101
      %v1114 = vmul.f32 %v1074, %v1105
      %v1115 = vadd.f32 %v1061, %v1107
      %v1116 = vadd.f32 %v1062, %v1108
      %v1117 = vadd.f32 %v1063, %v1109
      %v1118 = vadd.f32 %v1064, %v1110
      %v1119 = vadd.f32 %v1065, %v1111
      %v1120 = vadd.f32 %v1066, %v1112
      %v1121 = vadd.f32 %v1067, %v1113
      %v1122 = vadd.f32 %v1068, %v1114
      %vm1123 = vcmp.eq.s32.totalorder %v735, 7
      %vm1124 = vcmp.eq.s32.totalorder %v736, 7
      %v1125 = vsel %vm1123, 1, 0
      %v1126 = vsel %vm1124, 1, 0
      %v1127 = vcvt.s32.f32 %v1125
      %v1128 = vcvt.s32.f32 %v1126
      %1129 = vset.pattern.permute.xlu0 7
      %1130 = vperm.xlu0 %1129, %v697
      %v1131 = vpop.permute.xlu0 %1130
      %1133 = vset.pattern.permute.xlu0 7
      %1134 = vperm.xlu0 %1133, %v699
      %v1135 = vpop.permute.xlu0 %1134
      %1137 = vset.pattern.permute.xlu0 7
      %1138 = vperm.xlu0 %1137, %v702
      %v1139 = vpop.permute.xlu0 %1138
      %1141 = vset.pattern.permute.xlu0 7
      %1142 = vperm.xlu0 %1141, %v704
      %v1143 = vpop.permute.xlu0 %1142
      %1145 = vset.pattern.permute.xlu0 7
      %1146 = vperm.xlu0 %1145, %v707
      %v1147 = vpop.permute.xlu0 %1146
      %1149 = vset.pattern.permute.xlu0 7
      %1150 = vperm.xlu0 %1149, %v709
      %v1151 = vpop.permute.xlu0 %1150
      %1153 = vset.pattern.permute.xlu0 7
      %1154 = vperm.xlu0 %1153, %v712
      %v1155 = vpop.permute.xlu0 %1154
      %1157 = vset.pattern.permute.xlu0 7
      %1158 = vperm.xlu0 %1157, %v714
      %v1159 = vpop.permute.xlu0 %1158
      %v1161 = vmul.f32 %v1127, %v1131
      %v1162 = vmul.f32 %v1128, %v1135
      %v1163 = vmul.f32 %v1127, %v1139
      %v1164 = vmul.f32 %v1128, %v1143
      %v1165 = vmul.f32 %v1127, %v1147
      %v1166 = vmul.f32 %v1128, %v1151
      %v1167 = vmul.f32 %v1127, %v1155
      %v1168 = vmul.f32 %v1128, %v1159
      %v1169 = vadd.f32 %v1115, %v1161
      %v1170 = vadd.f32 %v1116, %v1162
      %v1171 = vadd.f32 %v1117, %v1163
      %v1172 = vadd.f32 %v1118, %v1164
      %v1173 = vadd.f32 %v1119, %v1165
      %v1174 = vadd.f32 %v1120, %v1166
      %v1175 = vadd.f32 %v1121, %v1167
      %v1176 = vadd.f32 %v1122, %v1168
      %vm1177 = vcmp.eq.s32.totalorder %v735, 8
      %vm1178 = vcmp.eq.s32.totalorder %v736, 8
      %v1179 = vsel %vm1177, 1, 0
      %v1180 = vsel %vm1178, 1, 0
      %v1181 = vcvt.s32.f32 %v1179
      %v1182 = vcvt.s32.f32 %v1180
      %1183 = vset.pattern.permute.xlu0 8
      %1184 = vperm.xlu0 %1183, %v697
      %v1185 = vpop.permute.xlu0 %1184
      %1187 = vset.pattern.permute.xlu0 8
      %1188 = vperm.xlu0 %1187, %v699
      %v1189 = vpop.permute.xlu0 %1188
      %1191 = vset.pattern.permute.xlu0 8
      %1192 = vperm.xlu0 %1191, %v702
      %v1193 = vpop.permute.xlu0 %1192
      %1195 = vset.pattern.permute.xlu0 8
      %1196 = vperm.xlu0 %1195, %v704
      %v1197 = vpop.permute.xlu0 %1196
      %1199 = vset.pattern.permute.xlu0 8
      %1200 = vperm.xlu0 %1199, %v707
      %v1201 = vpop.permute.xlu0 %1200
      %1203 = vset.pattern.permute.xlu0 8
      %1204 = vperm.xlu0 %1203, %v709
      %v1205 = vpop.permute.xlu0 %1204
      %1207 = vset.pattern.permute.xlu0 8
      %1208 = vperm.xlu0 %1207, %v712
      %v1209 = vpop.permute.xlu0 %1208
      %1211 = vset.pattern.permute.xlu0 8
      %1212 = vperm.xlu0 %1211, %v714
      %v1213 = vpop.permute.xlu0 %1212
      %v1215 = vmul.f32 %v1181, %v1185
      %v1216 = vmul.f32 %v1182, %v1189
      %v1217 = vmul.f32 %v1181, %v1193
      %v1218 = vmul.f32 %v1182, %v1197
      %v1219 = vmul.f32 %v1181, %v1201
      %v1220 = vmul.f32 %v1182, %v1205
      %v1221 = vmul.f32 %v1181, %v1209
      %v1222 = vmul.f32 %v1182, %v1213
      %v1223 = vadd.f32 %v1169, %v1215
      %v1224 = vadd.f32 %v1170, %v1216
      %v1225 = vadd.f32 %v1171, %v1217
      %v1226 = vadd.f32 %v1172, %v1218
      %v1227 = vadd.f32 %v1173, %v1219
      %v1228 = vadd.f32 %v1174, %v1220
      %v1229 = vadd.f32 %v1175, %v1221
      %v1230 = vadd.f32 %v1176, %v1222
      %v1233 = vunpack.c.l.b16 %v624
      %v1234 = vunpack.c.l.b16 %v625
      %v1235 = vpack.c.b16 %v1234, %v1233
      %v1237 = vsel %vm670, %v1235, 0
      %1239 = vmatpush.bf16.xpose.msra.mxu0 0
      %1240 = vmatpush.bf16.xpose.msra.mxu0 0
      %1241 = vmatpush.bf16.xpose.msra.mxu0 0
      %1242 = vmatpush.bf16.xpose.msra.mxu0 0
      %1243 = vmatpush.bf16.xpose.msra.mxu0 0
      %1244 = vmatpush.bf16.xpose.msra.mxu0 0
      %1245 = vmatpush.bf16.xpose.msra.mxu0 0
      %1246 = vmatpush.bf16.xpose.msra.mxu0 %v1237
      %1247 = vmatmul.bf16.gmra.mxu0 %v672
      %v1248 = vpop.f32.mrf.mxu0
      %v1249 = vadd.f32 %v1223, %v1248
      %v1250 = vpop.f32.mrf.mxu0
      %v1251 = vadd.f32 %v1224, %v1250
      %1252 = vdwg.mxu0
      %v1255 = vunpack.c.l.b16 %v626
      %v1256 = vunpack.c.l.b16 %v627
      %v1257 = vpack.c.b16 %v1256, %v1255
      %v1259 = vsel %vm670, %v1257, 0
      %1261 = vmatpush.bf16.xpose.msra.mxu0 0
      %1262 = vmatpush.bf16.xpose.msra.mxu0 0
      %1263 = vmatpush.bf16.xpose.msra.mxu0 0
      %1264 = vmatpush.bf16.xpose.msra.mxu0 0
      %1265 = vmatpush.bf16.xpose.msra.mxu0 0
      %1266 = vmatpush.bf16.xpose.msra.mxu0 0
      %1267 = vmatpush.bf16.xpose.msra.mxu0 0
      %1268 = vmatpush.bf16.xpose.msra.mxu0 %v1259
      %1269 = vmatmul.bf16.gmra.mxu0 %v675
      %v1270 = vpop.f32.mrf.mxu0
      %v1271 = vadd.f32 %v1225, %v1270
      %v1272 = vpop.f32.mrf.mxu0
      %v1273 = vadd.f32 %v1226, %v1272
      %1274 = vdwg.mxu0
      %v1277 = vunpack.c.l.b16 %v628
      %v1278 = vunpack.c.l.b16 %v629
      %v1279 = vpack.c.b16 %v1278, %v1277
      %v1281 = vsel %vm670, %v1279, 0
      %1283 = vmatpush.bf16.xpose.msra.mxu0 0
      %1284 = vmatpush.bf16.xpose.msra.mxu0 0
      %1285 = vmatpush.bf16.xpose.msra.mxu0 0
      %1286 = vmatpush.bf16.xpose.msra.mxu0 0
      %1287 = vmatpush.bf16.xpose.msra.mxu0 0
      %1288 = vmatpush.bf16.xpose.msra.mxu0 0
      %1289 = vmatpush.bf16.xpose.msra.mxu0 0
      %1290 = vmatpush.bf16.xpose.msra.mxu0 %v1281
      %1291 = vmatmul.bf16.gmra.mxu0 %v678
      %v1292 = vpop.f32.mrf.mxu0
      %v1293 = vadd.f32 %v1227, %v1292
      %v1294 = vpop.f32.mrf.mxu0
      %v1295 = vadd.f32 %v1228, %v1294
      %1296 = vdwg.mxu0
      %v1299 = vunpack.c.l.b16 %v630
      %v1300 = vunpack.c.l.b16 %v631
      %v1301 = vpack.c.b16 %v1300, %v1299
      %v1303 = vsel %vm670, %v1301, 0
      %1305 = vmatpush.bf16.xpose.msra.mxu0 0
      %1306 = vmatpush.bf16.xpose.msra.mxu0 0
      %1307 = vmatpush.bf16.xpose.msra.mxu0 0
      %1308 = vmatpush.bf16.xpose.msra.mxu0 0
      %1309 = vmatpush.bf16.xpose.msra.mxu0 0
      %1310 = vmatpush.bf16.xpose.msra.mxu0 0
      %1311 = vmatpush.bf16.xpose.msra.mxu0 0
      %1312 = vmatpush.bf16.xpose.msra.mxu0 %v1303
      %1313 = vmatmul.bf16.gmra.mxu0 %v681
      %v1314 = vpop.f32.mrf.mxu0
      %v1315 = vadd.f32 %v1229, %v1314
      %v1316 = vpop.f32.mrf.mxu0
      %v1317 = vadd.f32 %v1230, %v1316
      %1318 = vdwg.mxu0
      %v1319 = vmul.f32 %v1249, 0.35355338
      %v1320 = vmul.f32 %v1251, 0.35355338
      %v1321 = vmul.f32 %v1271, 0.35355338
      %v1322 = vmul.f32 %v1273, 0.35355338
      %v1323 = vmul.f32 %v1293, 0.35355338
      %v1324 = vmul.f32 %v1295, 0.35355338
      %v1325 = vmul.f32 %v1315, 0.35355338
      %v1326 = vmul.f32 %v1317, 0.35355338
      %v1327 = vld [vmem:[%s449] sm:$0x1]
      %vm1328 = vcmp.ne.f32.partialorder %v1327, 0.0
      %v1329 = vsel %vm1328, 1, 0
      %v1330 = vperm.slane %v1329, 0
      %vm1331 = vcmp.eq.s32.totalorder %v1330, 1
      %v1332 = vsel %vm1331, %v1319, -1e+30
      %v1333 = vsel %vm1331, %v1320, -1e+30
      %v1334 = vsel %vm1331, %v1321, -1e+30
      %v1335 = vsel %vm1331, %v1322, -1e+30
      %v1336 = vsel %vm1331, %v1323, -1e+30
      %v1337 = vsel %vm1331, %v1324, -1e+30
      %v1338 = vsel %vm1331, %v1325, -1e+30
      %v1339 = vsel %vm1331, %v1326, -1e+30
      %vm1340 = vcmask 130048
      %v1341 = vsel %vm1340, %v1332, -inf
      %1342 = vmax.xlane.f32.xlu0 %v1341
      %v1343 = vpop.xlane.xlu0 %1342
      %v1344 = vsel %vm1340, %v1333, -inf
      %1345 = vmax.xlane.f32.xlu0 %v1344
      %v1346 = vpop.xlane.xlu0 %1345
      %v1347 = vsel %vm1340, %v1334, -inf
      %1348 = vmax.xlane.f32.xlu0 %v1347
      %v1349 = vpop.xlane.xlu0 %1348
      %v1350 = vsel %vm1340, %v1335, -inf
      %1351 = vmax.xlane.f32.xlu0 %v1350
      %v1352 = vpop.xlane.xlu0 %1351
      %v1353 = vsel %vm1340, %v1336, -inf
      %1354 = vmax.xlane.f32.xlu0 %v1353
      %v1355 = vpop.xlane.xlu0 %1354
      %v1356 = vsel %vm1340, %v1337, -inf
      %1357 = vmax.xlane.f32.xlu0 %v1356
      %v1358 = vpop.xlane.xlu0 %1357
      %v1359 = vsel %vm1340, %v1338, -inf
      %1360 = vmax.xlane.f32.xlu0 %v1359
      %v1361 = vpop.xlane.xlu0 %1360
      %v1362 = vsel %vm1340, %v1339, -inf
      %1363 = vmax.xlane.f32.xlu0 %v1362
      %v1364 = vpop.xlane.xlu0 %1363
      %v1365 = vsub.f32 %v1332, %v1343
      %v1366 = vsub.f32 %v1333, %v1346
      %v1367 = vsub.f32 %v1334, %v1349
      %v1368 = vsub.f32 %v1335, %v1352
      %v1369 = vsub.f32 %v1336, %v1355
      %v1370 = vsub.f32 %v1337, %v1358
      %v1371 = vsub.f32 %v1338, %v1361
      %v1372 = vsub.f32 %v1339, %v1364
      %v1373 = vmul.f32 %v1365, 1.442695
      %v1374 = vpow.pop %v1373
      %v1375 = vmul.f32 %v1366, 1.442695
      %v1376 = vpow.pop %v1375
      %v1377 = vmul.f32 %v1367, 1.442695
      %v1378 = vpow.pop %v1377
      %v1379 = vmul.f32 %v1368, 1.442695
      %v1380 = vpow.pop %v1379
      %v1381 = vmul.f32 %v1369, 1.442695
      %v1382 = vpow.pop %v1381
      %v1383 = vmul.f32 %v1370, 1.442695
      %v1384 = vpow.pop %v1383
      %v1385 = vmul.f32 %v1371, 1.442695
      %v1386 = vpow.pop %v1385
      %v1387 = vmul.f32 %v1372, 1.442695
      %v1388 = vpow.pop %v1387
      %v1389 = vsel %vm1340, %v1374, 0.0
      %1390 = vadd.xlane.f32.xlu0 %v1389
      %v1391 = vpop.xlane.xlu0 %1390
      %v1392 = vsel %vm1340, %v1376, 0.0
      %1393 = vadd.xlane.f32.xlu0 %v1392
      %v1394 = vpop.xlane.xlu0 %1393
      %v1395 = vsel %vm1340, %v1378, 0.0
      %1396 = vadd.xlane.f32.xlu0 %v1395
      %v1397 = vpop.xlane.xlu0 %1396
      %v1398 = vsel %vm1340, %v1380, 0.0
      %1399 = vadd.xlane.f32.xlu0 %v1398
      %v1400 = vpop.xlane.xlu0 %1399
      %v1401 = vsel %vm1340, %v1382, 0.0
      %1402 = vadd.xlane.f32.xlu0 %v1401
      %v1403 = vpop.xlane.xlu0 %1402
      %v1404 = vsel %vm1340, %v1384, 0.0
      %1405 = vadd.xlane.f32.xlu0 %v1404
      %v1406 = vpop.xlane.xlu0 %1405
      %v1407 = vsel %vm1340, %v1386, 0.0
      %1408 = vadd.xlane.f32.xlu0 %v1407
      %v1409 = vpop.xlane.xlu0 %1408
      %v1410 = vsel %vm1340, %v1388, 0.0
      %1411 = vadd.xlane.f32.xlu0 %v1410
      %v1412 = vpop.xlane.xlu0 %1411
      %v1413 = vrcp.pop %v1391
      %v1414 = vmul.f32 %v1391, %v1413
      %v1415 = vsub.f32 1.0, %v1414
      %v1416 = vmul.f32 %v1413, %v1415
      %v1417 = vadd.f32 %v1413, %v1416
      %vm1418 = vweird.f32 %v1391
      %vm1419 = vweird.f32 %v1413
      %vm1420 = vmor %vm1418, %vm1419
      %v1421 = vsel %vm1420, %v1413, %v1417
      %v1422 = vand.u32 2147483647, %v1391
      %vm1423 = vcmp.eq.f32.partialorder %v1422, 8.507059e+37
      %v1424 = vand.u32 %v1391, 2147483648
      %v1425 = vor.u32 1.1754944e-38, %v1424
      %v1426 = vsel %vm1423, %v1425, %v1421
      %v1427 = vmul.f32 %v1374, %v1426
      %v1428 = vrcp.pop %v1394
      %v1429 = vmul.f32 %v1394, %v1428
      %v1430 = vsub.f32 1.0, %v1429
      %v1431 = vmul.f32 %v1428, %v1430
      %v1432 = vadd.f32 %v1428, %v1431
      %vm1433 = vweird.f32 %v1394
      %vm1434 = vweird.f32 %v1428
      %vm1435 = vmor %vm1433, %vm1434
      %v1436 = vsel %vm1435, %v1428, %v1432
      %v1437 = vand.u32 2147483647, %v1394
      %vm1438 = vcmp.eq.f32.partialorder %v1437, 8.507059e+37
      %v1439 = vand.u32 %v1394, 2147483648
      %v1440 = vor.u32 1.1754944e-38, %v1439
      %v1441 = vsel %vm1438, %v1440, %v1436
      %v1442 = vmul.f32 %v1376, %v1441
      %v1443 = vrcp.pop %v1397
      %v1444 = vmul.f32 %v1397, %v1443
      %v1445 = vsub.f32 1.0, %v1444
      %v1446 = vmul.f32 %v1443, %v1445
      %v1447 = vadd.f32 %v1443, %v1446
      %vm1448 = vweird.f32 %v1397
      %vm1449 = vweird.f32 %v1443
      %vm1450 = vmor %vm1448, %vm1449
      %v1451 = vsel %vm1450, %v1443, %v1447
      %v1452 = vand.u32 2147483647, %v1397
      %vm1453 = vcmp.eq.f32.partialorder %v1452, 8.507059e+37
      %v1454 = vand.u32 %v1397, 2147483648
      %v1455 = vor.u32 1.1754944e-38, %v1454
      %v1456 = vsel %vm1453, %v1455, %v1451
      %v1457 = vmul.f32 %v1378, %v1456
      %v1458 = vrcp.pop %v1400
      %v1459 = vmul.f32 %v1400, %v1458
      %v1460 = vsub.f32 1.0, %v1459
      %v1461 = vmul.f32 %v1458, %v1460
      %v1462 = vadd.f32 %v1458, %v1461
      %vm1463 = vweird.f32 %v1400
      %vm1464 = vweird.f32 %v1458
      %vm1465 = vmor %vm1463, %vm1464
      %v1466 = vsel %vm1465, %v1458, %v1462
      %v1467 = vand.u32 2147483647, %v1400
      %vm1468 = vcmp.eq.f32.partialorder %v1467, 8.507059e+37
      %v1469 = vand.u32 %v1400, 2147483648
      %v1470 = vor.u32 1.1754944e-38, %v1469
      %v1471 = vsel %vm1468, %v1470, %v1466
      %v1472 = vmul.f32 %v1380, %v1471
      %v1473 = vrcp.pop %v1403
      %v1474 = vmul.f32 %v1403, %v1473
      %v1475 = vsub.f32 1.0, %v1474
      %v1476 = vmul.f32 %v1473, %v1475
      %v1477 = vadd.f32 %v1473, %v1476
      %vm1478 = vweird.f32 %v1403
      %vm1479 = vweird.f32 %v1473
      %vm1480 = vmor %vm1478, %vm1479
      %v1481 = vsel %vm1480, %v1473, %v1477
      %v1482 = vand.u32 2147483647, %v1403
      %vm1483 = vcmp.eq.f32.partialorder %v1482, 8.507059e+37
      %v1484 = vand.u32 %v1403, 2147483648
      %v1485 = vor.u32 1.1754944e-38, %v1484
      %v1486 = vsel %vm1483, %v1485, %v1481
      %v1487 = vmul.f32 %v1382, %v1486
      %v1488 = vrcp.pop %v1406
      %v1489 = vmul.f32 %v1406, %v1488
      %v1490 = vsub.f32 1.0, %v1489
      %v1491 = vmul.f32 %v1488, %v1490
      %v1492 = vadd.f32 %v1488, %v1491
      %vm1493 = vweird.f32 %v1406
      %vm1494 = vweird.f32 %v1488
      %vm1495 = vmor %vm1493, %vm1494
      %v1496 = vsel %vm1495, %v1488, %v1492
      %v1497 = vand.u32 2147483647, %v1406
      %vm1498 = vcmp.eq.f32.partialorder %v1497, 8.507059e+37
      %v1499 = vand.u32 %v1406, 2147483648
      %v1500 = vor.u32 1.1754944e-38, %v1499
      %v1501 = vsel %vm1498, %v1500, %v1496
      %v1502 = vmul.f32 %v1384, %v1501
      %v1503 = vrcp.pop %v1409
      %v1504 = vmul.f32 %v1409, %v1503
      %v1505 = vsub.f32 1.0, %v1504
      %v1506 = vmul.f32 %v1503, %v1505
      %v1507 = vadd.f32 %v1503, %v1506
      %vm1508 = vweird.f32 %v1409
      %vm1509 = vweird.f32 %v1503
      %vm1510 = vmor %vm1508, %vm1509
      %v1511 = vsel %vm1510, %v1503, %v1507
      %v1512 = vand.u32 2147483647, %v1409
      %vm1513 = vcmp.eq.f32.partialorder %v1512, 8.507059e+37
      %v1514 = vand.u32 %v1409, 2147483648
      %v1515 = vor.u32 1.1754944e-38, %v1514
      %v1516 = vsel %vm1513, %v1515, %v1511
      %v1517 = vmul.f32 %v1386, %v1516
      %v1518 = vrcp.pop %v1412
      %v1519 = vmul.f32 %v1412, %v1518
      %v1520 = vsub.f32 1.0, %v1519
      %v1521 = vmul.f32 %v1518, %v1520
      %v1522 = vadd.f32 %v1518, %v1521
      %vm1523 = vweird.f32 %v1412
      %vm1524 = vweird.f32 %v1518
      %vm1525 = vmor %vm1523, %vm1524
      %v1526 = vsel %vm1525, %v1518, %v1522
      %v1527 = vand.u32 2147483647, %v1412
      %vm1528 = vcmp.eq.f32.partialorder %v1527, 8.507059e+37
      %v1529 = vand.u32 %v1412, 2147483648
      %v1530 = vor.u32 1.1754944e-38, %v1529
      %v1531 = vsel %vm1528, %v1530, %v1526
      %v1532 = vmul.f32 %v1388, %v1531
      %v1533 = vpack.c.bf16 %v1427, %v1427
      %v1534 = vpack.c.bf16 %v1442, %v1442
      %v1535 = vpack.c.bf16 %v1457, %v1457
      %v1536 = vpack.c.bf16 %v1472, %v1472
      %v1537 = vpack.c.bf16 %v1487, %v1487
      %v1538 = vpack.c.bf16 %v1502, %v1502
      %v1539 = vpack.c.bf16 %v1517, %v1517
      %v1540 = vpack.c.bf16 %v1532, %v1532
      %v1541 = vmul.f32 %v1427, %v741
      %v1542 = vmul.f32 %v1442, %v742
      %v1543 = vmul.f32 %v1457, %v741
      %v1544 = vmul.f32 %v1472, %v742
      %v1545 = vmul.f32 %v1487, %v741
      %v1546 = vmul.f32 %v1502, %v742
      %v1547 = vmul.f32 %v1517, %v741
      %v1548 = vmul.f32 %v1532, %v742
      %v1549 = vsel %vm1340, %v1541, 0.0
      %1550 = vadd.xlane.f32.xlu0 %v1549
      %v1551 = vpop.xlane.xlu0 %1550
      %v1552 = vsel %vm1340, %v1542, 0.0
      %1553 = vadd.xlane.f32.xlu0 %v1552
      %v1554 = vpop.xlane.xlu0 %1553
      %v1555 = vsel %vm1340, %v1543, 0.0
      %1556 = vadd.xlane.f32.xlu0 %v1555
      %v1557 = vpop.xlane.xlu0 %1556
      %v1558 = vsel %vm1340, %v1544, 0.0
      %1559 = vadd.xlane.f32.xlu0 %v1558
      %v1560 = vpop.xlane.xlu0 %1559
      %v1561 = vsel %vm1340, %v1545, 0.0
      %1562 = vadd.xlane.f32.xlu0 %v1561
      %v1563 = vpop.xlane.xlu0 %1562
      %v1564 = vsel %vm1340, %v1546, 0.0
      %1565 = vadd.xlane.f32.xlu0 %v1564
      %v1566 = vpop.xlane.xlu0 %1565
      %v1567 = vsel %vm1340, %v1547, 0.0
      %1568 = vadd.xlane.f32.xlu0 %v1567
      %v1569 = vpop.xlane.xlu0 %1568
      %v1570 = vsel %vm1340, %v1548, 0.0
      %1571 = vadd.xlane.f32.xlu0 %v1570
      %v1572 = vpop.xlane.xlu0 %1571
      %v1573 = vmul.f32 %v1427, %v803
      %v1574 = vmul.f32 %v1442, %v804
      %v1575 = vmul.f32 %v1457, %v803
      %v1576 = vmul.f32 %v1472, %v804
      %v1577 = vmul.f32 %v1487, %v803
      %v1578 = vmul.f32 %v1502, %v804
      %v1579 = vmul.f32 %v1517, %v803
      %v1580 = vmul.f32 %v1532, %v804
      %v1581 = vsel %vm1340, %v1573, 0.0
      %1582 = vadd.xlane.f32.xlu0 %v1581
      %v1583 = vpop.xlane.xlu0 %1582
      %v1584 = vsel %vm1340, %v1574, 0.0
      %1585 = vadd.xlane.f32.xlu0 %v1584
      %v1586 = vpop.xlane.xlu0 %1585
      %v1587 = vsel %vm1340, %v1575, 0.0
      %1588 = vadd.xlane.f32.xlu0 %v1587
      %v1589 = vpop.xlane.xlu0 %1588
      %v1590 = vsel %vm1340, %v1576, 0.0
      %1591 = vadd.xlane.f32.xlu0 %v1590
      %v1592 = vpop.xlane.xlu0 %1591
      %v1593 = vsel %vm1340, %v1577, 0.0
      %1594 = vadd.xlane.f32.xlu0 %v1593
      %v1595 = vpop.xlane.xlu0 %1594
      %v1596 = vsel %vm1340, %v1578, 0.0
      %1597 = vadd.xlane.f32.xlu0 %v1596
      %v1598 = vpop.xlane.xlu0 %1597
      %v1599 = vsel %vm1340, %v1579, 0.0
      %1600 = vadd.xlane.f32.xlu0 %v1599
      %v1601 = vpop.xlane.xlu0 %1600
      %v1602 = vsel %vm1340, %v1580, 0.0
      %1603 = vadd.xlane.f32.xlu0 %v1602
      %v1604 = vpop.xlane.xlu0 %1603
      %v1605 = vmul.f32 %v1427, %v857
      %v1606 = vmul.f32 %v1442, %v858
      %v1607 = vmul.f32 %v1457, %v857
      %v1608 = vmul.f32 %v1472, %v858
      %v1609 = vmul.f32 %v1487, %v857
      %v1610 = vmul.f32 %v1502, %v858
      %v1611 = vmul.f32 %v1517, %v857
      %v1612 = vmul.f32 %v1532, %v858
      %v1613 = vsel %vm1340, %v1605, 0.0
      %1614 = vadd.xlane.f32.xlu0 %v1613
      %v1615 = vpop.xlane.xlu0 %1614
      %v1616 = vsel %vm1340, %v1606, 0.0
      %1617 = vadd.xlane.f32.xlu0 %v1616
      %v1618 = vpop.xlane.xlu0 %1617
      %v1619 = vsel %vm1340, %v1607, 0.0
      %1620 = vadd.xlane.f32.xlu0 %v1619
      %v1621 = vpop.xlane.xlu0 %1620
      %v1622 = vsel %vm1340, %v1608, 0.0
      %1623 = vadd.xlane.f32.xlu0 %v1622
      %v1624 = vpop.xlane.xlu0 %1623
      %v1625 = vsel %vm1340, %v1609, 0.0
      %1626 = vadd.xlane.f32.xlu0 %v1625
      %v1627 = vpop.xlane.xlu0 %1626
      %v1628 = vsel %vm1340, %v1610, 0.0
      %1629 = vadd.xlane.f32.xlu0 %v1628
      %v1630 = vpop.xlane.xlu0 %1629
      %v1631 = vsel %vm1340, %v1611, 0.0
      %1632 = vadd.xlane.f32.xlu0 %v1631
      %v1633 = vpop.xlane.xlu0 %1632
      %v1634 = vsel %vm1340, %v1612, 0.0
      %1635 = vadd.xlane.f32.xlu0 %v1634
      %v1636 = vpop.xlane.xlu0 %1635
      %v1637 = vmul.f32 %v1427, %v911
      %v1638 = vmul.f32 %v1442, %v912
      %v1639 = vmul.f32 %v1457, %v911
      %v1640 = vmul.f32 %v1472, %v912
      %v1641 = vmul.f32 %v1487, %v911
      %v1642 = vmul.f32 %v1502, %v912
      %v1643 = vmul.f32 %v1517, %v911
      %v1644 = vmul.f32 %v1532, %v912
      %v1645 = vsel %vm1340, %v1637, 0.0
      %1646 = vadd.xlane.f32.xlu0 %v1645
      %v1647 = vpop.xlane.xlu0 %1646
      %v1648 = vsel %vm1340, %v1638, 0.0
      %1649 = vadd.xlane.f32.xlu0 %v1648
      %v1650 = vpop.xlane.xlu0 %1649
      %v1651 = vsel %vm1340, %v1639, 0.0
      %1652 = vadd.xlane.f32.xlu0 %v1651
      %v1653 = vpop.xlane.xlu0 %1652
      %v1654 = vsel %vm1340, %v1640, 0.0
      %1655 = vadd.xlane.f32.xlu0 %v1654
      %v1656 = vpop.xlane.xlu0 %1655
      %v1657 = vsel %vm1340, %v1641, 0.0
      %1658 = vadd.xlane.f32.xlu0 %v1657
      %v1659 = vpop.xlane.xlu0 %1658
      %v1660 = vsel %vm1340, %v1642, 0.0
      %1661 = vadd.xlane.f32.xlu0 %v1660
      %v1662 = vpop.xlane.xlu0 %1661
      %v1663 = vsel %vm1340, %v1643, 0.0
      %1664 = vadd.xlane.f32.xlu0 %v1663
      %v1665 = vpop.xlane.xlu0 %1664
      %v1666 = vsel %vm1340, %v1644, 0.0
      %1667 = vadd.xlane.f32.xlu0 %v1666
      %v1668 = vpop.xlane.xlu0 %1667
      %v1669 = vmul.f32 %v1427, %v965
      %v1670 = vmul.f32 %v1442, %v966
      %v1671 = vmul.f32 %v1457, %v965
      %v1672 = vmul.f32 %v1472, %v966
      %v1673 = vmul.f32 %v1487, %v965
      %v1674 = vmul.f32 %v1502, %v966
      %v1675 = vmul.f32 %v1517, %v965
      %v1676 = vmul.f32 %v1532, %v966
      %v1677 = vsel %vm1340, %v1669, 0.0
      %1678 = vadd.xlane.f32.xlu0 %v1677
      %v1679 = vpop.xlane.xlu0 %1678
      %v1680 = vsel %vm1340, %v1670, 0.0
      %1681 = vadd.xlane.f32.xlu0 %v1680
      %v1682 = vpop.xlane.xlu0 %1681
      %v1683 = vsel %vm1340, %v1671, 0.0
      %1684 = vadd.xlane.f32.xlu0 %v1683
      %v1685 = vpop.xlane.xlu0 %1684
      %v1686 = vsel %vm1340, %v1672, 0.0
      %1687 = vadd.xlane.f32.xlu0 %v1686
      %v1688 = vpop.xlane.xlu0 %1687
      %v1689 = vsel %vm1340, %v1673, 0.0
      %1690 = vadd.xlane.f32.xlu0 %v1689
      %v1691 = vpop.xlane.xlu0 %1690
      %v1692 = vsel %vm1340, %v1674, 0.0
      %1693 = vadd.xlane.f32.xlu0 %v1692
      %v1694 = vpop.xlane.xlu0 %1693
      %v1695 = vsel %vm1340, %v1675, 0.0
      %1696 = vadd.xlane.f32.xlu0 %v1695
      %v1697 = vpop.xlane.xlu0 %1696
      %v1698 = vsel %vm1340, %v1676, 0.0
      %1699 = vadd.xlane.f32.xlu0 %v1698
      %v1700 = vpop.xlane.xlu0 %1699
      %v1701 = vmul.f32 %v1427, %v1019
      %v1702 = vmul.f32 %v1442, %v1020
      %v1703 = vmul.f32 %v1457, %v1019
      %v1704 = vmul.f32 %v1472, %v1020
      %v1705 = vmul.f32 %v1487, %v1019
      %v1706 = vmul.f32 %v1502, %v1020
      %v1707 = vmul.f32 %v1517, %v1019
      %v1708 = vmul.f32 %v1532, %v1020
      %v1709 = vsel %vm1340, %v1701, 0.0
      %1710 = vadd.xlane.f32.xlu0 %v1709
      %v1711 = vpop.xlane.xlu0 %1710
      %v1712 = vsel %vm1340, %v1702, 0.0
      %1713 = vadd.xlane.f32.xlu0 %v1712
      %v1714 = vpop.xlane.xlu0 %1713
      %v1715 = vsel %vm1340, %v1703, 0.0
      %1716 = vadd.xlane.f32.xlu0 %v1715
      %v1717 = vpop.xlane.xlu0 %1716
      %v1718 = vsel %vm1340, %v1704, 0.0
      %1719 = vadd.xlane.f32.xlu0 %v1718
      %v1720 = vpop.xlane.xlu0 %1719
      %v1721 = vsel %vm1340, %v1705, 0.0
      %1722 = vadd.xlane.f32.xlu0 %v1721
      %v1723 = vpop.xlane.xlu0 %1722
      %v1724 = vsel %vm1340, %v1706, 0.0
      %1725 = vadd.xlane.f32.xlu0 %v1724
      %v1726 = vpop.xlane.xlu0 %1725
      %v1727 = vsel %vm1340, %v1707, 0.0
      %1728 = vadd.xlane.f32.xlu0 %v1727
      %v1729 = vpop.xlane.xlu0 %1728
      %v1730 = vsel %vm1340, %v1708, 0.0
      %1731 = vadd.xlane.f32.xlu0 %v1730
      %v1732 = vpop.xlane.xlu0 %1731
      %v1733 = vmul.f32 %v1427, %v1073
      %v1734 = vmul.f32 %v1442, %v1074
      %v1735 = vmul.f32 %v1457, %v1073
      %v1736 = vmul.f32 %v1472, %v1074
      %v1737 = vmul.f32 %v1487, %v1073
      %v1738 = vmul.f32 %v1502, %v1074
      %v1739 = vmul.f32 %v1517, %v1073
      %v1740 = vmul.f32 %v1532, %v1074
      %v1741 = vsel %vm1340, %v1733, 0.0
      %1742 = vadd.xlane.f32.xlu0 %v1741
      %v1743 = vpop.xlane.xlu0 %1742
      %v1744 = vsel %vm1340, %v1734, 0.0
      %1745 = vadd.xlane.f32.xlu0 %v1744
      %v1746 = vpop.xlane.xlu0 %1745
      %v1747 = vsel %vm1340, %v1735, 0.0
      %1748 = vadd.xlane.f32.xlu0 %v1747
      %v1749 = vpop.xlane.xlu0 %1748
      %v1750 = vsel %vm1340, %v1736, 0.0
      %1751 = vadd.xlane.f32.xlu0 %v1750
      %v1752 = vpop.xlane.xlu0 %1751
      %v1753 = vsel %vm1340, %v1737, 0.0
      %1754 = vadd.xlane.f32.xlu0 %v1753
      %v1755 = vpop.xlane.xlu0 %1754
      %v1756 = vsel %vm1340, %v1738, 0.0
      %1757 = vadd.xlane.f32.xlu0 %v1756
      %v1758 = vpop.xlane.xlu0 %1757
      %v1759 = vsel %vm1340, %v1739, 0.0
      %1760 = vadd.xlane.f32.xlu0 %v1759
      %v1761 = vpop.xlane.xlu0 %1760
      %v1762 = vsel %vm1340, %v1740, 0.0
      %1763 = vadd.xlane.f32.xlu0 %v1762
      %v1764 = vpop.xlane.xlu0 %1763
      %v1765 = vmul.f32 %v1427, %v1127
      %v1766 = vmul.f32 %v1442, %v1128
      %v1767 = vmul.f32 %v1457, %v1127
      %v1768 = vmul.f32 %v1472, %v1128
      %v1769 = vmul.f32 %v1487, %v1127
      %v1770 = vmul.f32 %v1502, %v1128
      %v1771 = vmul.f32 %v1517, %v1127
      %v1772 = vmul.f32 %v1532, %v1128
      %v1773 = vsel %vm1340, %v1765, 0.0
      %1774 = vadd.xlane.f32.xlu0 %v1773
      %v1775 = vpop.xlane.xlu0 %1774
      %v1776 = vsel %vm1340, %v1766, 0.0
      %1777 = vadd.xlane.f32.xlu0 %v1776
      %v1778 = vpop.xlane.xlu0 %1777
      %v1779 = vsel %vm1340, %v1767, 0.0
      %1780 = vadd.xlane.f32.xlu0 %v1779
      %v1781 = vpop.xlane.xlu0 %1780
      %v1782 = vsel %vm1340, %v1768, 0.0
      %1783 = vadd.xlane.f32.xlu0 %v1782
      %v1784 = vpop.xlane.xlu0 %1783
      %v1785 = vsel %vm1340, %v1769, 0.0
      %1786 = vadd.xlane.f32.xlu0 %v1785
      %v1787 = vpop.xlane.xlu0 %1786
      %v1788 = vsel %vm1340, %v1770, 0.0
      %1789 = vadd.xlane.f32.xlu0 %v1788
      %v1790 = vpop.xlane.xlu0 %1789
      %v1791 = vsel %vm1340, %v1771, 0.0
      %1792 = vadd.xlane.f32.xlu0 %v1791
      %v1793 = vpop.xlane.xlu0 %1792
      %v1794 = vsel %vm1340, %v1772, 0.0
      %1795 = vadd.xlane.f32.xlu0 %v1794
      %v1796 = vpop.xlane.xlu0 %1795
      %v1797 = vmul.f32 %v1427, %v1181
      %v1798 = vmul.f32 %v1442, %v1182
      %v1799 = vmul.f32 %v1457, %v1181
      %v1800 = vmul.f32 %v1472, %v1182
      %v1801 = vmul.f32 %v1487, %v1181
      %v1802 = vmul.f32 %v1502, %v1182
      %v1803 = vmul.f32 %v1517, %v1181
      %v1804 = vmul.f32 %v1532, %v1182
      %v1805 = vsel %vm1340, %v1797, 0.0
      %1806 = vadd.xlane.f32.xlu0 %v1805
      %v1807 = vpop.xlane.xlu0 %1806
      %v1808 = vsel %vm1340, %v1798, 0.0
      %1809 = vadd.xlane.f32.xlu0 %v1808
      %v1810 = vpop.xlane.xlu0 %1809
      %v1811 = vsel %vm1340, %v1799, 0.0
      %1812 = vadd.xlane.f32.xlu0 %v1811
      %v1813 = vpop.xlane.xlu0 %1812
      %v1814 = vsel %vm1340, %v1800, 0.0
      %1815 = vadd.xlane.f32.xlu0 %v1814
      %v1816 = vpop.xlane.xlu0 %1815
      %v1817 = vsel %vm1340, %v1801, 0.0
      %1818 = vadd.xlane.f32.xlu0 %v1817
      %v1819 = vpop.xlane.xlu0 %1818
      %v1820 = vsel %vm1340, %v1802, 0.0
      %1821 = vadd.xlane.f32.xlu0 %v1820
      %v1822 = vpop.xlane.xlu0 %1821
      %v1823 = vsel %vm1340, %v1803, 0.0
      %1824 = vadd.xlane.f32.xlu0 %v1823
      %v1825 = vpop.xlane.xlu0 %1824
      %v1826 = vsel %vm1340, %v1804, 0.0
      %1827 = vadd.xlane.f32.xlu0 %v1826
      %v1828 = vpop.xlane.xlu0 %1827
      %vm1829 = vcmask 7168
      %v1830 = vsel %vm1829, %v1551, %v1583
      %v1831 = vsel %vm1829, %v1554, %v1586
      %v1832 = vsel %vm1829, %v1557, %v1589
      %v1833 = vsel %vm1829, %v1560, %v1592
      %v1834 = vsel %vm1829, %v1563, %v1595
      %v1835 = vsel %vm1829, %v1566, %v1598
      %v1836 = vsel %vm1829, %v1569, %v1601
      %v1837 = vsel %vm1829, %v1572, %v1604
      %vm1838 = vcmask 15360
      %v1839 = vsel %vm1838, %v1830, %v1615
      %v1840 = vsel %vm1838, %v1831, %v1618
      %v1841 = vsel %vm1838, %v1832, %v1621
      %v1842 = vsel %vm1838, %v1833, %v1624
      %v1843 = vsel %vm1838, %v1834, %v1627
      %v1844 = vsel %vm1838, %v1835, %v1630
      %v1845 = vsel %vm1838, %v1836, %v1633
      %v1846 = vsel %vm1838, %v1837, %v1636
      %vm1847 = vcmask 23552
      %v1848 = vsel %vm1847, %v1839, %v1647
      %v1849 = vsel %vm1847, %v1840, %v1650
      %v1850 = vsel %vm1847, %v1841, %v1653
      %v1851 = vsel %vm1847, %v1842, %v1656
      %v1852 = vsel %vm1847, %v1843, %v1659
      %v1853 = vsel %vm1847, %v1844, %v1662
      %v1854 = vsel %vm1847, %v1845, %v1665
      %v1855 = vsel %vm1847, %v1846, %v1668
      %vm1856 = vcmask 31744
      %v1857 = vsel %vm1856, %v1848, %v1679
      %v1858 = vsel %vm1856, %v1849, %v1682
      %v1859 = vsel %vm1856, %v1850, %v1685
      %v1860 = vsel %vm1856, %v1851, %v1688
      %v1861 = vsel %vm1856, %v1852, %v1691
      %v1862 = vsel %vm1856, %v1853, %v1694
      %v1863 = vsel %vm1856, %v1854, %v1697
      %v1864 = vsel %vm1856, %v1855, %v1700
      %vm1865 = vcmask 39936
      %v1866 = vsel %vm1865, %v1857, %v1711
      %v1867 = vsel %vm1865, %v1858, %v1714
      %v1868 = vsel %vm1865, %v1859, %v1717
      %v1869 = vsel %vm1865, %v1860, %v1720
      %v1870 = vsel %vm1865, %v1861, %v1723
      %v1871 = vsel %vm1865, %v1862, %v1726
      %v1872 = vsel %vm1865, %v1863, %v1729
      %v1873 = vsel %vm1865, %v1864, %v1732
      %vm1874 = vcmask 48128
      %v1875 = vsel %vm1874, %v1866, %v1743
      %v1876 = vsel %vm1874, %v1867, %v1746
      %v1877 = vsel %vm1874, %v1868, %v1749
      %v1878 = vsel %vm1874, %v1869, %v1752
      %v1879 = vsel %vm1874, %v1870, %v1755
      %v1880 = vsel %vm1874, %v1871, %v1758
      %v1881 = vsel %vm1874, %v1872, %v1761
      %v1882 = vsel %vm1874, %v1873, %v1764
      %vm1883 = vcmask 56320
      %v1884 = vsel %vm1883, %v1875, %v1775
      %v1885 = vsel %vm1883, %v1876, %v1778
      %v1886 = vsel %vm1883, %v1877, %v1781
      %v1887 = vsel %vm1883, %v1878, %v1784
      %v1888 = vsel %vm1883, %v1879, %v1787
      %v1889 = vsel %vm1883, %v1880, %v1790
      %v1890 = vsel %vm1883, %v1881, %v1793
      %v1891 = vsel %vm1883, %v1882, %v1796
      %v1892 = vsel %vm670, %v1884, %v1807
      %v1893 = vsel %vm670, %v1885, %v1810
      %v1894 = vsel %vm670, %v1886, %v1813
      %v1895 = vsel %vm670, %v1887, %v1816
      %v1896 = vsel %vm670, %v1888, %v1819
      %v1897 = vsel %vm670, %v1889, %v1822
      %v1898 = vsel %vm670, %v1890, %v1825
      %v1899 = vsel %vm670, %v1891, %v1828
      %v1900 = vpack.c.bf16 %v1893, %v1892
      %v1901 = vpack.c.bf16 %v1895, %v1894
      %v1902 = vpack.c.bf16 %v1897, %v1896
      %v1903 = vpack.c.bf16 %v1899, %v1898
      %v1904 = vld [vmem:[%s10] sm:$0xff]
      %v1905 = vld [vmem:[%s10 + $0x8] sm:$0x1]
      %v1906 = vpack.c.bf16 %v1905, %v1904
      %vm1907 = vcmask 72704
      %v1909 = vsel %vm1907, %v1900, 0
      %v1912 = vsel %vm1907, %v1901, 0
      %v1915 = vsel %vm1907, %v1902, 0
      %v1918 = vsel %vm1907, %v1903, 0
      %vm1920 = vcmask 1044480
      %v1921 = vsel %vm683, 4294967295, 65535
      %v1922 = vsel %vm1920, %v1921, 0
      %v1924 = vand.u32 %v1906, %v1922
      %1926 = vmatpush.bf16.msra.mxu0 0
      %1927 = vmatpush.bf16.msra.mxu0 0
      %1928 = vmatpush.bf16.msra.mxu0 0
      %1929 = vmatpush.bf16.msra.mxu0 0
      %1930 = vmatpush.bf16.msra.mxu0 0
      %1931 = vmatpush.bf16.msra.mxu0 0
      %1932 = vmatpush.bf16.msra.mxu0 0
      %1933 = vmatpush.bf16.msra.mxu0 %v1924
      %1934 = vmatmul.bf16.gmra.mxu0 %v1909
      %v1935 = vpop.f32.mrf.mxu0
      %v1936 = vadd.f32 0.0, %v1935
      %v1937 = vpop.f32.mrf.mxu0
      %v1938 = vadd.f32 0.0, %v1937
      %1939 = vmatmul.bf16.gmra.mxu0 %v1912
      %v1940 = vpop.f32.mrf.mxu0
      %v1941 = vadd.f32 0.0, %v1940
      %v1942 = vpop.f32.mrf.mxu0
      %v1943 = vadd.f32 0.0, %v1942
      %1944 = vmatmul.bf16.gmra.mxu0 %v1915
      %v1945 = vpop.f32.mrf.mxu0
      %v1946 = vadd.f32 0.0, %v1945
      %v1947 = vpop.f32.mrf.mxu0
      %v1948 = vadd.f32 0.0, %v1947
      %1949 = vmatmul.bf16.gmra.mxu0 %v1918
      %v1950 = vpop.f32.mrf.mxu0
      %v1951 = vadd.f32 0.0, %v1950
      %v1952 = vpop.f32.mrf.mxu0
      %v1953 = vadd.f32 0.0, %v1952
      %1954 = vdwg.mxu0
      %v1957 = vunpack.c.l.b16 %v1533
      %v1958 = vunpack.c.l.b16 %v1534
      %v1959 = vpack.c.b16 %v1958, %v1957
      %v1962 = vunpack.c.l.b16 %v640
      %v1963 = vunpack.c.l.b16 %v641
      %v1964 = vpack.c.b16 %v1963, %v1962
      %v1967 = vsel %vm1340, %v1959, 0
      %1969 = vmatpush.bf16.msra.mxu0 0
      %1970 = vmatpush.bf16.msra.mxu0 0
      %1971 = vmatpush.bf16.msra.mxu0 0
      %1972 = vmatpush.bf16.msra.mxu0 0
      %1973 = vmatpush.bf16.msra.mxu0 0
      %1974 = vmatpush.bf16.msra.mxu0 0
      %1975 = vmatpush.bf16.msra.mxu0 0
      %1976 = vmatpush.bf16.msra.mxu0 %v1964
      %1977 = vmatmul.bf16.gmra.mxu0 %v1967
      %v1978 = vpop.f32.mrf.mxu0
      %v1979 = vadd.f32 %v1936, %v1978
      %v1980 = vpop.f32.mrf.mxu0
      %v1981 = vadd.f32 %v1938, %v1980
      %1982 = vdwg.mxu0
      %v1985 = vunpack.c.l.b16 %v1535
      %v1986 = vunpack.c.l.b16 %v1536
      %v1987 = vpack.c.b16 %v1986, %v1985
      %v1990 = vunpack.c.l.b16 %v642
      %v1991 = vunpack.c.l.b16 %v643
      %v1992 = vpack.c.b16 %v1991, %v1990
      %v1995 = vsel %vm1340, %v1987, 0
      %1997 = vmatpush.bf16.msra.mxu0 0
      %1998 = vmatpush.bf16.msra.mxu0 0
      %1999 = vmatpush.bf16.msra.mxu0 0
      %2000 = vmatpush.bf16.msra.mxu0 0
      %2001 = vmatpush.bf16.msra.mxu0 0
      %2002 = vmatpush.bf16.msra.mxu0 0
      %2003 = vmatpush.bf16.msra.mxu0 0
      %2004 = vmatpush.bf16.msra.mxu0 %v1992
      %2005 = vmatmul.bf16.gmra.mxu0 %v1995
      %v2006 = vpop.f32.mrf.mxu0
      %v2007 = vadd.f32 %v1941, %v2006
      %v2008 = vpop.f32.mrf.mxu0
      %v2009 = vadd.f32 %v1943, %v2008
      %2010 = vdwg.mxu0
      %v2013 = vunpack.c.l.b16 %v1537
      %v2014 = vunpack.c.l.b16 %v1538
      %v2015 = vpack.c.b16 %v2014, %v2013
      %v2018 = vunpack.c.l.b16 %v644
      %v2019 = vunpack.c.l.b16 %v645
      %v2020 = vpack.c.b16 %v2019, %v2018
      %v2023 = vsel %vm1340, %v2015, 0
      %2025 = vmatpush.bf16.msra.mxu0 0
      %2026 = vmatpush.bf16.msra.mxu0 0
      %2027 = vmatpush.bf16.msra.mxu0 0
      %2028 = vmatpush.bf16.msra.mxu0 0
      %2029 = vmatpush.bf16.msra.mxu0 0
      %2030 = vmatpush.bf16.msra.mxu0 0
      %2031 = vmatpush.bf16.msra.mxu0 0
      %2032 = vmatpush.bf16.msra.mxu0 %v2020
      %2033 = vmatmul.bf16.gmra.mxu0 %v2023
      %v2034 = vpop.f32.mrf.mxu0
      %v2035 = vadd.f32 %v1946, %v2034
      %v2036 = vpop.f32.mrf.mxu0
      %v2037 = vadd.f32 %v1948, %v2036
      %2038 = vdwg.mxu0
      %v2041 = vunpack.c.l.b16 %v1539
      %v2042 = vunpack.c.l.b16 %v1540
      %v2043 = vpack.c.b16 %v2042, %v2041
      %v2046 = vunpack.c.l.b16 %v646
      %v2047 = vunpack.c.l.b16 %v647
      %v2048 = vpack.c.b16 %v2047, %v2046
      %v2051 = vsel %vm1340, %v2043, 0
      %2053 = vmatpush.bf16.msra.mxu0 0
      %2054 = vmatpush.bf16.msra.mxu0 0
      %2055 = vmatpush.bf16.msra.mxu0 0
      %2056 = vmatpush.bf16.msra.mxu0 0
      %2057 = vmatpush.bf16.msra.mxu0 0
      %2058 = vmatpush.bf16.msra.mxu0 0
      %2059 = vmatpush.bf16.msra.mxu0 0
      %2060 = vmatpush.bf16.msra.mxu0 %v2048
      %2061 = vmatmul.bf16.gmra.mxu0 %v2051
      %v2062 = vpop.f32.mrf.mxu0
      %v2063 = vadd.f32 %v1951, %v2062
      %v2064 = vpop.f32.mrf.mxu0
      %v2065 = vadd.f32 %v1953, %v2064
      %2066 = vdwg.mxu0
      %2069 = vrot.lane.b32.xlu0 %v2007, 8
      %v2070 = vpop.permute.xlu0 %2069
      %2071 = vrot.lane.b32.xlu0 %v2009, 8
      %v2072 = vpop.permute.xlu0 %2071
      %2077 = vrot.lane.b32.xlu0 %v2035, 16
      %v2078 = vpop.permute.xlu0 %2077
      %2079 = vrot.lane.b32.xlu0 %v2037, 16
      %v2080 = vpop.permute.xlu0 %2079
      %2085 = vrot.lane.b32.xlu0 %v2063, 24
      %v2086 = vpop.permute.xlu0 %2085
      %2087 = vrot.lane.b32.xlu0 %v2065, 24
      %v2088 = vpop.permute.xlu0 %2087
      %v2091 = vsel %vm670, %v1979, %v2070
      %v2092 = vsel %vm670, %v1981, %v2072
      %v2093 = vsel %vm1340, %v2091, %v2078
      %v2094 = vsel %vm1340, %v2092, %v2080
      %vm2095 = vcmask 195584
      %v2096 = vsel %vm2095, %v2093, %v2086
      %v2097 = vsel %vm2095, %v2094, %v2088
      %v2098 = vpack.c.bf16 %v2097, %v2096
      %v2099 = vld [vmem:[%s7] sm:$0xff]
      %v2100 = vld [vmem:[%s7 + $0x8] sm:$0xff]
      %v2101 = vld [vmem:[%s7 + $0x10] sm:$0xff]
      %v2102 = vld [vmem:[%s7 + $0x18] sm:$0xff]
      %v2103 = vpack.c.bf16 %v2100, %v2099
      %v2104 = vpack.c.bf16 %v2102, %v2101
      %v2105 = vld [vmem:[%s8] sm:$0x1]
      %v2107 = vperm.slane %v2105, 0
      %v2110 = vsel %vm570, %v2098, 0
      %2112 = vmatpush.bf16.msra.mxu0 0
      %2113 = vmatpush.bf16.msra.mxu0 0
      %2114 = vmatpush.bf16.msra.mxu0 0
      %2115 = vmatpush.bf16.msra.mxu0 0
      %2116 = vmatpush.bf16.msra.mxu0 0
      %2117 = vmatpush.bf16.msra.mxu0 0
      %2118 = vmatpush.bf16.msra.mxu0 %v2104
      %2119 = vmatpush.bf16.msra.mxu0 %v2103
      %2120 = vmatmul.bf16.gmra.mxu0 %v2110
      %v2121 = vpop.f32.mrf.mxu0
      %v2122 = vadd.f32 %v2107, %v2121
      %v2123 = vpop.f32.mrf.mxu0
      %v2124 = vadd.f32 %v2107, %v2123
      %2125 = vdwg.mxu0
      %v2126 = vadd.f32 %v2122, %v557
      %v2127 = vadd.f32 %v2124, %v558
      %2128 = vst.msk [vmem:[%s458] sm:$0xff] %vm570, %v2126
      %2129 = vst.msk [vmem:[%s458 + $0x8] sm:$0xff] %vm570, %v2127
      %s2130 = smul.u32 2, %s27
      %p2131 = scmp.lt.s32.totalorder %s26, 1
      %s2132 = scalar_select %p2131, %s26, 1
      %p2133 = scmp.lt.s32.totalorder %s2130, 1
      %s2134 = scalar_select %p2133, %s2130, 1
      %s2135 = smul.addr %s2132, 2
      %s2136 = sadd.s32 %s2134, %s2135
      %s2137 = smul.addr %s2136, 8
      %s2138 = scalar_lea.vmem %s11, %s2137
      // Predicated region
      $region69: #{encoder_block_forward.4} parent=63 // pred_check
        %p2139 = pneg %p302
      $region70: #{encoder_block_forward.4} parent=63 // pred_check_branch
        %2141 = sbr.rel (%p2139) target = $region72
      $region71: #{encoder_block_forward.4} parent=63 // pred_region
        %s2142 = smul.u32 2, %s27
      $region72: #{encoder_block_forward.4} parent=63 // pred_fallthru
        _
    $region64: #{encoder_block_forward.4} parent=5 // pred_fallthru
      _
    %p2143 = scmp.le.s32.totalorder 2, %s17
    // Predicated region
    $region73: #{encoder_block_forward.4} parent=5 // pred_check
      %p2144 = pneg %p2143
    $region74: #{encoder_block_forward.4} parent=5 // pred_check_branch
      %2146 = sbr.rel (%p2144) target = $region76
    $region75: #{encoder_block_forward.4} parent=5 // pred_region
      %s2147 = ssub.s32 %s17, 2
      // Predicated region
      $region77: #{encoder_block_forward.4} parent=75 // pred_check
        %p2148 = pneg %p308
      $region78: #{encoder_block_forward.4} parent=75 // pred_check_branch
        %2150 = sbr.rel (%p2148) target = $region80
      $region79: #{encoder_block_forward.4} parent=75 // pred_region
        %s2151 = smul.u32 2, %s29
        %p2152 = scmp.lt.s32.totalorder %s28, 1
        %s2153 = scalar_select %p2152, %s28, 1
        %p2154 = scmp.lt.s32.totalorder %s2151, 1
        %s2155 = scalar_select %p2154, %s2151, 1
        %s2156 = smul.addr %s2153, 2
        %s2157 = sadd.s32 %s2155, %s2156
        %s2158 = smul.addr %s2157, 8
        %s2159 = scalar_lea.vmem %s11, %s2158
      $region80: #{encoder_block_forward.4} parent=75 // pred_fallthru
        _
    $region76: #{encoder_block_forward.4} parent=5 // pred_fallthru
      _
  $region6: #{encoder_block_forward.4} parent=0 // loop_footer
    %s21 = sadd.s32 1, %s17
  $region7: #{encoder_block_forward.4} parent=0 // loop_footer_branch
    %16 = sbr.rel target = $region3
  $region8: #{encoder_block_forward.4} parent=0 // loop_exit
    _

</llo_original>
